<compile_context>
chip_gen: v7x
topology: tpu7x:2x2x1
jax: 0.10.0
libtpu: 0.0.40
codegen_flags: <defaults>
</compile_context>

<pallas_src>
import numpy as np
import jax
import jax.numpy as jnp
from jax.experimental import pallas as pl
from jax.experimental.pallas import tpu as pltpu


# ---------------------------------------------------------------------------
# Haar reconstruction filters (pywt 'haar'), matching the PyTorch module:
# built in float32, stored as a float16 buffer, cast back to float32 in forward.
# ---------------------------------------------------------------------------
_INV_SQRT2 = np.float32(1.0 / np.sqrt(2.0))
REC_LO = np.array([_INV_SQRT2, _INV_SQRT2], dtype=np.float32)
REC_HI = np.array([_INV_SQRT2, -_INV_SQRT2], dtype=np.float32)


def _make_filters():
    # w_xy[i, j] = rec_x[j] * rec_y[i]  (matches unsqueeze(0) * unsqueeze(1))
    w_ll = REC_LO[None, :] * REC_LO[:, None]
    w_lh = REC_LO[None, :] * REC_HI[:, None]
    w_hl = REC_HI[None, :] * REC_LO[:, None]
    w_hh = REC_HI[None, :] * REC_HI[:, None]
    filt = np.stack([w_ll, w_lh, w_hl, w_hh], axis=0)      # (4, 2, 2): [s, di, dj]
    return filt.astype(np.float16).astype(np.float32)      # fp16 buffer -> fp32


FILT = _make_filters()                                      # FILT[s, di, dj]

# For Haar every filter entry is exactly +-0.5 after the fp16 round-trip, so
# the per-pixel 16-mul/12-add form collapses to a butterfly (4 mul + 8 add).
_SIGNS = np.array([[[1, 1], [1, 1]],
                   [[1, 1], [-1, -1]],
                   [[1, -1], [1, -1]],
                   [[1, -1], [-1, 1]]], dtype=np.float32)
_SCALE = float(FILT[0, 0, 0])
assert np.allclose(FILT, np.float32(_SCALE) * _SIGNS), (
    "Haar butterfly kernel assumes +-scale filters; other wavelets need the "
    "general FMA form.")


# ---------------------------------------------------------------------------
# Kernel: per low-res pixel (i, j) of channel block c:
#   out[2i+di, 2j+dj] = 0.5 * (ll + si*lh + sj*hl + si*sj*hh)
# kernel size == stride == 2 => no overlap, so the transposed conv is pure VPU
# work plus an in-register 2x2 interleave and one dense store.
# ---------------------------------------------------------------------------
def idwt_kernel(xll_ref, xlh_ref, xhl_ref, xhh_ref, o_ref):
    f32 = jnp.float32
    ll = xll_ref[...].astype(f32)           # (C_blk, TH, W)
    lh = xlh_ref[...].astype(f32)
    hl = xhl_ref[...].astype(f32)
    hh = xhh_ref[...].astype(f32)
    cb, th, w = ll.shape

    # Haar butterfly.
    a = ll + lh                              # carries the +lh (di = 0) part
    b = ll - lh                              # carries the -lh (di = 1) part
    c = hl + hh
    d = hl - hh
    y00 = _SCALE * (a + c)                   # (di, dj) = (0, 0)
    y01 = _SCALE * (a - c)                   # (0, 1)
    y10 = _SCALE * (b + d)                   # (1, 0)
    y11 = _SCALE * (b - d)                   # (1, 1)

    # Interleave dj along the lane axis, then place the two output-row parities
    # side by side: o_ref is the (H, 4W) row-major-identity view of the
    # (2H, 2W) output, so kernel row i = [out[2i, :] | out[2i+1, :]].
    row0 = jnp.stack([y00, y01], axis=-1).reshape(cb, th, 2 * w)
    row1 = jnp.stack([y10, y11], axis=-1).reshape(cb, th, 2 * w)
    o_ref[...] = jnp.concatenate([row0, row1], axis=-1).astype(o_ref.dtype)


# ---------------------------------------------------------------------------
# Tiling: channel blocking + H tiling sized from the chip's VMEM capacity.
# ---------------------------------------------------------------------------
def _vmem_capacity_bytes():
    try:
        info = pltpu.get_tpu_info()
        cap = int(getattr(info, "vmem_capacity_bytes", 0) or 0)
        if cap > 0:
            return cap
    except Exception:
        pass
    return 64 * 1024 * 1024                  # v7x per-TC capacity (safe floor)


def _pick_tiles(B, C, H, W, in_itemsize):
    """Pick (C_blk, TH, vmem_limit_bytes): double-buffered DMA footprint plus
    in-kernel full-tile temporaries targets ~40% of this generation's per-TC
    VMEM."""
    sub = max(8, 32 // max(int(in_itemsize), 1))   # sublane multiple for dtype
    vmem_cap = _vmem_capacity_bytes()
    budget = int(0.40 * vmem_cap)
    # Per C_blk*TH*W "unit": 4 input buffers x2 (input dtype) + output buffer
    # (4 out elems/unit, f32) x2 + ~3 f32 full-tile in-kernel temps of headroom.
    bytes_per_unit = 8 * int(in_itemsize) + 8 * 4 + 3 * 4 * 4
    max_units = max(budget // bytes_per_unit, sub * W)   # never below one min tile

    # Channel blocking first (biggest lever for small feature maps): largest
    # divisor of C whose full-H tile fits the budget.
    c_blk = 1
    for dvr in range(C, 0, -1):
        if C % dvr == 0 and dvr * H * W <= max_units:
            c_blk = dvr
            break

    if c_blk * H * W <= max_units:
        th = H
    else:                                    # c_blk == 1: tile H
        th = max(sub, (max_units // max(W, 1)) // sub * sub)
        th = min(th, H)
        # Prefer an exact divisor (multiple of sub); otherwise keep the
        # budget-clamped TH and use a cdiv grid with a masked ragged tail.
        t = th
        while t >= sub:
            if H % t == 0:
                th = t
                break
            t -= sub

    # v7x has 2 TensorCores: avoid collapsing to a single grid point.
    n_cb = C // c_blk
    n_h = -(-H // th)
    if B * n_cb * n_h == 1:
        if c_blk > 1 and c_blk % 2 == 0:
            c_blk //= 2
        elif H >= 2 * sub:
            th = ((H // 2 + sub - 1) // sub) * sub

    footprint = c_blk * th * W * bytes_per_unit
    vmem_limit = int(min(vmem_cap, max(footprint * 3 // 2, 16 * 1024 * 1024)))
    return c_blk, th, vmem_limit


def idwt_2d(x):
    """x: (B, 4*C, H, W), channel order [LL*C | LH*C | HL*C | HH*C] (PyTorch
    layout). Returns (B, C, 2H, 2W) float32, matching
    conv_transpose2d(stride=2, groups=C) with Haar reconstruction filters."""
    B, C4, H, W = x.shape
    assert C4 % 4 == 0, "channel dim must be 4*C"
    C = C4 // 4
    out_dtype = jnp.float32                  # module casts filters to float32
    in_itemsize = x.dtype.itemsize

    c_blk, th, vmem_limit = _pick_tiles(B, C, H, W, in_itemsize)
    n_cb = C // c_blk
    n_h = pl.cdiv(H, th)
    grid = (B, n_cb, n_h)

    def in_map(s):
        # Subband s of channel block cb lives at input-channel block
        # s*(C//c_blk) + cb (input channels start at s*C + cb*c_blk).
        return lambda b, cb, hi, s=s: (b, s * n_cb + cb, hi, 0)

    in_specs = [pl.BlockSpec((None, c_blk, th, W), in_map(s)) for s in range(4)]
    # Output produced through its (B, C, H, 4W) row-major-identity view so the
    # store is one lane-dense slab per tile; wrapper reshape back is free.
    # TODO(synk): for 4W < 128 the store is still lane-masked; fold rows or
    # channel blocks into the lane axis for very small W.
    out_spec = pl.BlockSpec((None, c_blk, th, 4 * W),
                            lambda b, cb, hi: (b, cb, hi, 0))

    in_bytes = 4 * B * C * H * W * in_itemsize
    out_bytes = 4 * B * C * H * W * jnp.dtype(out_dtype).itemsize
    cost = pl.CostEstimate(flops=12 * B * C * H * W, transcendentals=0,
                           bytes_accessed=in_bytes + out_bytes)

    out = pl.pallas_call(
        idwt_kernel,
        out_shape=jax.ShapeDtypeStruct((B, C, H, 4 * W), out_dtype),
        grid=grid,
        in_specs=in_specs,
        out_specs=out_spec,
        compiler_params=pltpu.CompilerParams(
            dimension_semantics=("parallel", "parallel", "parallel"),
            vmem_limit_bytes=vmem_limit),
        cost_estimate=cost,
    )(x, x, x, x)
    return out.reshape(B, C, 2 * H, 2 * W)


# Pure-JAX reference (mirrors conv_transpose2d(stride=2, groups=C) for Haar).
def idwt_2d_ref(x):
    B, C4, H, W = x.shape
    C = C4 // 4
    xr = x.reshape(B, 4, C, H, W).transpose(0, 2, 1, 3, 4).astype(jnp.float32)
    filt = jnp.asarray(FILT)                 # (4, 2, 2)
    y = jnp.einsum('bcshw,sij->bchiwj', xr, filt)
    return y.reshape(B, C, 2 * H, 2 * W)


if __name__ == "__main__":
    key = jax.random.PRNGKey(0)
    B, C, H, W = 2, 2, 16, 16                # input channels = 4*C = 8
    x = jax.random.normal(key, (B, 4 * C, H, W), dtype=jnp.float32)

    out = jax.block_until_ready(idwt_2d(x))
    ref = jax.block_until_ready(idwt_2d_ref(x))

    assert out.shape == (B, C, 2 * H, 2 * W)
    np.testing.assert_allclose(np.asarray(out), np.asarray(ref),
                               rtol=1e-5, atol=1e-5)

    print("KERNEL_OK")
</pallas_src>

<mosaic_0001>
module attributes {stable_mosaic.version = 11 : i64} {
  func.func @idwt_kernel(%arg0: i32, %arg1: i32, %arg2: i32, %arg3: memref<1x2x16x16xf32, #tpu.memory_space<vmem>>, %arg4: memref<1x2x16x16xf32, #tpu.memory_space<vmem>>, %arg5: memref<1x2x16x16xf32, #tpu.memory_space<vmem>>, %arg6: memref<1x2x16x16xf32, #tpu.memory_space<vmem>>, %arg7: memref<1x2x16x64xf32, #tpu.memory_space<vmem>>) attributes {dimension_semantics = [#tpu.dimension_semantics<parallel>, #tpu.dimension_semantics<parallel>, #tpu.dimension_semantics<parallel>], iteration_bounds = array<i64: 2, 1, 1>, scalar_prefetch = 0 : i64, scratch_operands = 0 : i64, tpu.core_type = #tpu.core_type<tc>, window_params = [{transform_indices = @transform_0, window_bounds = array<i64: 1, 2, 16, 16>}, {transform_indices = @transform_1, window_bounds = array<i64: 1, 2, 16, 16>}, {transform_indices = @transform_2, window_bounds = array<i64: 1, 2, 16, 16>}, {transform_indices = @transform_3, window_bounds = array<i64: 1, 2, 16, 16>}, {transform_indices = @transform_4, window_bounds = array<i64: 1, 2, 16, 64>}]} {
    %c0 = arith.constant 0 : index
    %c0_0 = arith.constant 0 : index
    %c0_1 = arith.constant 0 : index
    %c0_2 = arith.constant 0 : index
    %0 = vector.load %arg3[%c0, %c0_0, %c0_1, %c0_2] : memref<1x2x16x16xf32, #tpu.memory_space<vmem>>, vector<1x2x16x16xf32>
    %1 = vector.shape_cast %0 : vector<1x2x16x16xf32> to vector<2x16x16xf32>
    %c0_3 = arith.constant 0 : index
    %c0_4 = arith.constant 0 : index
    %c0_5 = arith.constant 0 : index
    %c0_6 = arith.constant 0 : index
    %2 = vector.load %arg4[%c0_3, %c0_4, %c0_5, %c0_6] : memref<1x2x16x16xf32, #tpu.memory_space<vmem>>, vector<1x2x16x16xf32>
    %3 = vector.shape_cast %2 : vector<1x2x16x16xf32> to vector<2x16x16xf32>
    %c0_7 = arith.constant 0 : index
    %c0_8 = arith.constant 0 : index
    %c0_9 = arith.constant 0 : index
    %c0_10 = arith.constant 0 : index
    %4 = vector.load %arg5[%c0_7, %c0_8, %c0_9, %c0_10] : memref<1x2x16x16xf32, #tpu.memory_space<vmem>>, vector<1x2x16x16xf32>
    %5 = vector.shape_cast %4 : vector<1x2x16x16xf32> to vector<2x16x16xf32>
    %c0_11 = arith.constant 0 : index
    %c0_12 = arith.constant 0 : index
    %c0_13 = arith.constant 0 : index
    %c0_14 = arith.constant 0 : index
    %6 = vector.load %arg6[%c0_11, %c0_12, %c0_13, %c0_14] : memref<1x2x16x16xf32, #tpu.memory_space<vmem>>, vector<1x2x16x16xf32>
    %7 = vector.shape_cast %6 : vector<1x2x16x16xf32> to vector<2x16x16xf32>
    %8 = arith.addf %1, %3 : vector<2x16x16xf32>
    %9 = arith.subf %1, %3 : vector<2x16x16xf32>
    %10 = arith.addf %5, %7 : vector<2x16x16xf32>
    %11 = arith.subf %5, %7 : vector<2x16x16xf32>
    %12 = arith.addf %8, %10 : vector<2x16x16xf32>
    %cst = arith.constant 5.000000e-01 : f32
    %13 = vector.broadcast %cst : f32 to vector<2x16x16xf32>
    %14 = arith.mulf %13, %12 : vector<2x16x16xf32>
    %15 = arith.subf %8, %10 : vector<2x16x16xf32>
    %cst_15 = arith.constant 5.000000e-01 : f32
    %16 = vector.broadcast %cst_15 : f32 to vector<2x16x16xf32>
    %17 = arith.mulf %16, %15 : vector<2x16x16xf32>
    %18 = arith.addf %9, %11 : vector<2x16x16xf32>
    %cst_16 = arith.constant 5.000000e-01 : f32
    %19 = vector.broadcast %cst_16 : f32 to vector<2x16x16xf32>
    %20 = arith.mulf %19, %18 : vector<2x16x16xf32>
    %21 = arith.subf %9, %11 : vector<2x16x16xf32>
    %cst_17 = arith.constant 5.000000e-01 : f32
    %22 = vector.broadcast %cst_17 : f32 to vector<2x16x16xf32>
    %23 = arith.mulf %22, %21 : vector<2x16x16xf32>
    %24 = vector.shape_cast %14 : vector<2x16x16xf32> to vector<2x16x16x1xf32>
    %25 = vector.shape_cast %17 : vector<2x16x16xf32> to vector<2x16x16x1xf32>
    %26 = tpu.concatenate %24, %25 in 3 : vector<2x16x16x1xf32>, vector<2x16x16x1xf32> -> vector<2x16x16x2xf32>
    %27 = vector.shape_cast %26 : vector<2x16x16x2xf32> to vector<2x16x32xf32>
    %28 = vector.shape_cast %20 : vector<2x16x16xf32> to vector<2x16x16x1xf32>
    %29 = vector.shape_cast %23 : vector<2x16x16xf32> to vector<2x16x16x1xf32>
    %30 = tpu.concatenate %28, %29 in 3 : vector<2x16x16x1xf32>, vector<2x16x16x1xf32> -> vector<2x16x16x2xf32>
    %31 = vector.shape_cast %30 : vector<2x16x16x2xf32> to vector<2x16x32xf32>
    %32 = tpu.concatenate %27, %31 in 2 : vector<2x16x32xf32>, vector<2x16x32xf32> -> vector<2x16x64xf32>
    %c0_18 = arith.constant 0 : index
    %c0_19 = arith.constant 0 : index
    %c0_20 = arith.constant 0 : index
    %c0_21 = arith.constant 0 : index
    %33 = vector.load %arg7[%c0_18, %c0_19, %c0_20, %c0_21] : memref<1x2x16x64xf32, #tpu.memory_space<vmem>>, vector<1x2x16x64xf32>
    %34 = vector.shape_cast %33 : vector<1x2x16x64xf32> to vector<2x16x64xf32>
    %35 = vector.shape_cast %32 : vector<2x16x64xf32> to vector<1x2x16x64xf32>
    tpu.vector_store %arg7[%c0_18, %c0_19, %c0_20, %c0_21], %35 {strides = array<i32>} : memref<1x2x16x64xf32, #tpu.memory_space<vmem>>, vector<1x2x16x64xf32>,
    return
  }
  func.func @transform_0(%arg0: i32, %arg1: i32, %arg2: i32) -> (i32, i32, i32, i32) {
    %c0_i32 = arith.constant 0 : i32
    %0 = arith.addi %c0_i32, %arg1 : i32
    %c0_i32_0 = arith.constant 0 : i32
    %c0_i32_1 = arith.constant 0 : i32
    return %arg0, %0, %arg2, %c0_i32_0 : i32, i32, i32, i32
  }
  func.func @transform_1(%arg0: i32, %arg1: i32, %arg2: i32) -> (i32, i32, i32, i32) {
    %c1_i32 = arith.constant 1 : i32
    %0 = arith.addi %c1_i32, %arg1 : i32
    %c0_i32 = arith.constant 0 : i32
    %c0_i32_0 = arith.constant 0 : i32
    return %arg0, %0, %arg2, %c0_i32 : i32, i32, i32, i32
  }
  func.func @transform_2(%arg0: i32, %arg1: i32, %arg2: i32) -> (i32, i32, i32, i32) {
    %c2_i32 = arith.constant 2 : i32
    %0 = arith.addi %c2_i32, %arg1 : i32
    %c0_i32 = arith.constant 0 : i32
    %c0_i32_0 = arith.constant 0 : i32
    return %arg0, %0, %arg2, %c0_i32 : i32, i32, i32, i32
  }
  func.func @transform_3(%arg0: i32, %arg1: i32, %arg2: i32) -> (i32, i32, i32, i32) {
    %c3_i32 = arith.constant 3 : i32
    %0 = arith.addi %c3_i32, %arg1 : i32
    %c0_i32 = arith.constant 0 : i32
    %c0_i32_0 = arith.constant 0 : i32
    return %arg0, %0, %arg2, %c0_i32 : i32, i32, i32, i32
  }
  func.func @transform_4(%arg0: i32, %arg1: i32, %arg2: i32) -> (i32, i32, i32, i32) {
    %c0_i32 = arith.constant 0 : i32
    %c0_i32_0 = arith.constant 0 : i32
    return %arg0, %arg1, %arg2, %c0_i32 : i32, i32, i32, i32
  }
}

</mosaic_0001>

<llo_original>
// kernel: tpu_custom_call.1
$region0: #{tpu_custom_call.1}
  #allocation0 [shape = 'u32[]', space=smem, size = 0x4, offset = 0x4, fixed_abs, tag = 'smem constant byte address 0x4 - core index']
  #allocation1 [shape = 'u32[144,128]{1,0:T(1,128)}', space=vmem, size = 0x12000, scoped, tag = 'internal scratch']
  %s0 = inlined_call_operand.hbm [shape: f32[2,8,16,16], index: 0, kind: input, shape index: {}]
  %s1 = inlined_call_operand.hbm [shape: f32[2,8,16,16], index: 1, kind: input, shape index: {}]
  %s2 = inlined_call_operand.hbm [shape: f32[2,8,16,16], index: 2, kind: input, shape index: {}]
  %s3 = inlined_call_operand.hbm [shape: f32[2,8,16,16], index: 3, kind: input, shape index: {}]
  %s4 = inlined_call_operand.hbm [shape: f32[2,2,16,64], index: 4, kind: output, shape index: {}]
  %s5 = sld [smem:[#allocation0]]
  $region65: #{tpu_custom_call.1} parent=0
    _
  %s7 = ssub.s32 1, %s5
  %s8 = scalar_select 0, %s7, %s5
  $region1: #{tpu_custom_call.1} parent=0
    #allocation2 [shape = 'u8[32768]{0}', space=vmem, size = 0x8000, scoped, tag = 'input window, operand 0']
    #allocation3 [shape = 's32[2]{0}', space=sflag, size = 0x8, scoped, tag = 'scoped memory for tpu_custom_call.1']
    #allocation4 [shape = 's32[2]{0}', space=sflag, size = 0x8, scoped, tag = 'scoped memory for tpu_custom_call.1']
    #allocation5 [shape = 'u8[32768]{0}', space=vmem, size = 0x8000, scoped, tag = 'input window, operand 1']
    #allocation6 [shape = 's32[2]{0}', space=sflag, size = 0x8, scoped, tag = 'scoped memory for tpu_custom_call.1']
    #allocation7 [shape = 'u8[32768]{0}', space=vmem, size = 0x8000, scoped, tag = 'input window, operand 2']
    #allocation8 [shape = 'u8[32768]{0}', space=vmem, size = 0x8000, scoped, tag = 'input window, operand 3']
    #allocation9 [shape = 's32[2]{0}', space=sflag, size = 0x8, scoped, tag = 'scoped memory for tpu_custom_call.1']
    #allocation10 [shape = 'u8[32768]{0}', space=vmem, size = 0x8000, scoped, tag = 'output window, operand 0']
    %9 = vsyncpa [#allocation3], 0
    %s10 = scalar_lea.sflag [#allocation3], 1
    %11 = vsyncpa %s10, 0
    %12 = vsyncpa [#allocation6], 0
    %s13 = scalar_lea.sflag [#allocation6], 1
    %14 = vsyncpa %s13, 0
    %15 = vsyncpa [#allocation9], 0
    %s16 = scalar_lea.sflag [#allocation9], 1
    %17 = vsyncpa %s16, 0
    %18 = vsyncpa [#allocation4], 0
    %s19 = scalar_lea.sflag [#allocation4], 1
    %20 = vsyncpa %s19, 0
    loop: start=0, step=1, limit=4
    $region2: #{tpu_custom_call.1} parent=1 // loop_pre_header
      _
    $region3: #{tpu_custom_call.1} parent=1 // loop_header
      %s22 = sphi 0, %s26
      %p23 = scmp.ge.s32.totalorder %s22, 4
      %s29 = sphi 0, %s48
      %s30 = sphi 0, %s44
      %s31 = sphi 0, %s40
      %s32 = sphi 0, %s29
      %s33 = sphi 0, %s30
      %s34 = sphi 0, %s31
      %s35 = sphi 0, %s32
      %s36 = sphi 0, %s33
      %s37 = sphi 0, %s34
      %s55 = sphi 0, %s57
      %s58 = sphi 0, %s55
      %s59 = sphi 0, %s58
      %s75 = sphi 0, %s59
      %s87 = sphi 0, %s89
      %s90 = sphi 0, %s87
      %s91 = sphi 0, %s90
      %s107 = sphi 0, %s91
      %s119 = sphi 0, %s121
      %s122 = sphi 0, %s119
      %s123 = sphi 0, %s122
      %s139 = sphi 0, %s123
      %s151 = sphi 0, %s153
      %s154 = sphi 0, %s151
      %s155 = sphi 0, %s154
      %s171 = sphi 0, %s155
      %s181 = sphi 0, %s183
      %s184 = sphi 0, %s181
      %s185 = sphi 0, %s184
      %s201 = sphi 0, %s185
    $region4: #{tpu_custom_call.1} parent=1 // loop_header_branch
      %25 = sbr.rel (%p23) target = $region8
    $region5: #{tpu_custom_call.1} parent=1 // loop_body
      %s27 = ssub.s32 %s22, 1
      %s28 = ssub.s32 %s22, 2
      %s38 = sadd.s32 1, %s31
      %p39 = scmp.ge.s32.totalorder %s38, 1
      %s40 = scalar_select %p39, 0, %s38
      %s41 = sadd.s32 1, %s30
      %s42 = scalar_select %p39, %s41, %s30
      %p43 = scmp.ge.s32.totalorder %s42, 1
      %s44 = scalar_select %p43, 0, %s42
      %s45 = sadd.s32 1, %s29
      %s46 = scalar_select %p43, %s45, %s29
      %p47 = scmp.ge.s32.totalorder %s46, 2
      %s48 = scalar_select %p47, 0, %s46
      %s49 = ssub.s32 %s29, %s48
      %s50 = ssub.s32 %s30, %s44
      %s51 = sor.u32 %s49, %s50
      %s52 = ssub.s32 %s31, %s40
      %s53 = sor.u32 %s51, %s52
      %p54 = scmp.eq.s32.totalorder %s53, 0
      %s56 = sadd.s32 %s55, 1
      %s57 = scalar_select %p54, %s55, %s56
      %p60 = pneg %p54
      %p61 = scmp.eq.s32.totalorder %s22, 1
      %p62 = por %p60, %p61
      %p63 = scmp.ne.s32.totalorder %s55, %s58
      %p64 = scmp.eq.s32.totalorder %s22, 0
      %p65 = por %p63, %p64
      %p66 = scmp.ne.s32.totalorder %s55, %s58
      %p67 = scmp.eq.s32.totalorder %s27, 1
      %p68 = por %p66, %p67
      %p69 = scmp.ne.s32.totalorder %s58, %s59
      %p70 = scmp.eq.s32.totalorder %s27, 0
      %p71 = por %p69, %p70
      %p72 = scmp.ne.s32.totalorder %s58, %s59
      %p73 = scmp.eq.s32.totalorder %s28, 1
      %p74 = por %p72, %p73
      %p76 = scmp.ne.s32.totalorder %s59, %s75
      %p77 = scmp.eq.s32.totalorder %s28, 0
      %p78 = por %p76, %p77
      %s79 = sadd.s32 %s30, 1
      %s80 = sadd.s32 %s44, 1
      %s81 = ssub.s32 %s29, %s48
      %s82 = ssub.s32 %s79, %s80
      %s83 = sor.u32 %s81, %s82
      %s84 = ssub.s32 %s31, %s40
      %s85 = sor.u32 %s83, %s84
      %p86 = scmp.eq.s32.totalorder %s85, 0
      %s88 = sadd.s32 %s87, 1
      %s89 = scalar_select %p86, %s87, %s88
      %p92 = pneg %p86
      %p93 = scmp.eq.s32.totalorder %s22, 1
      %p94 = por %p92, %p93
      %p95 = scmp.ne.s32.totalorder %s87, %s90
      %p96 = scmp.eq.s32.totalorder %s22, 0
      %p97 = por %p95, %p96
      %p98 = scmp.ne.s32.totalorder %s87, %s90
      %p99 = scmp.eq.s32.totalorder %s27, 1
      %p100 = por %p98, %p99
      %p101 = scmp.ne.s32.totalorder %s90, %s91
      %p102 = scmp.eq.s32.totalorder %s27, 0
      %p103 = por %p101, %p102
      %p104 = scmp.ne.s32.totalorder %s90, %s91
      %p105 = scmp.eq.s32.totalorder %s28, 1
      %p106 = por %p104, %p105
      %p108 = scmp.ne.s32.totalorder %s91, %s107
      %p109 = scmp.eq.s32.totalorder %s28, 0
      %p110 = por %p108, %p109
      %s111 = sadd.s32 %s30, 2
      %s112 = sadd.s32 %s44, 2
      %s113 = ssub.s32 %s29, %s48
      %s114 = ssub.s32 %s111, %s112
      %s115 = sor.u32 %s113, %s114
      %s116 = ssub.s32 %s31, %s40
      %s117 = sor.u32 %s115, %s116
      %p118 = scmp.eq.s32.totalorder %s117, 0
      %s120 = sadd.s32 %s119, 1
      %s121 = scalar_select %p118, %s119, %s120
      %p124 = pneg %p118
      %p125 = scmp.eq.s32.totalorder %s22, 1
      %p126 = por %p124, %p125
      %p127 = scmp.ne.s32.totalorder %s119, %s122
      %p128 = scmp.eq.s32.totalorder %s22, 0
      %p129 = por %p127, %p128
      %p130 = scmp.ne.s32.totalorder %s119, %s122
      %p131 = scmp.eq.s32.totalorder %s27, 1
      %p132 = por %p130, %p131
      %p133 = scmp.ne.s32.totalorder %s122, %s123
      %p134 = scmp.eq.s32.totalorder %s27, 0
      %p135 = por %p133, %p134
      %p136 = scmp.ne.s32.totalorder %s122, %s123
      %p137 = scmp.eq.s32.totalorder %s28, 1
      %p138 = por %p136, %p137
      %p140 = scmp.ne.s32.totalorder %s123, %s139
      %p141 = scmp.eq.s32.totalorder %s28, 0
      %p142 = por %p140, %p141
      %s143 = sadd.s32 %s30, 3
      %s144 = sadd.s32 %s44, 3
      %s145 = ssub.s32 %s29, %s48
      %s146 = ssub.s32 %s143, %s144
      %s147 = sor.u32 %s145, %s146
      %s148 = ssub.s32 %s31, %s40
      %s149 = sor.u32 %s147, %s148
      %p150 = scmp.eq.s32.totalorder %s149, 0
      %s152 = sadd.s32 %s151, 1
      %s153 = scalar_select %p150, %s151, %s152
      %p156 = pneg %p150
      %p157 = scmp.eq.s32.totalorder %s22, 1
      %p158 = por %p156, %p157
      %p159 = scmp.ne.s32.totalorder %s151, %s154
      %p160 = scmp.eq.s32.totalorder %s22, 0
      %p161 = por %p159, %p160
      %p162 = scmp.ne.s32.totalorder %s151, %s154
      %p163 = scmp.eq.s32.totalorder %s27, 1
      %p164 = por %p162, %p163
      %p165 = scmp.ne.s32.totalorder %s154, %s155
      %p166 = scmp.eq.s32.totalorder %s27, 0
      %p167 = por %p165, %p166
      %p168 = scmp.ne.s32.totalorder %s154, %s155
      %p169 = scmp.eq.s32.totalorder %s28, 1
      %p170 = por %p168, %p169
      %p172 = scmp.ne.s32.totalorder %s155, %s171
      %p173 = scmp.eq.s32.totalorder %s28, 0
      %p174 = por %p172, %p173
      %s175 = ssub.s32 %s29, %s48
      %s176 = ssub.s32 %s30, %s44
      %s177 = sor.u32 %s175, %s176
      %s178 = ssub.s32 %s31, %s40
      %s179 = sor.u32 %s177, %s178
      %p180 = scmp.eq.s32.totalorder %s179, 0
      %s182 = sadd.s32 %s181, 1
      %s183 = scalar_select %p180, %s181, %s182
      %p186 = pneg %p180
      %p187 = scmp.eq.s32.totalorder %s22, 1
      %p188 = por %p186, %p187
      %p189 = scmp.ne.s32.totalorder %s181, %s184
      %p190 = scmp.eq.s32.totalorder %s22, 0
      %p191 = por %p189, %p190
      %p192 = scmp.ne.s32.totalorder %s181, %s184
      %p193 = scmp.eq.s32.totalorder %s27, 1
      %p194 = por %p192, %p193
      %p195 = scmp.ne.s32.totalorder %s184, %s185
      %p196 = scmp.eq.s32.totalorder %s27, 0
      %p197 = por %p195, %p196
      %p198 = scmp.ne.s32.totalorder %s184, %s185
      %p199 = scmp.eq.s32.totalorder %s28, 1
      %p200 = por %p198, %p199
      %p202 = scmp.ne.s32.totalorder %s185, %s201
      %p203 = scmp.eq.s32.totalorder %s28, 0
      %p204 = por %p202, %p203
      %p205 = scmp.le.s32.totalorder 1, %s22
      %p206 = scmp.lt.s32.totalorder %s22, 3
      %p207 = pnand %p205, %p206
      %p208 = pneg %p207
      // Predicated region
      $region9: #{tpu_custom_call.1} parent=5 // pred_check
        _
      $region10: #{tpu_custom_call.1} parent=5 // pred_check_branch
        %210 = sbr.rel (%p207) target = $region12
      $region11: #{tpu_custom_call.1} parent=5 // pred_region
        %s211 = ssub.s32 %s22, 1
      $region12: #{tpu_custom_call.1} parent=5 // pred_fallthru
        _
      %p212 = scmp.lt.s32.totalorder %s22, 2
      // Predicated region
      $region13: #{tpu_custom_call.1} parent=5 // pred_check
        %p213 = pneg %p212
      $region14: #{tpu_custom_call.1} parent=5 // pred_check_branch
        %215 = sbr.rel (%p213) target = $region16
      $region15: #{tpu_custom_call.1} parent=5 // pred_region
        // Predicated region
        $region17: #{tpu_custom_call.1} parent=15 // pred_check
          %p216 = pneg %p65
        $region18: #{tpu_custom_call.1} parent=15 // pred_check_branch
          %218 = sbr.rel (%p216) target = $region20
        $region19: #{tpu_custom_call.1} parent=15 // pred_region
          %s219 = sand.u32 %s55, 1
          %s220 = scalar_lea.sflag [#allocation3], %s219
          %s221 = sand.u32 %s55, 1
          %s222 = smul.addr %s221, 32
          %s223 = scalar_lea.vmem [#allocation2], %s222
          %s224 = smul.u32 2, %s30
          %s225 = smul.u32 2, %s31
          %s227 = ssub.s32 512, 512
          %228 = vsyncadd %s220, %s227
          %s229 = smul.addr %s224, 2
          %s230 = sadd.s32 %s225, %s229
          %s231 = smul.addr %s29, 16
          %s232 = sadd.s32 %s230, %s231
          %s233 = smul.addr %s232, 128
          %s234 = scalar_lea.hbm %s0, %s233
          %s235 = sshll.u32 %s223, 4
          %s236 = int_to_ptr.vmem [resolvable:$true] %s235
          %241 = dma.hbm_to_vmem [thread:$0]  %s234, 512, %s236, %s220, 128, 128, 8
        $region20: #{tpu_custom_call.1} parent=15 // pred_fallthru
          _
        // Predicated region
        $region21: #{tpu_custom_call.1} parent=15 // pred_check
          %p242 = pneg %p97
        $region22: #{tpu_custom_call.1} parent=15 // pred_check_branch
          %244 = sbr.rel (%p242) target = $region24
        $region23: #{tpu_custom_call.1} parent=15 // pred_region
          %s245 = sand.u32 %s22, 1
          %s246 = scalar_lea.sflag [#allocation6], %s245
          %s247 = sand.u32 %s87, 1
          %s248 = smul.addr %s247, 32
          %s249 = scalar_lea.vmem [#allocation5], %s248
          %s250 = sadd.s32 %s30, 1
          %s251 = smul.u32 2, %s250
          %s252 = smul.u32 2, %s31
          %s254 = ssub.s32 512, 512
          %255 = vsyncadd %s246, %s254
          %s256 = smul.addr %s251, 2
          %s257 = sadd.s32 %s252, %s256
          %s258 = smul.addr %s29, 16
          %s259 = sadd.s32 %s257, %s258
          %s260 = smul.addr %s259, 128
          %s261 = scalar_lea.hbm %s1, %s260
          %s262 = sshll.u32 %s249, 4
          %s263 = int_to_ptr.vmem [resolvable:$true] %s262
          %268 = dma.hbm_to_vmem [thread:$0]  %s261, 512, %s263, %s246, 128, 128, 8
        $region24: #{tpu_custom_call.1} parent=15 // pred_fallthru
          _
        // Predicated region
        $region25: #{tpu_custom_call.1} parent=15 // pred_check
          %p269 = pneg %p129
        $region26: #{tpu_custom_call.1} parent=15 // pred_check_branch
          %271 = sbr.rel (%p269) target = $region28
        $region27: #{tpu_custom_call.1} parent=15 // pred_region
          %s272 = sand.u32 %s22, 1
          %s273 = scalar_lea.sflag [#allocation6], %s272
          %s274 = sand.u32 %s119, 1
          %s275 = smul.addr %s274, 32
          %s276 = scalar_lea.vmem [#allocation7], %s275
          %s277 = sadd.s32 %s30, 2
          %s278 = smul.u32 2, %s277
          %s279 = smul.u32 2, %s31
          %s281 = ssub.s32 512, 512
          %282 = vsyncadd %s273, %s281
          %s283 = smul.addr %s278, 2
          %s284 = sadd.s32 %s279, %s283
          %s285 = smul.addr %s29, 16
          %s286 = sadd.s32 %s284, %s285
          %s287 = smul.addr %s286, 128
          %s288 = scalar_lea.hbm %s2, %s287
          %s289 = sshll.u32 %s276, 4
          %s290 = int_to_ptr.vmem [resolvable:$true] %s289
          %295 = dma.hbm_to_vmem [thread:$0]  %s288, 512, %s290, %s273, 128, 128, 8
        $region28: #{tpu_custom_call.1} parent=15 // pred_fallthru
          _
        // Predicated region
        $region29: #{tpu_custom_call.1} parent=15 // pred_check
          %p296 = pneg %p161
        $region30: #{tpu_custom_call.1} parent=15 // pred_check_branch
          %298 = sbr.rel (%p296) target = $region32
        $region31: #{tpu_custom_call.1} parent=15 // pred_region
          %s299 = sand.u32 %s151, 1
          %s300 = scalar_lea.sflag [#allocation9], %s299
          %s301 = sand.u32 %s151, 1
          %s302 = smul.addr %s301, 32
          %s303 = scalar_lea.vmem [#allocation8], %s302
          %s304 = sadd.s32 %s30, 3
          %s305 = smul.u32 2, %s304
          %s306 = smul.u32 2, %s31
          %s308 = ssub.s32 512, 512
          %309 = vsyncadd %s300, %s308
          %s310 = smul.addr %s305, 2
          %s311 = sadd.s32 %s306, %s310
          %s312 = smul.addr %s29, 16
          %s313 = sadd.s32 %s311, %s312
          %s314 = smul.addr %s313, 128
          %s315 = scalar_lea.hbm %s3, %s314
          %s316 = sshll.u32 %s303, 4
          %s317 = int_to_ptr.vmem [resolvable:$true] %s316
          %322 = dma.hbm_to_vmem [thread:$0]  %s315, 512, %s317, %s300, 128, 128, 8
        $region32: #{tpu_custom_call.1} parent=15 // pred_fallthru
          _
      $region16: #{tpu_custom_call.1} parent=5 // pred_fallthru
        _
      %p323 = scmp.le.s32.totalorder 1, %s22
      %p324 = scmp.lt.s32.totalorder %s22, 3
      %p325 = pnand %p323, %p324
      %p326 = pneg %p325
      // Predicated region
      $region33: #{tpu_custom_call.1} parent=5 // pred_check
        _
      $region34: #{tpu_custom_call.1} parent=5 // pred_check_branch
        %328 = sbr.rel (%p325) target = $region36
      $region35: #{tpu_custom_call.1} parent=5 // pred_region
        %s329 = ssub.s32 %s22, 1
        %s330 = sand.u32 %s58, 1
        %s331 = scalar_lea.sflag [#allocation3], %s330
        %s332 = sand.u32 %s58, 1
        %s333 = smul.addr %s332, 32
        %s334 = scalar_lea.vmem [#allocation2], %s333
        // Predicated region
        $region37: #{tpu_custom_call.1} parent=35 // pred_check
          %p335 = pneg %p71
        $region38: #{tpu_custom_call.1} parent=35 // pred_check_branch
          %337 = sbr.rel (%p335) target = $region40
        $region39: #{tpu_custom_call.1} parent=35 // pred_region
          %338 = dma.done %s331, 512
        $region40: #{tpu_custom_call.1} parent=35 // pred_fallthru
          _
        %s339 = sand.u32 %s27, 1
        %s340 = scalar_lea.sflag [#allocation6], %s339
        %s341 = sand.u32 %s90, 1
        %s342 = smul.addr %s341, 32
        %s343 = scalar_lea.vmem [#allocation5], %s342
        // Predicated region
        $region41: #{tpu_custom_call.1} parent=35 // pred_check
          %p344 = pneg %p103
        $region42: #{tpu_custom_call.1} parent=35 // pred_check_branch
          %346 = sbr.rel (%p344) target = $region44
        $region43: #{tpu_custom_call.1} parent=35 // pred_region
          %347 = dma.done %s340, 512
        $region44: #{tpu_custom_call.1} parent=35 // pred_fallthru
          _
        %s348 = sand.u32 %s27, 1
        %s349 = scalar_lea.sflag [#allocation6], %s348
        %s350 = sand.u32 %s122, 1
        %s351 = smul.addr %s350, 32
        %s352 = scalar_lea.vmem [#allocation7], %s351
        // Predicated region
        $region45: #{tpu_custom_call.1} parent=35 // pred_check
          %p353 = pneg %p135
        $region46: #{tpu_custom_call.1} parent=35 // pred_check_branch
          %355 = sbr.rel (%p353) target = $region48
        $region47: #{tpu_custom_call.1} parent=35 // pred_region
          %356 = dma.done %s349, 512
        $region48: #{tpu_custom_call.1} parent=35 // pred_fallthru
          _
        %s357 = sand.u32 %s154, 1
        %s358 = scalar_lea.sflag [#allocation9], %s357
        %s359 = sand.u32 %s154, 1
        %s360 = smul.addr %s359, 32
        %s361 = scalar_lea.vmem [#allocation8], %s360
        // Predicated region
        $region49: #{tpu_custom_call.1} parent=35 // pred_check
          %p362 = pneg %p167
        $region50: #{tpu_custom_call.1} parent=35 // pred_check_branch
          %364 = sbr.rel (%p362) target = $region52
        $region51: #{tpu_custom_call.1} parent=35 // pred_region
          %365 = dma.done %s358, 512
        $region52: #{tpu_custom_call.1} parent=35 // pred_fallthru
          _
        %s366 = sand.u32 %s58, 1
        %s367 = scalar_lea.sflag [#allocation3], %s366
        %s368 = sand.u32 %s58, 1
        %s369 = smul.addr %s368, 32
        %s370 = scalar_lea.vmem [#allocation2], %s369
        %p371 = pneg %p71
        %p372 = pneg %p68
        %s373 = sand.u32 %s27, 1
        %s374 = scalar_lea.sflag [#allocation6], %s373
        %s375 = sand.u32 %s90, 1
        %s376 = smul.addr %s375, 32
        %s377 = scalar_lea.vmem [#allocation5], %s376
        %p378 = pneg %p103
        %p379 = pneg %p100
        %s380 = sand.u32 %s27, 1
        %s381 = scalar_lea.sflag [#allocation6], %s380
        %s382 = sand.u32 %s122, 1
        %s383 = smul.addr %s382, 32
        %s384 = scalar_lea.vmem [#allocation7], %s383
        %p385 = pneg %p135
        %p386 = pneg %p132
        %s387 = sand.u32 %s154, 1
        %s388 = scalar_lea.sflag [#allocation9], %s387
        %s389 = sand.u32 %s154, 1
        %s390 = smul.addr %s389, 32
        %s391 = scalar_lea.vmem [#allocation8], %s390
        %p392 = pneg %p167
        %p393 = pneg %p164
        %p394 = pneg %p197
        %p395 = pneg %p194
        %s396 = sand.u32 %s184, 1
        %s397 = scalar_lea.sflag [#allocation4], %s396
        %s398 = sand.u32 %s184, 1
        %s399 = smul.addr %s398, 32
        %s400 = scalar_lea.vmem [#allocation10], %s399
        %s401 = smul.u32 2, %s33
        %s402 = smul.u32 2, %s34
        %s403 = sadd.s32 %s33, 1
        %s404 = smul.u32 2, %s403
        %s405 = smul.u32 2, %s34
        %s406 = sadd.s32 %s33, 2
        %s407 = smul.u32 2, %s406
        %s408 = smul.u32 2, %s34
        %s409 = sadd.s32 %s33, 3
        %s410 = smul.u32 2, %s409
        %s411 = smul.u32 2, %s34
        %s412 = smul.u32 2, %s33
        %s413 = smul.u32 2, %s34
        %v414 = vld [vmem:[%s334] sm:$0xff]
        %v415 = vld [vmem:[%s334 + $0x8] sm:$0xff]
        %v416 = vld [vmem:[%s334 + $0x10] sm:$0xff]
        %v417 = vld [vmem:[%s334 + $0x18] sm:$0xff]
        %v418 = vld [vmem:[%s343] sm:$0xff]
        %v419 = vld [vmem:[%s343 + $0x8] sm:$0xff]
        %v420 = vld [vmem:[%s343 + $0x10] sm:$0xff]
        %v421 = vld [vmem:[%s343 + $0x18] sm:$0xff]
        %v422 = vld [vmem:[%s352] sm:$0xff]
        %v423 = vld [vmem:[%s352 + $0x8] sm:$0xff]
        %v424 = vld [vmem:[%s352 + $0x10] sm:$0xff]
        %v425 = vld [vmem:[%s352 + $0x18] sm:$0xff]
        %v426 = vld [vmem:[%s361] sm:$0xff]
        %v427 = vld [vmem:[%s361 + $0x8] sm:$0xff]
        %v428 = vld [vmem:[%s361 + $0x10] sm:$0xff]
        %v429 = vld [vmem:[%s361 + $0x18] sm:$0xff]
        %v430 = vadd.f32 %v414, %v418
        %v431 = vadd.f32 %v415, %v419
        %v432 = vadd.f32 %v416, %v420
        %v433 = vadd.f32 %v417, %v421
        %v434 = vsub.f32 %v414, %v418
        %v435 = vsub.f32 %v415, %v419
        %v436 = vsub.f32 %v416, %v420
        %v437 = vsub.f32 %v417, %v421
        %v438 = vadd.f32 %v422, %v426
        %v439 = vadd.f32 %v423, %v427
        %v440 = vadd.f32 %v424, %v428
        %v441 = vadd.f32 %v425, %v429
        %v442 = vsub.f32 %v422, %v426
        %v443 = vsub.f32 %v423, %v427
        %v444 = vsub.f32 %v424, %v428
        %v445 = vsub.f32 %v425, %v429
        %v446 = vadd.f32 %v430, %v438
        %v447 = vadd.f32 %v431, %v439
        %v448 = vadd.f32 %v432, %v440
        %v449 = vadd.f32 %v433, %v441
        %v450 = vmul.f32 %v446, 0.5
        %v451 = vmul.f32 %v447, 0.5
        %v452 = vmul.f32 %v448, 0.5
        %v453 = vmul.f32 %v449, 0.5
        %v454 = vsub.f32 %v430, %v438
        %v455 = vsub.f32 %v431, %v439
        %v456 = vsub.f32 %v432, %v440
        %v457 = vsub.f32 %v433, %v441
        %v458 = vmul.f32 %v454, 0.5
        %v459 = vmul.f32 %v455, 0.5
        %v460 = vmul.f32 %v456, 0.5
        %v461 = vmul.f32 %v457, 0.5
        %v462 = vadd.f32 %v434, %v442
        %v463 = vadd.f32 %v435, %v443
        %v464 = vadd.f32 %v436, %v444
        %v465 = vadd.f32 %v437, %v445
        %v466 = vmul.f32 %v462, 0.5
        %v467 = vmul.f32 %v463, 0.5
        %v468 = vmul.f32 %v464, 0.5
        %v469 = vmul.f32 %v465, 0.5
        %v470 = vsub.f32 %v434, %v442
        %v471 = vsub.f32 %v435, %v443
        %v472 = vsub.f32 %v436, %v444
        %v473 = vsub.f32 %v437, %v445
        %v474 = vmul.f32 %v470, 0.5
        %v475 = vmul.f32 %v471, 0.5
        %v476 = vmul.f32 %v472, 0.5
        %v477 = vmul.f32 %v473, 0.5
        %v478 = vlaneseq
        %v479 = vshrl.u32 %v478, 7
        %v480 = vsub.s32 0, %v479
        %v481 = vrot.slane %v450, %v480
        %483 = vbcast.lane.b32.xlu0 %v481, 256
        %v484 = vpop.permute.xlu0 %483
        %s486 = sor.u32 256, 8
        %487 = vbcast.lane.b32.xlu0 %v481, %s486
        %v488 = vpop.permute.xlu0 %487
        %v489 = vlaneseq
        %v490 = vshrl.u32 %v489, 7
        %v491 = vsub.s32 1, %v490
        %v492 = vrot.slane %v450, %v491
        %494 = vbcast.lane.b32.xlu0 %v492, 256
        %v495 = vpop.permute.xlu0 %494
        %s497 = sor.u32 256, 8
        %498 = vbcast.lane.b32.xlu0 %v492, %s497
        %v499 = vpop.permute.xlu0 %498
        %v500 = vlaneseq
        %v501 = vshrl.u32 %v500, 7
        %v502 = vsub.s32 2, %v501
        %v503 = vrot.slane %v450, %v502
        %505 = vbcast.lane.b32.xlu0 %v503, 256
        %v506 = vpop.permute.xlu0 %505
        %s508 = sor.u32 256, 8
        %509 = vbcast.lane.b32.xlu0 %v503, %s508
        %v510 = vpop.permute.xlu0 %509
        %v511 = vlaneseq
        %v512 = vshrl.u32 %v511, 7
        %v513 = vsub.s32 3, %v512
        %v514 = vrot.slane %v450, %v513
        %516 = vbcast.lane.b32.xlu0 %v514, 256
        %v517 = vpop.permute.xlu0 %516
        %s519 = sor.u32 256, 8
        %520 = vbcast.lane.b32.xlu0 %v514, %s519
        %v521 = vpop.permute.xlu0 %520
        %v522 = vlaneseq
        %v523 = vshrl.u32 %v522, 7
        %v524 = vsub.s32 4, %v523
        %v525 = vrot.slane %v450, %v524
        %527 = vbcast.lane.b32.xlu0 %v525, 256
        %v528 = vpop.permute.xlu0 %527
        %s530 = sor.u32 256, 8
        %531 = vbcast.lane.b32.xlu0 %v525, %s530
        %v532 = vpop.permute.xlu0 %531
        %v533 = vlaneseq
        %v534 = vshrl.u32 %v533, 7
        %v535 = vsub.s32 5, %v534
        %v536 = vrot.slane %v450, %v535
        %538 = vbcast.lane.b32.xlu0 %v536, 256
        %v539 = vpop.permute.xlu0 %538
        %s541 = sor.u32 256, 8
        %542 = vbcast.lane.b32.xlu0 %v536, %s541
        %v543 = vpop.permute.xlu0 %542
        %v544 = vlaneseq
        %v545 = vshrl.u32 %v544, 7
        %v546 = vsub.s32 6, %v545
        %v547 = vrot.slane %v450, %v546
        %549 = vbcast.lane.b32.xlu0 %v547, 256
        %v550 = vpop.permute.xlu0 %549
        %s552 = sor.u32 256, 8
        %553 = vbcast.lane.b32.xlu0 %v547, %s552
        %v554 = vpop.permute.xlu0 %553
        %v555 = vlaneseq
        %v556 = vshrl.u32 %v555, 7
        %v557 = vsub.s32 7, %v556
        %v558 = vrot.slane %v450, %v557
        %560 = vbcast.lane.b32.xlu0 %v558, 256
        %v561 = vpop.permute.xlu0 %560
        %s563 = sor.u32 256, 8
        %564 = vbcast.lane.b32.xlu0 %v558, %s563
        %v565 = vpop.permute.xlu0 %564
        %v566 = vlaneseq
        %v567 = vshrl.u32 %v566, 7
        %v568 = vsub.s32 0, %v567
        %v569 = vrot.slane %v451, %v568
        %571 = vbcast.lane.b32.xlu0 %v569, 256
        %v572 = vpop.permute.xlu0 %571
        %s574 = sor.u32 256, 8
        %575 = vbcast.lane.b32.xlu0 %v569, %s574
        %v576 = vpop.permute.xlu0 %575
        %v577 = vlaneseq
        %v578 = vshrl.u32 %v577, 7
        %v579 = vsub.s32 1, %v578
        %v580 = vrot.slane %v451, %v579
        %582 = vbcast.lane.b32.xlu0 %v580, 256
        %v583 = vpop.permute.xlu0 %582
        %s585 = sor.u32 256, 8
        %586 = vbcast.lane.b32.xlu0 %v580, %s585
        %v587 = vpop.permute.xlu0 %586
        %v588 = vlaneseq
        %v589 = vshrl.u32 %v588, 7
        %v590 = vsub.s32 2, %v589
        %v591 = vrot.slane %v451, %v590
        %593 = vbcast.lane.b32.xlu0 %v591, 256
        %v594 = vpop.permute.xlu0 %593
        %s596 = sor.u32 256, 8
        %597 = vbcast.lane.b32.xlu0 %v591, %s596
        %v598 = vpop.permute.xlu0 %597
        %v599 = vlaneseq
        %v600 = vshrl.u32 %v599, 7
        %v601 = vsub.s32 3, %v600
        %v602 = vrot.slane %v451, %v601
        %604 = vbcast.lane.b32.xlu0 %v602, 256
        %v605 = vpop.permute.xlu0 %604
        %s607 = sor.u32 256, 8
        %608 = vbcast.lane.b32.xlu0 %v602, %s607
        %v609 = vpop.permute.xlu0 %608
        %v610 = vlaneseq
        %v611 = vshrl.u32 %v610, 7
        %v612 = vsub.s32 4, %v611
        %v613 = vrot.slane %v451, %v612
        %615 = vbcast.lane.b32.xlu0 %v613, 256
        %v616 = vpop.permute.xlu0 %615
        %s618 = sor.u32 256, 8
        %619 = vbcast.lane.b32.xlu0 %v613, %s618
        %v620 = vpop.permute.xlu0 %619
        %v621 = vlaneseq
        %v622 = vshrl.u32 %v621, 7
        %v623 = vsub.s32 5, %v622
        %v624 = vrot.slane %v451, %v623
        %626 = vbcast.lane.b32.xlu0 %v624, 256
        %v627 = vpop.permute.xlu0 %626
        %s629 = sor.u32 256, 8
        %630 = vbcast.lane.b32.xlu0 %v624, %s629
        %v631 = vpop.permute.xlu0 %630
        %v632 = vlaneseq
        %v633 = vshrl.u32 %v632, 7
        %v634 = vsub.s32 6, %v633
        %v635 = vrot.slane %v451, %v634
        %637 = vbcast.lane.b32.xlu0 %v635, 256
        %v638 = vpop.permute.xlu0 %637
        %s640 = sor.u32 256, 8
        %641 = vbcast.lane.b32.xlu0 %v635, %s640
        %v642 = vpop.permute.xlu0 %641
        %v643 = vlaneseq
        %v644 = vshrl.u32 %v643, 7
        %v645 = vsub.s32 7, %v644
        %v646 = vrot.slane %v451, %v645
        %648 = vbcast.lane.b32.xlu0 %v646, 256
        %v649 = vpop.permute.xlu0 %648
        %s651 = sor.u32 256, 8
        %652 = vbcast.lane.b32.xlu0 %v646, %s651
        %v653 = vpop.permute.xlu0 %652
        %v654 = vlaneseq
        %v655 = vshrl.u32 %v654, 7
        %v656 = vsub.s32 0, %v655
        %v657 = vrot.slane %v452, %v656
        %659 = vbcast.lane.b32.xlu0 %v657, 256
        %v660 = vpop.permute.xlu0 %659
        %s662 = sor.u32 256, 8
        %663 = vbcast.lane.b32.xlu0 %v657, %s662
        %v664 = vpop.permute.xlu0 %663
        %v665 = vlaneseq
        %v666 = vshrl.u32 %v665, 7
        %v667 = vsub.s32 1, %v666
        %v668 = vrot.slane %v452, %v667
        %670 = vbcast.lane.b32.xlu0 %v668, 256
        %v671 = vpop.permute.xlu0 %670
        %s673 = sor.u32 256, 8
        %674 = vbcast.lane.b32.xlu0 %v668, %s673
        %v675 = vpop.permute.xlu0 %674
        %v676 = vlaneseq
        %v677 = vshrl.u32 %v676, 7
        %v678 = vsub.s32 2, %v677
        %v679 = vrot.slane %v452, %v678
        %681 = vbcast.lane.b32.xlu0 %v679, 256
        %v682 = vpop.permute.xlu0 %681
        %s684 = sor.u32 256, 8
        %685 = vbcast.lane.b32.xlu0 %v679, %s684
        %v686 = vpop.permute.xlu0 %685
        %v687 = vlaneseq
        %v688 = vshrl.u32 %v687, 7
        %v689 = vsub.s32 3, %v688
        %v690 = vrot.slane %v452, %v689
        %692 = vbcast.lane.b32.xlu0 %v690, 256
        %v693 = vpop.permute.xlu0 %692
        %s695 = sor.u32 256, 8
        %696 = vbcast.lane.b32.xlu0 %v690, %s695
        %v697 = vpop.permute.xlu0 %696
        %v698 = vlaneseq
        %v699 = vshrl.u32 %v698, 7
        %v700 = vsub.s32 4, %v699
        %v701 = vrot.slane %v452, %v700
        %703 = vbcast.lane.b32.xlu0 %v701, 256
        %v704 = vpop.permute.xlu0 %703
        %s706 = sor.u32 256, 8
        %707 = vbcast.lane.b32.xlu0 %v701, %s706
        %v708 = vpop.permute.xlu0 %707
        %v709 = vlaneseq
        %v710 = vshrl.u32 %v709, 7
        %v711 = vsub.s32 5, %v710
        %v712 = vrot.slane %v452, %v711
        %714 = vbcast.lane.b32.xlu0 %v712, 256
        %v715 = vpop.permute.xlu0 %714
        %s717 = sor.u32 256, 8
        %718 = vbcast.lane.b32.xlu0 %v712, %s717
        %v719 = vpop.permute.xlu0 %718
        %v720 = vlaneseq
        %v721 = vshrl.u32 %v720, 7
        %v722 = vsub.s32 6, %v721
        %v723 = vrot.slane %v452, %v722
        %725 = vbcast.lane.b32.xlu0 %v723, 256
        %v726 = vpop.permute.xlu0 %725
        %s728 = sor.u32 256, 8
        %729 = vbcast.lane.b32.xlu0 %v723, %s728
        %v730 = vpop.permute.xlu0 %729
        %v731 = vlaneseq
        %v732 = vshrl.u32 %v731, 7
        %v733 = vsub.s32 7, %v732
        %v734 = vrot.slane %v452, %v733
        %736 = vbcast.lane.b32.xlu0 %v734, 256
        %v737 = vpop.permute.xlu0 %736
        %s739 = sor.u32 256, 8
        %740 = vbcast.lane.b32.xlu0 %v734, %s739
        %v741 = vpop.permute.xlu0 %740
        %v742 = vlaneseq
        %v743 = vshrl.u32 %v742, 7
        %v744 = vsub.s32 0, %v743
        %v745 = vrot.slane %v453, %v744
        %747 = vbcast.lane.b32.xlu0 %v745, 256
        %v748 = vpop.permute.xlu0 %747
        %s750 = sor.u32 256, 8
        %751 = vbcast.lane.b32.xlu0 %v745, %s750
        %v752 = vpop.permute.xlu0 %751
        %v753 = vlaneseq
        %v754 = vshrl.u32 %v753, 7
        %v755 = vsub.s32 1, %v754
        %v756 = vrot.slane %v453, %v755
        %758 = vbcast.lane.b32.xlu0 %v756, 256
        %v759 = vpop.permute.xlu0 %758
        %s761 = sor.u32 256, 8
        %762 = vbcast.lane.b32.xlu0 %v756, %s761
        %v763 = vpop.permute.xlu0 %762
        %v764 = vlaneseq
        %v765 = vshrl.u32 %v764, 7
        %v766 = vsub.s32 2, %v765
        %v767 = vrot.slane %v453, %v766
        %769 = vbcast.lane.b32.xlu0 %v767, 256
        %v770 = vpop.permute.xlu0 %769
        %s772 = sor.u32 256, 8
        %773 = vbcast.lane.b32.xlu0 %v767, %s772
        %v774 = vpop.permute.xlu0 %773
        %v775 = vlaneseq
        %v776 = vshrl.u32 %v775, 7
        %v777 = vsub.s32 3, %v776
        %v778 = vrot.slane %v453, %v777
        %780 = vbcast.lane.b32.xlu0 %v778, 256
        %v781 = vpop.permute.xlu0 %780
        %s783 = sor.u32 256, 8
        %784 = vbcast.lane.b32.xlu0 %v778, %s783
        %v785 = vpop.permute.xlu0 %784
        %v786 = vlaneseq
        %v787 = vshrl.u32 %v786, 7
        %v788 = vsub.s32 4, %v787
        %v789 = vrot.slane %v453, %v788
        %791 = vbcast.lane.b32.xlu0 %v789, 256
        %v792 = vpop.permute.xlu0 %791
        %s794 = sor.u32 256, 8
        %795 = vbcast.lane.b32.xlu0 %v789, %s794
        %v796 = vpop.permute.xlu0 %795
        %v797 = vlaneseq
        %v798 = vshrl.u32 %v797, 7
        %v799 = vsub.s32 5, %v798
        %v800 = vrot.slane %v453, %v799
        %802 = vbcast.lane.b32.xlu0 %v800, 256
        %v803 = vpop.permute.xlu0 %802
        %s805 = sor.u32 256, 8
        %806 = vbcast.lane.b32.xlu0 %v800, %s805
        %v807 = vpop.permute.xlu0 %806
        %v808 = vlaneseq
        %v809 = vshrl.u32 %v808, 7
        %v810 = vsub.s32 6, %v809
        %v811 = vrot.slane %v453, %v810
        %813 = vbcast.lane.b32.xlu0 %v811, 256
        %v814 = vpop.permute.xlu0 %813
        %s816 = sor.u32 256, 8
        %817 = vbcast.lane.b32.xlu0 %v811, %s816
        %v818 = vpop.permute.xlu0 %817
        %v819 = vlaneseq
        %v820 = vshrl.u32 %v819, 7
        %v821 = vsub.s32 7, %v820
        %v822 = vrot.slane %v453, %v821
        %824 = vbcast.lane.b32.xlu0 %v822, 256
        %v825 = vpop.permute.xlu0 %824
        %s827 = sor.u32 256, 8
        %828 = vbcast.lane.b32.xlu0 %v822, %s827
        %v829 = vpop.permute.xlu0 %828
        %v830 = vlaneseq
        %v831 = vshrl.u32 %v830, 7
        %v832 = vsub.s32 0, %v831
        %v833 = vrot.slane %v458, %v832
        %835 = vbcast.lane.b32.xlu0 %v833, 256
        %v836 = vpop.permute.xlu0 %835
        %s838 = sor.u32 256, 8
        %839 = vbcast.lane.b32.xlu0 %v833, %s838
        %v840 = vpop.permute.xlu0 %839
        %v841 = vlaneseq
        %v842 = vshrl.u32 %v841, 7
        %v843 = vsub.s32 1, %v842
        %v844 = vrot.slane %v458, %v843
        %846 = vbcast.lane.b32.xlu0 %v844, 256
        %v847 = vpop.permute.xlu0 %846
        %s849 = sor.u32 256, 8
        %850 = vbcast.lane.b32.xlu0 %v844, %s849
        %v851 = vpop.permute.xlu0 %850
        %v852 = vlaneseq
        %v853 = vshrl.u32 %v852, 7
        %v854 = vsub.s32 2, %v853
        %v855 = vrot.slane %v458, %v854
        %857 = vbcast.lane.b32.xlu0 %v855, 256
        %v858 = vpop.permute.xlu0 %857
        %s860 = sor.u32 256, 8
        %861 = vbcast.lane.b32.xlu0 %v855, %s860
        %v862 = vpop.permute.xlu0 %861
        %v863 = vlaneseq
        %v864 = vshrl.u32 %v863, 7
        %v865 = vsub.s32 3, %v864
        %v866 = vrot.slane %v458, %v865
        %868 = vbcast.lane.b32.xlu0 %v866, 256
        %v869 = vpop.permute.xlu0 %868
        %s871 = sor.u32 256, 8
        %872 = vbcast.lane.b32.xlu0 %v866, %s871
        %v873 = vpop.permute.xlu0 %872
        %v874 = vlaneseq
        %v875 = vshrl.u32 %v874, 7
        %v876 = vsub.s32 4, %v875
        %v877 = vrot.slane %v458, %v876
        %879 = vbcast.lane.b32.xlu0 %v877, 256
        %v880 = vpop.permute.xlu0 %879
        %s882 = sor.u32 256, 8
        %883 = vbcast.lane.b32.xlu0 %v877, %s882
        %v884 = vpop.permute.xlu0 %883
        %v885 = vlaneseq
        %v886 = vshrl.u32 %v885, 7
        %v887 = vsub.s32 5, %v886
        %v888 = vrot.slane %v458, %v887
        %890 = vbcast.lane.b32.xlu0 %v888, 256
        %v891 = vpop.permute.xlu0 %890
        %s893 = sor.u32 256, 8
        %894 = vbcast.lane.b32.xlu0 %v888, %s893
        %v895 = vpop.permute.xlu0 %894
        %v896 = vlaneseq
        %v897 = vshrl.u32 %v896, 7
        %v898 = vsub.s32 6, %v897
        %v899 = vrot.slane %v458, %v898
        %901 = vbcast.lane.b32.xlu0 %v899, 256
        %v902 = vpop.permute.xlu0 %901
        %s904 = sor.u32 256, 8
        %905 = vbcast.lane.b32.xlu0 %v899, %s904
        %v906 = vpop.permute.xlu0 %905
        %v907 = vlaneseq
        %v908 = vshrl.u32 %v907, 7
        %v909 = vsub.s32 7, %v908
        %v910 = vrot.slane %v458, %v909
        %912 = vbcast.lane.b32.xlu0 %v910, 256
        %v913 = vpop.permute.xlu0 %912
        %s915 = sor.u32 256, 8
        %916 = vbcast.lane.b32.xlu0 %v910, %s915
        %v917 = vpop.permute.xlu0 %916
        %v918 = vlaneseq
        %v919 = vshrl.u32 %v918, 7
        %v920 = vsub.s32 0, %v919
        %v921 = vrot.slane %v459, %v920
        %923 = vbcast.lane.b32.xlu0 %v921, 256
        %v924 = vpop.permute.xlu0 %923
        %s926 = sor.u32 256, 8
        %927 = vbcast.lane.b32.xlu0 %v921, %s926
        %v928 = vpop.permute.xlu0 %927
        %v929 = vlaneseq
        %v930 = vshrl.u32 %v929, 7
        %v931 = vsub.s32 1, %v930
        %v932 = vrot.slane %v459, %v931
        %934 = vbcast.lane.b32.xlu0 %v932, 256
        %v935 = vpop.permute.xlu0 %934
        %s937 = sor.u32 256, 8
        %938 = vbcast.lane.b32.xlu0 %v932, %s937
        %v939 = vpop.permute.xlu0 %938
        %v940 = vlaneseq
        %v941 = vshrl.u32 %v940, 7
        %v942 = vsub.s32 2, %v941
        %v943 = vrot.slane %v459, %v942
        %945 = vbcast.lane.b32.xlu0 %v943, 256
        %v946 = vpop.permute.xlu0 %945
        %s948 = sor.u32 256, 8
        %949 = vbcast.lane.b32.xlu0 %v943, %s948
        %v950 = vpop.permute.xlu0 %949
        %v951 = vlaneseq
        %v952 = vshrl.u32 %v951, 7
        %v953 = vsub.s32 3, %v952
        %v954 = vrot.slane %v459, %v953
        %956 = vbcast.lane.b32.xlu0 %v954, 256
        %v957 = vpop.permute.xlu0 %956
        %s959 = sor.u32 256, 8
        %960 = vbcast.lane.b32.xlu0 %v954, %s959
        %v961 = vpop.permute.xlu0 %960
        %v962 = vlaneseq
        %v963 = vshrl.u32 %v962, 7
        %v964 = vsub.s32 4, %v963
        %v965 = vrot.slane %v459, %v964
        %967 = vbcast.lane.b32.xlu0 %v965, 256
        %v968 = vpop.permute.xlu0 %967
        %s970 = sor.u32 256, 8
        %971 = vbcast.lane.b32.xlu0 %v965, %s970
        %v972 = vpop.permute.xlu0 %971
        %v973 = vlaneseq
        %v974 = vshrl.u32 %v973, 7
        %v975 = vsub.s32 5, %v974
        %v976 = vrot.slane %v459, %v975
        %978 = vbcast.lane.b32.xlu0 %v976, 256
        %v979 = vpop.permute.xlu0 %978
        %s981 = sor.u32 256, 8
        %982 = vbcast.lane.b32.xlu0 %v976, %s981
        %v983 = vpop.permute.xlu0 %982
        %v984 = vlaneseq
        %v985 = vshrl.u32 %v984, 7
        %v986 = vsub.s32 6, %v985
        %v987 = vrot.slane %v459, %v986
        %989 = vbcast.lane.b32.xlu0 %v987, 256
        %v990 = vpop.permute.xlu0 %989
        %s992 = sor.u32 256, 8
        %993 = vbcast.lane.b32.xlu0 %v987, %s992
        %v994 = vpop.permute.xlu0 %993
        %v995 = vlaneseq
        %v996 = vshrl.u32 %v995, 7
        %v997 = vsub.s32 7, %v996
        %v998 = vrot.slane %v459, %v997
        %1000 = vbcast.lane.b32.xlu0 %v998, 256
        %v1001 = vpop.permute.xlu0 %1000
        %s1003 = sor.u32 256, 8
        %1004 = vbcast.lane.b32.xlu0 %v998, %s1003
        %v1005 = vpop.permute.xlu0 %1004
        %v1006 = vlaneseq
        %v1007 = vshrl.u32 %v1006, 7
        %v1008 = vsub.s32 0, %v1007
        %v1009 = vrot.slane %v460, %v1008
        %1011 = vbcast.lane.b32.xlu0 %v1009, 256
        %v1012 = vpop.permute.xlu0 %1011
        %s1014 = sor.u32 256, 8
        %1015 = vbcast.lane.b32.xlu0 %v1009, %s1014
        %v1016 = vpop.permute.xlu0 %1015
        %v1017 = vlaneseq
        %v1018 = vshrl.u32 %v1017, 7
        %v1019 = vsub.s32 1, %v1018
        %v1020 = vrot.slane %v460, %v1019
        %1022 = vbcast.lane.b32.xlu0 %v1020, 256
        %v1023 = vpop.permute.xlu0 %1022
        %s1025 = sor.u32 256, 8
        %1026 = vbcast.lane.b32.xlu0 %v1020, %s1025
        %v1027 = vpop.permute.xlu0 %1026
        %v1028 = vlaneseq
        %v1029 = vshrl.u32 %v1028, 7
        %v1030 = vsub.s32 2, %v1029
        %v1031 = vrot.slane %v460, %v1030
        %1033 = vbcast.lane.b32.xlu0 %v1031, 256
        %v1034 = vpop.permute.xlu0 %1033
        %s1036 = sor.u32 256, 8
        %1037 = vbcast.lane.b32.xlu0 %v1031, %s1036
        %v1038 = vpop.permute.xlu0 %1037
        %v1039 = vlaneseq
        %v1040 = vshrl.u32 %v1039, 7
        %v1041 = vsub.s32 3, %v1040
        %v1042 = vrot.slane %v460, %v1041
        %1044 = vbcast.lane.b32.xlu0 %v1042, 256
        %v1045 = vpop.permute.xlu0 %1044
        %s1047 = sor.u32 256, 8
        %1048 = vbcast.lane.b32.xlu0 %v1042, %s1047
        %v1049 = vpop.permute.xlu0 %1048
        %v1050 = vlaneseq
        %v1051 = vshrl.u32 %v1050, 7
        %v1052 = vsub.s32 4, %v1051
        %v1053 = vrot.slane %v460, %v1052
        %1055 = vbcast.lane.b32.xlu0 %v1053, 256
        %v1056 = vpop.permute.xlu0 %1055
        %s1058 = sor.u32 256, 8
        %1059 = vbcast.lane.b32.xlu0 %v1053, %s1058
        %v1060 = vpop.permute.xlu0 %1059
        %v1061 = vlaneseq
        %v1062 = vshrl.u32 %v1061, 7
        %v1063 = vsub.s32 5, %v1062
        %v1064 = vrot.slane %v460, %v1063
        %1066 = vbcast.lane.b32.xlu0 %v1064, 256
        %v1067 = vpop.permute.xlu0 %1066
        %s1069 = sor.u32 256, 8
        %1070 = vbcast.lane.b32.xlu0 %v1064, %s1069
        %v1071 = vpop.permute.xlu0 %1070
        %v1072 = vlaneseq
        %v1073 = vshrl.u32 %v1072, 7
        %v1074 = vsub.s32 6, %v1073
        %v1075 = vrot.slane %v460, %v1074
        %1077 = vbcast.lane.b32.xlu0 %v1075, 256
        %v1078 = vpop.permute.xlu0 %1077
        %s1080 = sor.u32 256, 8
        %1081 = vbcast.lane.b32.xlu0 %v1075, %s1080
        %v1082 = vpop.permute.xlu0 %1081
        %v1083 = vlaneseq
        %v1084 = vshrl.u32 %v1083, 7
        %v1085 = vsub.s32 7, %v1084
        %v1086 = vrot.slane %v460, %v1085
        %1088 = vbcast.lane.b32.xlu0 %v1086, 256
        %v1089 = vpop.permute.xlu0 %1088
        %s1091 = sor.u32 256, 8
        %1092 = vbcast.lane.b32.xlu0 %v1086, %s1091
        %v1093 = vpop.permute.xlu0 %1092
        %v1094 = vlaneseq
        %v1095 = vshrl.u32 %v1094, 7
        %v1096 = vsub.s32 0, %v1095
        %v1097 = vrot.slane %v461, %v1096
        %1099 = vbcast.lane.b32.xlu0 %v1097, 256
        %v1100 = vpop.permute.xlu0 %1099
        %s1102 = sor.u32 256, 8
        %1103 = vbcast.lane.b32.xlu0 %v1097, %s1102
        %v1104 = vpop.permute.xlu0 %1103
        %v1105 = vlaneseq
        %v1106 = vshrl.u32 %v1105, 7
        %v1107 = vsub.s32 1, %v1106
        %v1108 = vrot.slane %v461, %v1107
        %1110 = vbcast.lane.b32.xlu0 %v1108, 256
        %v1111 = vpop.permute.xlu0 %1110
        %s1113 = sor.u32 256, 8
        %1114 = vbcast.lane.b32.xlu0 %v1108, %s1113
        %v1115 = vpop.permute.xlu0 %1114
        %v1116 = vlaneseq
        %v1117 = vshrl.u32 %v1116, 7
        %v1118 = vsub.s32 2, %v1117
        %v1119 = vrot.slane %v461, %v1118
        %1121 = vbcast.lane.b32.xlu0 %v1119, 256
        %v1122 = vpop.permute.xlu0 %1121
        %s1124 = sor.u32 256, 8
        %1125 = vbcast.lane.b32.xlu0 %v1119, %s1124
        %v1126 = vpop.permute.xlu0 %1125
        %v1127 = vlaneseq
        %v1128 = vshrl.u32 %v1127, 7
        %v1129 = vsub.s32 3, %v1128
        %v1130 = vrot.slane %v461, %v1129
        %1132 = vbcast.lane.b32.xlu0 %v1130, 256
        %v1133 = vpop.permute.xlu0 %1132
        %s1135 = sor.u32 256, 8
        %1136 = vbcast.lane.b32.xlu0 %v1130, %s1135
        %v1137 = vpop.permute.xlu0 %1136
        %v1138 = vlaneseq
        %v1139 = vshrl.u32 %v1138, 7
        %v1140 = vsub.s32 4, %v1139
        %v1141 = vrot.slane %v461, %v1140
        %1143 = vbcast.lane.b32.xlu0 %v1141, 256
        %v1144 = vpop.permute.xlu0 %1143
        %s1146 = sor.u32 256, 8
        %1147 = vbcast.lane.b32.xlu0 %v1141, %s1146
        %v1148 = vpop.permute.xlu0 %1147
        %v1149 = vlaneseq
        %v1150 = vshrl.u32 %v1149, 7
        %v1151 = vsub.s32 5, %v1150
        %v1152 = vrot.slane %v461, %v1151
        %1154 = vbcast.lane.b32.xlu0 %v1152, 256
        %v1155 = vpop.permute.xlu0 %1154
        %s1157 = sor.u32 256, 8
        %1158 = vbcast.lane.b32.xlu0 %v1152, %s1157
        %v1159 = vpop.permute.xlu0 %1158
        %v1160 = vlaneseq
        %v1161 = vshrl.u32 %v1160, 7
        %v1162 = vsub.s32 6, %v1161
        %v1163 = vrot.slane %v461, %v1162
        %1165 = vbcast.lane.b32.xlu0 %v1163, 256
        %v1166 = vpop.permute.xlu0 %1165
        %s1168 = sor.u32 256, 8
        %1169 = vbcast.lane.b32.xlu0 %v1163, %s1168
        %v1170 = vpop.permute.xlu0 %1169
        %v1171 = vlaneseq
        %v1172 = vshrl.u32 %v1171, 7
        %v1173 = vsub.s32 7, %v1172
        %v1174 = vrot.slane %v461, %v1173
        %1176 = vbcast.lane.b32.xlu0 %v1174, 256
        %v1177 = vpop.permute.xlu0 %1176
        %s1179 = sor.u32 256, 8
        %1180 = vbcast.lane.b32.xlu0 %v1174, %s1179
        %v1181 = vpop.permute.xlu0 %1180
        %vm1182 = vcmask 7168
        %v1183 = vsel %vm1182, %v484, %v836
        %v1184 = vsel %vm1182, %v488, %v840
        %v1185 = vsel %vm1182, %v495, %v847
        %v1186 = vsel %vm1182, %v499, %v851
        %v1187 = vsel %vm1182, %v506, %v858
        %v1188 = vsel %vm1182, %v510, %v862
        %v1189 = vsel %vm1182, %v517, %v869
        %v1190 = vsel %vm1182, %v521, %v873
        %v1191 = vsel %vm1182, %v528, %v880
        %v1192 = vsel %vm1182, %v532, %v884
        %v1193 = vsel %vm1182, %v539, %v891
        %v1194 = vsel %vm1182, %v543, %v895
        %v1195 = vsel %vm1182, %v550, %v902
        %v1196 = vsel %vm1182, %v554, %v906
        %v1197 = vsel %vm1182, %v561, %v913
        %v1198 = vsel %vm1182, %v565, %v917
        %v1199 = vsel %vm1182, %v572, %v924
        %v1200 = vsel %vm1182, %v576, %v928
        %v1201 = vsel %vm1182, %v583, %v935
        %v1202 = vsel %vm1182, %v587, %v939
        %v1203 = vsel %vm1182, %v594, %v946
        %v1204 = vsel %vm1182, %v598, %v950
        %v1205 = vsel %vm1182, %v605, %v957
        %v1206 = vsel %vm1182, %v609, %v961
        %v1207 = vsel %vm1182, %v616, %v968
        %v1208 = vsel %vm1182, %v620, %v972
        %v1209 = vsel %vm1182, %v627, %v979
        %v1210 = vsel %vm1182, %v631, %v983
        %v1211 = vsel %vm1182, %v638, %v990
        %v1212 = vsel %vm1182, %v642, %v994
        %v1213 = vsel %vm1182, %v649, %v1001
        %v1214 = vsel %vm1182, %v653, %v1005
        %v1215 = vsel %vm1182, %v660, %v1012
        %v1216 = vsel %vm1182, %v664, %v1016
        %v1217 = vsel %vm1182, %v671, %v1023
        %v1218 = vsel %vm1182, %v675, %v1027
        %v1219 = vsel %vm1182, %v682, %v1034
        %v1220 = vsel %vm1182, %v686, %v1038
        %v1221 = vsel %vm1182, %v693, %v1045
        %v1222 = vsel %vm1182, %v697, %v1049
        %v1223 = vsel %vm1182, %v704, %v1056
        %v1224 = vsel %vm1182, %v708, %v1060
        %v1225 = vsel %vm1182, %v715, %v1067
        %v1226 = vsel %vm1182, %v719, %v1071
        %v1227 = vsel %vm1182, %v726, %v1078
        %v1228 = vsel %vm1182, %v730, %v1082
        %v1229 = vsel %vm1182, %v737, %v1089
        %v1230 = vsel %vm1182, %v741, %v1093
        %v1231 = vsel %vm1182, %v748, %v1100
        %v1232 = vsel %vm1182, %v752, %v1104
        %v1233 = vsel %vm1182, %v759, %v1111
        %v1234 = vsel %vm1182, %v763, %v1115
        %v1235 = vsel %vm1182, %v770, %v1122
        %v1236 = vsel %vm1182, %v774, %v1126
        %v1237 = vsel %vm1182, %v781, %v1133
        %v1238 = vsel %vm1182, %v785, %v1137
        %v1239 = vsel %vm1182, %v792, %v1144
        %v1240 = vsel %vm1182, %v796, %v1148
        %v1241 = vsel %vm1182, %v803, %v1155
        %v1242 = vsel %vm1182, %v807, %v1159
        %v1243 = vsel %vm1182, %v814, %v1166
        %v1244 = vsel %vm1182, %v818, %v1170
        %v1245 = vsel %vm1182, %v825, %v1177
        %v1246 = vsel %vm1182, %v829, %v1181
        %v1247 = vcombine.low %v1183, %v1187
        %v1248 = vcombine.high %v1183, %v1187
        %v1250 = vunpack.c.l.s4 1983009808
        %v1251 = vunpack.c.0.s8 %v1250
        %v1252 = vlaneseq
        %v1253 = vshrl.u32 %v1252, 7
        %v1254 = vsub.s32 %v1251, %v1253
        %v1255 = vrot.slane %v1247, %v1254
        %v1257 = vunpack.c.l.s4 1983009808
        %v1258 = vunpack.c.0.s8 %v1257
        %v1259 = vlaneseq
        %v1260 = vshrl.u32 %v1259, 7
        %v1261 = vsub.s32 %v1258, %v1260
        %v1262 = vrot.slane %v1248, %v1261
        %v1263 = vcombine.low %v1185, %v1189
        %v1264 = vcombine.high %v1185, %v1189
        %v1266 = vunpack.c.l.s4 1983009808
        %v1267 = vunpack.c.0.s8 %v1266
        %v1268 = vlaneseq
        %v1269 = vshrl.u32 %v1268, 7
        %v1270 = vsub.s32 %v1267, %v1269
        %v1271 = vrot.slane %v1263, %v1270
        %v1273 = vunpack.c.l.s4 1983009808
        %v1274 = vunpack.c.0.s8 %v1273
        %v1275 = vlaneseq
        %v1276 = vshrl.u32 %v1275, 7
        %v1277 = vsub.s32 %v1274, %v1276
        %v1278 = vrot.slane %v1264, %v1277
        %v1279 = vcombine.low %v1191, %v1195
        %v1280 = vcombine.high %v1191, %v1195
        %v1282 = vunpack.c.l.s4 1983009808
        %v1283 = vunpack.c.0.s8 %v1282
        %v1284 = vlaneseq
        %v1285 = vshrl.u32 %v1284, 7
        %v1286 = vsub.s32 %v1283, %v1285
        %v1287 = vrot.slane %v1279, %v1286
        %v1289 = vunpack.c.l.s4 1983009808
        %v1290 = vunpack.c.0.s8 %v1289
        %v1291 = vlaneseq
        %v1292 = vshrl.u32 %v1291, 7
        %v1293 = vsub.s32 %v1290, %v1292
        %v1294 = vrot.slane %v1280, %v1293
        %v1295 = vcombine.low %v1193, %v1197
        %v1296 = vcombine.high %v1193, %v1197
        %v1298 = vunpack.c.l.s4 1983009808
        %v1299 = vunpack.c.0.s8 %v1298
        %v1300 = vlaneseq
        %v1301 = vshrl.u32 %v1300, 7
        %v1302 = vsub.s32 %v1299, %v1301
        %v1303 = vrot.slane %v1295, %v1302
        %v1305 = vunpack.c.l.s4 1983009808
        %v1306 = vunpack.c.0.s8 %v1305
        %v1307 = vlaneseq
        %v1308 = vshrl.u32 %v1307, 7
        %v1309 = vsub.s32 %v1306, %v1308
        %v1310 = vrot.slane %v1296, %v1309
        %v1311 = vcombine.low %v1255, %v1271
        %v1312 = vcombine.high %v1255, %v1271
        %v1314 = vunpack.c.l.s4 1934713408
        %v1315 = vunpack.c.0.s8 %v1314
        %v1316 = vlaneseq
        %v1317 = vshrl.u32 %v1316, 7
        %v1318 = vsub.s32 %v1315, %v1317
        %v1319 = vrot.slane %v1311, %v1318
        %v1321 = vunpack.c.l.s4 1934713408
        %v1322 = vunpack.c.0.s8 %v1321
        %v1323 = vlaneseq
        %v1324 = vshrl.u32 %v1323, 7
        %v1325 = vsub.s32 %v1322, %v1324
        %v1326 = vrot.slane %v1312, %v1325
        %v1327 = vcombine.low %v1262, %v1278
        %v1328 = vcombine.high %v1262, %v1278
        %v1330 = vunpack.c.l.s4 1934713408
        %v1331 = vunpack.c.0.s8 %v1330
        %v1332 = vlaneseq
        %v1333 = vshrl.u32 %v1332, 7
        %v1334 = vsub.s32 %v1331, %v1333
        %v1335 = vrot.slane %v1327, %v1334
        %v1337 = vunpack.c.l.s4 1934713408
        %v1338 = vunpack.c.0.s8 %v1337
        %v1339 = vlaneseq
        %v1340 = vshrl.u32 %v1339, 7
        %v1341 = vsub.s32 %v1338, %v1340
        %v1342 = vrot.slane %v1328, %v1341
        %v1343 = vcombine.low %v1287, %v1303
        %v1344 = vcombine.high %v1287, %v1303
        %v1346 = vunpack.c.l.s4 1934713408
        %v1347 = vunpack.c.0.s8 %v1346
        %v1348 = vlaneseq
        %v1349 = vshrl.u32 %v1348, 7
        %v1350 = vsub.s32 %v1347, %v1349
        %v1351 = vrot.slane %v1343, %v1350
        %v1353 = vunpack.c.l.s4 1934713408
        %v1354 = vunpack.c.0.s8 %v1353
        %v1355 = vlaneseq
        %v1356 = vshrl.u32 %v1355, 7
        %v1357 = vsub.s32 %v1354, %v1356
        %v1358 = vrot.slane %v1344, %v1357
        %v1359 = vcombine.low %v1294, %v1310
        %v1360 = vcombine.high %v1294, %v1310
        %v1362 = vunpack.c.l.s4 1934713408
        %v1363 = vunpack.c.0.s8 %v1362
        %v1364 = vlaneseq
        %v1365 = vshrl.u32 %v1364, 7
        %v1366 = vsub.s32 %v1363, %v1365
        %v1367 = vrot.slane %v1359, %v1366
        %v1369 = vunpack.c.l.s4 1934713408
        %v1370 = vunpack.c.0.s8 %v1369
        %v1371 = vlaneseq
        %v1372 = vshrl.u32 %v1371, 7
        %v1373 = vsub.s32 %v1370, %v1372
        %v1374 = vrot.slane %v1360, %v1373
        %v1375 = vcombine.low %v1319, %v1351
        %v1376 = vcombine.high %v1319, %v1351
        %v1377 = vcombine.low %v1326, %v1358
        %v1378 = vcombine.high %v1326, %v1358
        %v1379 = vcombine.low %v1335, %v1367
        %v1380 = vcombine.high %v1335, %v1367
        %v1381 = vcombine.low %v1342, %v1374
        %v1382 = vcombine.high %v1342, %v1374
        %v1383 = vcombine.low %v1199, %v1203
        %v1384 = vcombine.high %v1199, %v1203
        %v1386 = vunpack.c.l.s4 1983009808
        %v1387 = vunpack.c.0.s8 %v1386
        %v1388 = vlaneseq
        %v1389 = vshrl.u32 %v1388, 7
        %v1390 = vsub.s32 %v1387, %v1389
        %v1391 = vrot.slane %v1383, %v1390
        %v1393 = vunpack.c.l.s4 1983009808
        %v1394 = vunpack.c.0.s8 %v1393
        %v1395 = vlaneseq
        %v1396 = vshrl.u32 %v1395, 7
        %v1397 = vsub.s32 %v1394, %v1396
        %v1398 = vrot.slane %v1384, %v1397
        %v1399 = vcombine.low %v1201, %v1205
        %v1400 = vcombine.high %v1201, %v1205
        %v1402 = vunpack.c.l.s4 1983009808
        %v1403 = vunpack.c.0.s8 %v1402
        %v1404 = vlaneseq
        %v1405 = vshrl.u32 %v1404, 7
        %v1406 = vsub.s32 %v1403, %v1405
        %v1407 = vrot.slane %v1399, %v1406
        %v1409 = vunpack.c.l.s4 1983009808
        %v1410 = vunpack.c.0.s8 %v1409
        %v1411 = vlaneseq
        %v1412 = vshrl.u32 %v1411, 7
        %v1413 = vsub.s32 %v1410, %v1412
        %v1414 = vrot.slane %v1400, %v1413
        %v1415 = vcombine.low %v1207, %v1211
        %v1416 = vcombine.high %v1207, %v1211
        %v1418 = vunpack.c.l.s4 1983009808
        %v1419 = vunpack.c.0.s8 %v1418
        %v1420 = vlaneseq
        %v1421 = vshrl.u32 %v1420, 7
        %v1422 = vsub.s32 %v1419, %v1421
        %v1423 = vrot.slane %v1415, %v1422
        %v1425 = vunpack.c.l.s4 1983009808
        %v1426 = vunpack.c.0.s8 %v1425
        %v1427 = vlaneseq
        %v1428 = vshrl.u32 %v1427, 7
        %v1429 = vsub.s32 %v1426, %v1428
        %v1430 = vrot.slane %v1416, %v1429
        %v1431 = vcombine.low %v1209, %v1213
        %v1432 = vcombine.high %v1209, %v1213
        %v1434 = vunpack.c.l.s4 1983009808
        %v1435 = vunpack.c.0.s8 %v1434
        %v1436 = vlaneseq
        %v1437 = vshrl.u32 %v1436, 7
        %v1438 = vsub.s32 %v1435, %v1437
        %v1439 = vrot.slane %v1431, %v1438
        %v1441 = vunpack.c.l.s4 1983009808
        %v1442 = vunpack.c.0.s8 %v1441
        %v1443 = vlaneseq
        %v1444 = vshrl.u32 %v1443, 7
        %v1445 = vsub.s32 %v1442, %v1444
        %v1446 = vrot.slane %v1432, %v1445
        %v1447 = vcombine.low %v1391, %v1407
        %v1448 = vcombine.high %v1391, %v1407
        %v1450 = vunpack.c.l.s4 1934713408
        %v1451 = vunpack.c.0.s8 %v1450
        %v1452 = vlaneseq
        %v1453 = vshrl.u32 %v1452, 7
        %v1454 = vsub.s32 %v1451, %v1453
        %v1455 = vrot.slane %v1447, %v1454
        %v1457 = vunpack.c.l.s4 1934713408
        %v1458 = vunpack.c.0.s8 %v1457
        %v1459 = vlaneseq
        %v1460 = vshrl.u32 %v1459, 7
        %v1461 = vsub.s32 %v1458, %v1460
        %v1462 = vrot.slane %v1448, %v1461
        %v1463 = vcombine.low %v1398, %v1414
        %v1464 = vcombine.high %v1398, %v1414
        %v1466 = vunpack.c.l.s4 1934713408
        %v1467 = vunpack.c.0.s8 %v1466
        %v1468 = vlaneseq
        %v1469 = vshrl.u32 %v1468, 7
        %v1470 = vsub.s32 %v1467, %v1469
        %v1471 = vrot.slane %v1463, %v1470
        %v1473 = vunpack.c.l.s4 1934713408
        %v1474 = vunpack.c.0.s8 %v1473
        %v1475 = vlaneseq
        %v1476 = vshrl.u32 %v1475, 7
        %v1477 = vsub.s32 %v1474, %v1476
        %v1478 = vrot.slane %v1464, %v1477
        %v1479 = vcombine.low %v1423, %v1439
        %v1480 = vcombine.high %v1423, %v1439
        %v1482 = vunpack.c.l.s4 1934713408
        %v1483 = vunpack.c.0.s8 %v1482
        %v1484 = vlaneseq
        %v1485 = vshrl.u32 %v1484, 7
        %v1486 = vsub.s32 %v1483, %v1485
        %v1487 = vrot.slane %v1479, %v1486
        %v1489 = vunpack.c.l.s4 1934713408
        %v1490 = vunpack.c.0.s8 %v1489
        %v1491 = vlaneseq
        %v1492 = vshrl.u32 %v1491, 7
        %v1493 = vsub.s32 %v1490, %v1492
        %v1494 = vrot.slane %v1480, %v1493
        %v1495 = vcombine.low %v1430, %v1446
        %v1496 = vcombine.high %v1430, %v1446
        %v1498 = vunpack.c.l.s4 1934713408
        %v1499 = vunpack.c.0.s8 %v1498
        %v1500 = vlaneseq
        %v1501 = vshrl.u32 %v1500, 7
        %v1502 = vsub.s32 %v1499, %v1501
        %v1503 = vrot.slane %v1495, %v1502
        %v1505 = vunpack.c.l.s4 1934713408
        %v1506 = vunpack.c.0.s8 %v1505
        %v1507 = vlaneseq
        %v1508 = vshrl.u32 %v1507, 7
        %v1509 = vsub.s32 %v1506, %v1508
        %v1510 = vrot.slane %v1496, %v1509
        %v1511 = vcombine.low %v1455, %v1487
        %v1512 = vcombine.high %v1455, %v1487
        %v1513 = vcombine.low %v1462, %v1494
        %v1514 = vcombine.high %v1462, %v1494
        %v1515 = vcombine.low %v1471, %v1503
        %v1516 = vcombine.high %v1471, %v1503
        %v1517 = vcombine.low %v1478, %v1510
        %v1518 = vcombine.high %v1478, %v1510
        %v1519 = vcombine.low %v1184, %v1188
        %v1520 = vcombine.high %v1184, %v1188
        %v1522 = vunpack.c.l.s4 1983009808
        %v1523 = vunpack.c.0.s8 %v1522
        %v1524 = vlaneseq
        %v1525 = vshrl.u32 %v1524, 7
        %v1526 = vsub.s32 %v1523, %v1525
        %v1527 = vrot.slane %v1519, %v1526
        %v1529 = vunpack.c.l.s4 1983009808
        %v1530 = vunpack.c.0.s8 %v1529
        %v1531 = vlaneseq
        %v1532 = vshrl.u32 %v1531, 7
        %v1533 = vsub.s32 %v1530, %v1532
        %v1534 = vrot.slane %v1520, %v1533
        %v1535 = vcombine.low %v1186, %v1190
        %v1536 = vcombine.high %v1186, %v1190
        %v1538 = vunpack.c.l.s4 1983009808
        %v1539 = vunpack.c.0.s8 %v1538
        %v1540 = vlaneseq
        %v1541 = vshrl.u32 %v1540, 7
        %v1542 = vsub.s32 %v1539, %v1541
        %v1543 = vrot.slane %v1535, %v1542
        %v1545 = vunpack.c.l.s4 1983009808
        %v1546 = vunpack.c.0.s8 %v1545
        %v1547 = vlaneseq
        %v1548 = vshrl.u32 %v1547, 7
        %v1549 = vsub.s32 %v1546, %v1548
        %v1550 = vrot.slane %v1536, %v1549
        %v1551 = vcombine.low %v1192, %v1196
        %v1552 = vcombine.high %v1192, %v1196
        %v1554 = vunpack.c.l.s4 1983009808
        %v1555 = vunpack.c.0.s8 %v1554
        %v1556 = vlaneseq
        %v1557 = vshrl.u32 %v1556, 7
        %v1558 = vsub.s32 %v1555, %v1557
        %v1559 = vrot.slane %v1551, %v1558
        %v1561 = vunpack.c.l.s4 1983009808
        %v1562 = vunpack.c.0.s8 %v1561
        %v1563 = vlaneseq
        %v1564 = vshrl.u32 %v1563, 7
        %v1565 = vsub.s32 %v1562, %v1564
        %v1566 = vrot.slane %v1552, %v1565
        %v1567 = vcombine.low %v1194, %v1198
        %v1568 = vcombine.high %v1194, %v1198
        %v1570 = vunpack.c.l.s4 1983009808
        %v1571 = vunpack.c.0.s8 %v1570
        %v1572 = vlaneseq
        %v1573 = vshrl.u32 %v1572, 7
        %v1574 = vsub.s32 %v1571, %v1573
        %v1575 = vrot.slane %v1567, %v1574
        %v1577 = vunpack.c.l.s4 1983009808
        %v1578 = vunpack.c.0.s8 %v1577
        %v1579 = vlaneseq
        %v1580 = vshrl.u32 %v1579, 7
        %v1581 = vsub.s32 %v1578, %v1580
        %v1582 = vrot.slane %v1568, %v1581
        %v1583 = vcombine.low %v1527, %v1543
        %v1584 = vcombine.high %v1527, %v1543
        %v1586 = vunpack.c.l.s4 1934713408
        %v1587 = vunpack.c.0.s8 %v1586
        %v1588 = vlaneseq
        %v1589 = vshrl.u32 %v1588, 7
        %v1590 = vsub.s32 %v1587, %v1589
        %v1591 = vrot.slane %v1583, %v1590
        %v1593 = vunpack.c.l.s4 1934713408
        %v1594 = vunpack.c.0.s8 %v1593
        %v1595 = vlaneseq
        %v1596 = vshrl.u32 %v1595, 7
        %v1597 = vsub.s32 %v1594, %v1596
        %v1598 = vrot.slane %v1584, %v1597
        %v1599 = vcombine.low %v1534, %v1550
        %v1600 = vcombine.high %v1534, %v1550
        %v1602 = vunpack.c.l.s4 1934713408
        %v1603 = vunpack.c.0.s8 %v1602
        %v1604 = vlaneseq
        %v1605 = vshrl.u32 %v1604, 7
        %v1606 = vsub.s32 %v1603, %v1605
        %v1607 = vrot.slane %v1599, %v1606
        %v1609 = vunpack.c.l.s4 1934713408
        %v1610 = vunpack.c.0.s8 %v1609
        %v1611 = vlaneseq
        %v1612 = vshrl.u32 %v1611, 7
        %v1613 = vsub.s32 %v1610, %v1612
        %v1614 = vrot.slane %v1600, %v1613
        %v1615 = vcombine.low %v1559, %v1575
        %v1616 = vcombine.high %v1559, %v1575
        %v1618 = vunpack.c.l.s4 1934713408
        %v1619 = vunpack.c.0.s8 %v1618
        %v1620 = vlaneseq
        %v1621 = vshrl.u32 %v1620, 7
        %v1622 = vsub.s32 %v1619, %v1621
        %v1623 = vrot.slane %v1615, %v1622
        %v1625 = vunpack.c.l.s4 1934713408
        %v1626 = vunpack.c.0.s8 %v1625
        %v1627 = vlaneseq
        %v1628 = vshrl.u32 %v1627, 7
        %v1629 = vsub.s32 %v1626, %v1628
        %v1630 = vrot.slane %v1616, %v1629
        %v1631 = vcombine.low %v1566, %v1582
        %v1632 = vcombine.high %v1566, %v1582
        %v1634 = vunpack.c.l.s4 1934713408
        %v1635 = vunpack.c.0.s8 %v1634
        %v1636 = vlaneseq
        %v1637 = vshrl.u32 %v1636, 7
        %v1638 = vsub.s32 %v1635, %v1637
        %v1639 = vrot.slane %v1631, %v1638
        %v1641 = vunpack.c.l.s4 1934713408
        %v1642 = vunpack.c.0.s8 %v1641
        %v1643 = vlaneseq
        %v1644 = vshrl.u32 %v1643, 7
        %v1645 = vsub.s32 %v1642, %v1644
        %v1646 = vrot.slane %v1632, %v1645
        %v1647 = vcombine.low %v1591, %v1623
        %v1648 = vcombine.high %v1591, %v1623
        %v1649 = vcombine.low %v1598, %v1630
        %v1650 = vcombine.high %v1598, %v1630
        %v1651 = vcombine.low %v1607, %v1639
        %v1652 = vcombine.high %v1607, %v1639
        %v1653 = vcombine.low %v1614, %v1646
        %v1654 = vcombine.high %v1614, %v1646
        %v1655 = vcombine.low %v1200, %v1204
        %v1656 = vcombine.high %v1200, %v1204
        %v1658 = vunpack.c.l.s4 1983009808
        %v1659 = vunpack.c.0.s8 %v1658
        %v1660 = vlaneseq
        %v1661 = vshrl.u32 %v1660, 7
        %v1662 = vsub.s32 %v1659, %v1661
        %v1663 = vrot.slane %v1655, %v1662
        %v1665 = vunpack.c.l.s4 1983009808
        %v1666 = vunpack.c.0.s8 %v1665
        %v1667 = vlaneseq
        %v1668 = vshrl.u32 %v1667, 7
        %v1669 = vsub.s32 %v1666, %v1668
        %v1670 = vrot.slane %v1656, %v1669
        %v1671 = vcombine.low %v1202, %v1206
        %v1672 = vcombine.high %v1202, %v1206
        %v1674 = vunpack.c.l.s4 1983009808
        %v1675 = vunpack.c.0.s8 %v1674
        %v1676 = vlaneseq
        %v1677 = vshrl.u32 %v1676, 7
        %v1678 = vsub.s32 %v1675, %v1677
        %v1679 = vrot.slane %v1671, %v1678
        %v1681 = vunpack.c.l.s4 1983009808
        %v1682 = vunpack.c.0.s8 %v1681
        %v1683 = vlaneseq
        %v1684 = vshrl.u32 %v1683, 7
        %v1685 = vsub.s32 %v1682, %v1684
        %v1686 = vrot.slane %v1672, %v1685
        %v1687 = vcombine.low %v1208, %v1212
        %v1688 = vcombine.high %v1208, %v1212
        %v1690 = vunpack.c.l.s4 1983009808
        %v1691 = vunpack.c.0.s8 %v1690
        %v1692 = vlaneseq
        %v1693 = vshrl.u32 %v1692, 7
        %v1694 = vsub.s32 %v1691, %v1693
        %v1695 = vrot.slane %v1687, %v1694
        %v1697 = vunpack.c.l.s4 1983009808
        %v1698 = vunpack.c.0.s8 %v1697
        %v1699 = vlaneseq
        %v1700 = vshrl.u32 %v1699, 7
        %v1701 = vsub.s32 %v1698, %v1700
        %v1702 = vrot.slane %v1688, %v1701
        %v1703 = vcombine.low %v1210, %v1214
        %v1704 = vcombine.high %v1210, %v1214
        %v1706 = vunpack.c.l.s4 1983009808
        %v1707 = vunpack.c.0.s8 %v1706
        %v1708 = vlaneseq
        %v1709 = vshrl.u32 %v1708, 7
        %v1710 = vsub.s32 %v1707, %v1709
        %v1711 = vrot.slane %v1703, %v1710
        %v1713 = vunpack.c.l.s4 1983009808
        %v1714 = vunpack.c.0.s8 %v1713
        %v1715 = vlaneseq
        %v1716 = vshrl.u32 %v1715, 7
        %v1717 = vsub.s32 %v1714, %v1716
        %v1718 = vrot.slane %v1704, %v1717
        %v1719 = vcombine.low %v1663, %v1679
        %v1720 = vcombine.high %v1663, %v1679
        %v1722 = vunpack.c.l.s4 1934713408
        %v1723 = vunpack.c.0.s8 %v1722
        %v1724 = vlaneseq
        %v1725 = vshrl.u32 %v1724, 7
        %v1726 = vsub.s32 %v1723, %v1725
        %v1727 = vrot.slane %v1719, %v1726
        %v1729 = vunpack.c.l.s4 1934713408
        %v1730 = vunpack.c.0.s8 %v1729
        %v1731 = vlaneseq
        %v1732 = vshrl.u32 %v1731, 7
        %v1733 = vsub.s32 %v1730, %v1732
        %v1734 = vrot.slane %v1720, %v1733
        %v1735 = vcombine.low %v1670, %v1686
        %v1736 = vcombine.high %v1670, %v1686
        %v1738 = vunpack.c.l.s4 1934713408
        %v1739 = vunpack.c.0.s8 %v1738
        %v1740 = vlaneseq
        %v1741 = vshrl.u32 %v1740, 7
        %v1742 = vsub.s32 %v1739, %v1741
        %v1743 = vrot.slane %v1735, %v1742
        %v1745 = vunpack.c.l.s4 1934713408
        %v1746 = vunpack.c.0.s8 %v1745
        %v1747 = vlaneseq
        %v1748 = vshrl.u32 %v1747, 7
        %v1749 = vsub.s32 %v1746, %v1748
        %v1750 = vrot.slane %v1736, %v1749
        %v1751 = vcombine.low %v1695, %v1711
        %v1752 = vcombine.high %v1695, %v1711
        %v1754 = vunpack.c.l.s4 1934713408
        %v1755 = vunpack.c.0.s8 %v1754
        %v1756 = vlaneseq
        %v1757 = vshrl.u32 %v1756, 7
        %v1758 = vsub.s32 %v1755, %v1757
        %v1759 = vrot.slane %v1751, %v1758
        %v1761 = vunpack.c.l.s4 1934713408
        %v1762 = vunpack.c.0.s8 %v1761
        %v1763 = vlaneseq
        %v1764 = vshrl.u32 %v1763, 7
        %v1765 = vsub.s32 %v1762, %v1764
        %v1766 = vrot.slane %v1752, %v1765
        %v1767 = vcombine.low %v1702, %v1718
        %v1768 = vcombine.high %v1702, %v1718
        %v1770 = vunpack.c.l.s4 1934713408
        %v1771 = vunpack.c.0.s8 %v1770
        %v1772 = vlaneseq
        %v1773 = vshrl.u32 %v1772, 7
        %v1774 = vsub.s32 %v1771, %v1773
        %v1775 = vrot.slane %v1767, %v1774
        %v1777 = vunpack.c.l.s4 1934713408
        %v1778 = vunpack.c.0.s8 %v1777
        %v1779 = vlaneseq
        %v1780 = vshrl.u32 %v1779, 7
        %v1781 = vsub.s32 %v1778, %v1780
        %v1782 = vrot.slane %v1768, %v1781
        %v1783 = vcombine.low %v1727, %v1759
        %v1784 = vcombine.high %v1727, %v1759
        %v1785 = vcombine.low %v1734, %v1766
        %v1786 = vcombine.high %v1734, %v1766
        %v1787 = vcombine.low %v1743, %v1775
        %v1788 = vcombine.high %v1743, %v1775
        %v1789 = vcombine.low %v1750, %v1782
        %v1790 = vcombine.high %v1750, %v1782
        %v1791 = vcombine.low %v1215, %v1219
        %v1792 = vcombine.high %v1215, %v1219
        %v1794 = vunpack.c.l.s4 1983009808
        %v1795 = vunpack.c.0.s8 %v1794
        %v1796 = vlaneseq
        %v1797 = vshrl.u32 %v1796, 7
        %v1798 = vsub.s32 %v1795, %v1797
        %v1799 = vrot.slane %v1791, %v1798
        %v1801 = vunpack.c.l.s4 1983009808
        %v1802 = vunpack.c.0.s8 %v1801
        %v1803 = vlaneseq
        %v1804 = vshrl.u32 %v1803, 7
        %v1805 = vsub.s32 %v1802, %v1804
        %v1806 = vrot.slane %v1792, %v1805
        %v1807 = vcombine.low %v1217, %v1221
        %v1808 = vcombine.high %v1217, %v1221
        %v1810 = vunpack.c.l.s4 1983009808
        %v1811 = vunpack.c.0.s8 %v1810
        %v1812 = vlaneseq
        %v1813 = vshrl.u32 %v1812, 7
        %v1814 = vsub.s32 %v1811, %v1813
        %v1815 = vrot.slane %v1807, %v1814
        %v1817 = vunpack.c.l.s4 1983009808
        %v1818 = vunpack.c.0.s8 %v1817
        %v1819 = vlaneseq
        %v1820 = vshrl.u32 %v1819, 7
        %v1821 = vsub.s32 %v1818, %v1820
        %v1822 = vrot.slane %v1808, %v1821
        %v1823 = vcombine.low %v1223, %v1227
        %v1824 = vcombine.high %v1223, %v1227
        %v1826 = vunpack.c.l.s4 1983009808
        %v1827 = vunpack.c.0.s8 %v1826
        %v1828 = vlaneseq
        %v1829 = vshrl.u32 %v1828, 7
        %v1830 = vsub.s32 %v1827, %v1829
        %v1831 = vrot.slane %v1823, %v1830
        %v1833 = vunpack.c.l.s4 1983009808
        %v1834 = vunpack.c.0.s8 %v1833
        %v1835 = vlaneseq
        %v1836 = vshrl.u32 %v1835, 7
        %v1837 = vsub.s32 %v1834, %v1836
        %v1838 = vrot.slane %v1824, %v1837
        %v1839 = vcombine.low %v1225, %v1229
        %v1840 = vcombine.high %v1225, %v1229
        %v1842 = vunpack.c.l.s4 1983009808
        %v1843 = vunpack.c.0.s8 %v1842
        %v1844 = vlaneseq
        %v1845 = vshrl.u32 %v1844, 7
        %v1846 = vsub.s32 %v1843, %v1845
        %v1847 = vrot.slane %v1839, %v1846
        %v1849 = vunpack.c.l.s4 1983009808
        %v1850 = vunpack.c.0.s8 %v1849
        %v1851 = vlaneseq
        %v1852 = vshrl.u32 %v1851, 7
        %v1853 = vsub.s32 %v1850, %v1852
        %v1854 = vrot.slane %v1840, %v1853
        %v1855 = vcombine.low %v1799, %v1815
        %v1856 = vcombine.high %v1799, %v1815
        %v1858 = vunpack.c.l.s4 1934713408
        %v1859 = vunpack.c.0.s8 %v1858
        %v1860 = vlaneseq
        %v1861 = vshrl.u32 %v1860, 7
        %v1862 = vsub.s32 %v1859, %v1861
        %v1863 = vrot.slane %v1855, %v1862
        %v1865 = vunpack.c.l.s4 1934713408
        %v1866 = vunpack.c.0.s8 %v1865
        %v1867 = vlaneseq
        %v1868 = vshrl.u32 %v1867, 7
        %v1869 = vsub.s32 %v1866, %v1868
        %v1870 = vrot.slane %v1856, %v1869
        %v1871 = vcombine.low %v1806, %v1822
        %v1872 = vcombine.high %v1806, %v1822
        %v1874 = vunpack.c.l.s4 1934713408
        %v1875 = vunpack.c.0.s8 %v1874
        %v1876 = vlaneseq
        %v1877 = vshrl.u32 %v1876, 7
        %v1878 = vsub.s32 %v1875, %v1877
        %v1879 = vrot.slane %v1871, %v1878
        %v1881 = vunpack.c.l.s4 1934713408
        %v1882 = vunpack.c.0.s8 %v1881
        %v1883 = vlaneseq
        %v1884 = vshrl.u32 %v1883, 7
        %v1885 = vsub.s32 %v1882, %v1884
        %v1886 = vrot.slane %v1872, %v1885
        %v1887 = vcombine.low %v1831, %v1847
        %v1888 = vcombine.high %v1831, %v1847
        %v1890 = vunpack.c.l.s4 1934713408
        %v1891 = vunpack.c.0.s8 %v1890
        %v1892 = vlaneseq
        %v1893 = vshrl.u32 %v1892, 7
        %v1894 = vsub.s32 %v1891, %v1893
        %v1895 = vrot.slane %v1887, %v1894
        %v1897 = vunpack.c.l.s4 1934713408
        %v1898 = vunpack.c.0.s8 %v1897
        %v1899 = vlaneseq
        %v1900 = vshrl.u32 %v1899, 7
        %v1901 = vsub.s32 %v1898, %v1900
        %v1902 = vrot.slane %v1888, %v1901
        %v1903 = vcombine.low %v1838, %v1854
        %v1904 = vcombine.high %v1838, %v1854
        %v1906 = vunpack.c.l.s4 1934713408
        %v1907 = vunpack.c.0.s8 %v1906
        %v1908 = vlaneseq
        %v1909 = vshrl.u32 %v1908, 7
        %v1910 = vsub.s32 %v1907, %v1909
        %v1911 = vrot.slane %v1903, %v1910
        %v1913 = vunpack.c.l.s4 1934713408
        %v1914 = vunpack.c.0.s8 %v1913
        %v1915 = vlaneseq
        %v1916 = vshrl.u32 %v1915, 7
        %v1917 = vsub.s32 %v1914, %v1916
        %v1918 = vrot.slane %v1904, %v1917
        %v1919 = vcombine.low %v1863, %v1895
        %v1920 = vcombine.high %v1863, %v1895
        %v1921 = vcombine.low %v1870, %v1902
        %v1922 = vcombine.high %v1870, %v1902
        %v1923 = vcombine.low %v1879, %v1911
        %v1924 = vcombine.high %v1879, %v1911
        %v1925 = vcombine.low %v1886, %v1918
        %v1926 = vcombine.high %v1886, %v1918
        %v1927 = vcombine.low %v1231, %v1235
        %v1928 = vcombine.high %v1231, %v1235
        %v1930 = vunpack.c.l.s4 1983009808
        %v1931 = vunpack.c.0.s8 %v1930
        %v1932 = vlaneseq
        %v1933 = vshrl.u32 %v1932, 7
        %v1934 = vsub.s32 %v1931, %v1933
        %v1935 = vrot.slane %v1927, %v1934
        %v1937 = vunpack.c.l.s4 1983009808
        %v1938 = vunpack.c.0.s8 %v1937
        %v1939 = vlaneseq
        %v1940 = vshrl.u32 %v1939, 7
        %v1941 = vsub.s32 %v1938, %v1940
        %v1942 = vrot.slane %v1928, %v1941
        %v1943 = vcombine.low %v1233, %v1237
        %v1944 = vcombine.high %v1233, %v1237
        %v1946 = vunpack.c.l.s4 1983009808
        %v1947 = vunpack.c.0.s8 %v1946
        %v1948 = vlaneseq
        %v1949 = vshrl.u32 %v1948, 7
        %v1950 = vsub.s32 %v1947, %v1949
        %v1951 = vrot.slane %v1943, %v1950
        %v1953 = vunpack.c.l.s4 1983009808
        %v1954 = vunpack.c.0.s8 %v1953
        %v1955 = vlaneseq
        %v1956 = vshrl.u32 %v1955, 7
        %v1957 = vsub.s32 %v1954, %v1956
        %v1958 = vrot.slane %v1944, %v1957
        %v1959 = vcombine.low %v1239, %v1243
        %v1960 = vcombine.high %v1239, %v1243
        %v1962 = vunpack.c.l.s4 1983009808
        %v1963 = vunpack.c.0.s8 %v1962
        %v1964 = vlaneseq
        %v1965 = vshrl.u32 %v1964, 7
        %v1966 = vsub.s32 %v1963, %v1965
        %v1967 = vrot.slane %v1959, %v1966
        %v1969 = vunpack.c.l.s4 1983009808
        %v1970 = vunpack.c.0.s8 %v1969
        %v1971 = vlaneseq
        %v1972 = vshrl.u32 %v1971, 7
        %v1973 = vsub.s32 %v1970, %v1972
        %v1974 = vrot.slane %v1960, %v1973
        %v1975 = vcombine.low %v1241, %v1245
        %v1976 = vcombine.high %v1241, %v1245
        %v1978 = vunpack.c.l.s4 1983009808
        %v1979 = vunpack.c.0.s8 %v1978
        %v1980 = vlaneseq
        %v1981 = vshrl.u32 %v1980, 7
        %v1982 = vsub.s32 %v1979, %v1981
        %v1983 = vrot.slane %v1975, %v1982
        %v1985 = vunpack.c.l.s4 1983009808
        %v1986 = vunpack.c.0.s8 %v1985
        %v1987 = vlaneseq
        %v1988 = vshrl.u32 %v1987, 7
        %v1989 = vsub.s32 %v1986, %v1988
        %v1990 = vrot.slane %v1976, %v1989
        %v1991 = vcombine.low %v1935, %v1951
        %v1992 = vcombine.high %v1935, %v1951
        %v1994 = vunpack.c.l.s4 1934713408
        %v1995 = vunpack.c.0.s8 %v1994
        %v1996 = vlaneseq
        %v1997 = vshrl.u32 %v1996, 7
        %v1998 = vsub.s32 %v1995, %v1997
        %v1999 = vrot.slane %v1991, %v1998
        %v2001 = vunpack.c.l.s4 1934713408
        %v2002 = vunpack.c.0.s8 %v2001
        %v2003 = vlaneseq
        %v2004 = vshrl.u32 %v2003, 7
        %v2005 = vsub.s32 %v2002, %v2004
        %v2006 = vrot.slane %v1992, %v2005
        %v2007 = vcombine.low %v1942, %v1958
        %v2008 = vcombine.high %v1942, %v1958
        %v2010 = vunpack.c.l.s4 1934713408
        %v2011 = vunpack.c.0.s8 %v2010
        %v2012 = vlaneseq
        %v2013 = vshrl.u32 %v2012, 7
        %v2014 = vsub.s32 %v2011, %v2013
        %v2015 = vrot.slane %v2007, %v2014
        %v2017 = vunpack.c.l.s4 1934713408
        %v2018 = vunpack.c.0.s8 %v2017
        %v2019 = vlaneseq
        %v2020 = vshrl.u32 %v2019, 7
        %v2021 = vsub.s32 %v2018, %v2020
        %v2022 = vrot.slane %v2008, %v2021
        %v2023 = vcombine.low %v1967, %v1983
        %v2024 = vcombine.high %v1967, %v1983
        %v2026 = vunpack.c.l.s4 1934713408
        %v2027 = vunpack.c.0.s8 %v2026
        %v2028 = vlaneseq
        %v2029 = vshrl.u32 %v2028, 7
        %v2030 = vsub.s32 %v2027, %v2029
        %v2031 = vrot.slane %v2023, %v2030
        %v2033 = vunpack.c.l.s4 1934713408
        %v2034 = vunpack.c.0.s8 %v2033
        %v2035 = vlaneseq
        %v2036 = vshrl.u32 %v2035, 7
        %v2037 = vsub.s32 %v2034, %v2036
        %v2038 = vrot.slane %v2024, %v2037
        %v2039 = vcombine.low %v1974, %v1990
        %v2040 = vcombine.high %v1974, %v1990
        %v2042 = vunpack.c.l.s4 1934713408
        %v2043 = vunpack.c.0.s8 %v2042
        %v2044 = vlaneseq
        %v2045 = vshrl.u32 %v2044, 7
        %v2046 = vsub.s32 %v2043, %v2045
        %v2047 = vrot.slane %v2039, %v2046
        %v2049 = vunpack.c.l.s4 1934713408
        %v2050 = vunpack.c.0.s8 %v2049
        %v2051 = vlaneseq
        %v2052 = vshrl.u32 %v2051, 7
        %v2053 = vsub.s32 %v2050, %v2052
        %v2054 = vrot.slane %v2040, %v2053
        %v2055 = vcombine.low %v1999, %v2031
        %v2056 = vcombine.high %v1999, %v2031
        %v2057 = vcombine.low %v2006, %v2038
        %v2058 = vcombine.high %v2006, %v2038
        %v2059 = vcombine.low %v2015, %v2047
        %v2060 = vcombine.high %v2015, %v2047
        %v2061 = vcombine.low %v2022, %v2054
        %v2062 = vcombine.high %v2022, %v2054
        %v2063 = vcombine.low %v1216, %v1220
        %v2064 = vcombine.high %v1216, %v1220
        %v2066 = vunpack.c.l.s4 1983009808
        %v2067 = vunpack.c.0.s8 %v2066
        %v2068 = vlaneseq
        %v2069 = vshrl.u32 %v2068, 7
        %v2070 = vsub.s32 %v2067, %v2069
        %v2071 = vrot.slane %v2063, %v2070
        %v2073 = vunpack.c.l.s4 1983009808
        %v2074 = vunpack.c.0.s8 %v2073
        %v2075 = vlaneseq
        %v2076 = vshrl.u32 %v2075, 7
        %v2077 = vsub.s32 %v2074, %v2076
        %v2078 = vrot.slane %v2064, %v2077
        %v2079 = vcombine.low %v1218, %v1222
        %v2080 = vcombine.high %v1218, %v1222
        %v2082 = vunpack.c.l.s4 1983009808
        %v2083 = vunpack.c.0.s8 %v2082
        %v2084 = vlaneseq
        %v2085 = vshrl.u32 %v2084, 7
        %v2086 = vsub.s32 %v2083, %v2085
        %v2087 = vrot.slane %v2079, %v2086
        %v2089 = vunpack.c.l.s4 1983009808
        %v2090 = vunpack.c.0.s8 %v2089
        %v2091 = vlaneseq
        %v2092 = vshrl.u32 %v2091, 7
        %v2093 = vsub.s32 %v2090, %v2092
        %v2094 = vrot.slane %v2080, %v2093
        %v2095 = vcombine.low %v1224, %v1228
        %v2096 = vcombine.high %v1224, %v1228
        %v2098 = vunpack.c.l.s4 1983009808
        %v2099 = vunpack.c.0.s8 %v2098
        %v2100 = vlaneseq
        %v2101 = vshrl.u32 %v2100, 7
        %v2102 = vsub.s32 %v2099, %v2101
        %v2103 = vrot.slane %v2095, %v2102
        %v2105 = vunpack.c.l.s4 1983009808
        %v2106 = vunpack.c.0.s8 %v2105
        %v2107 = vlaneseq
        %v2108 = vshrl.u32 %v2107, 7
        %v2109 = vsub.s32 %v2106, %v2108
        %v2110 = vrot.slane %v2096, %v2109
        %v2111 = vcombine.low %v1226, %v1230
        %v2112 = vcombine.high %v1226, %v1230
        %v2114 = vunpack.c.l.s4 1983009808
        %v2115 = vunpack.c.0.s8 %v2114
        %v2116 = vlaneseq
        %v2117 = vshrl.u32 %v2116, 7
        %v2118 = vsub.s32 %v2115, %v2117
        %v2119 = vrot.slane %v2111, %v2118
        %v2121 = vunpack.c.l.s4 1983009808
        %v2122 = vunpack.c.0.s8 %v2121
        %v2123 = vlaneseq
        %v2124 = vshrl.u32 %v2123, 7
        %v2125 = vsub.s32 %v2122, %v2124
        %v2126 = vrot.slane %v2112, %v2125
        %v2127 = vcombine.low %v2071, %v2087
        %v2128 = vcombine.high %v2071, %v2087
        %v2130 = vunpack.c.l.s4 1934713408
        %v2131 = vunpack.c.0.s8 %v2130
        %v2132 = vlaneseq
        %v2133 = vshrl.u32 %v2132, 7
        %v2134 = vsub.s32 %v2131, %v2133
        %v2135 = vrot.slane %v2127, %v2134
        %v2137 = vunpack.c.l.s4 1934713408
        %v2138 = vunpack.c.0.s8 %v2137
        %v2139 = vlaneseq
        %v2140 = vshrl.u32 %v2139, 7
        %v2141 = vsub.s32 %v2138, %v2140
        %v2142 = vrot.slane %v2128, %v2141
        %v2143 = vcombine.low %v2078, %v2094
        %v2144 = vcombine.high %v2078, %v2094
        %v2146 = vunpack.c.l.s4 1934713408
        %v2147 = vunpack.c.0.s8 %v2146
        %v2148 = vlaneseq
        %v2149 = vshrl.u32 %v2148, 7
        %v2150 = vsub.s32 %v2147, %v2149
        %v2151 = vrot.slane %v2143, %v2150
        %v2153 = vunpack.c.l.s4 1934713408
        %v2154 = vunpack.c.0.s8 %v2153
        %v2155 = vlaneseq
        %v2156 = vshrl.u32 %v2155, 7
        %v2157 = vsub.s32 %v2154, %v2156
        %v2158 = vrot.slane %v2144, %v2157
        %v2159 = vcombine.low %v2103, %v2119
        %v2160 = vcombine.high %v2103, %v2119
        %v2162 = vunpack.c.l.s4 1934713408
        %v2163 = vunpack.c.0.s8 %v2162
        %v2164 = vlaneseq
        %v2165 = vshrl.u32 %v2164, 7
        %v2166 = vsub.s32 %v2163, %v2165
        %v2167 = vrot.slane %v2159, %v2166
        %v2169 = vunpack.c.l.s4 1934713408
        %v2170 = vunpack.c.0.s8 %v2169
        %v2171 = vlaneseq
        %v2172 = vshrl.u32 %v2171, 7
        %v2173 = vsub.s32 %v2170, %v2172
        %v2174 = vrot.slane %v2160, %v2173
        %v2175 = vcombine.low %v2110, %v2126
        %v2176 = vcombine.high %v2110, %v2126
        %v2178 = vunpack.c.l.s4 1934713408
        %v2179 = vunpack.c.0.s8 %v2178
        %v2180 = vlaneseq
        %v2181 = vshrl.u32 %v2180, 7
        %v2182 = vsub.s32 %v2179, %v2181
        %v2183 = vrot.slane %v2175, %v2182
        %v2185 = vunpack.c.l.s4 1934713408
        %v2186 = vunpack.c.0.s8 %v2185
        %v2187 = vlaneseq
        %v2188 = vshrl.u32 %v2187, 7
        %v2189 = vsub.s32 %v2186, %v2188
        %v2190 = vrot.slane %v2176, %v2189
        %v2191 = vcombine.low %v2135, %v2167
        %v2192 = vcombine.high %v2135, %v2167
        %v2193 = vcombine.low %v2142, %v2174
        %v2194 = vcombine.high %v2142, %v2174
        %v2195 = vcombine.low %v2151, %v2183
        %v2196 = vcombine.high %v2151, %v2183
        %v2197 = vcombine.low %v2158, %v2190
        %v2198 = vcombine.high %v2158, %v2190
        %v2199 = vcombine.low %v1232, %v1236
        %v2200 = vcombine.high %v1232, %v1236
        %v2202 = vunpack.c.l.s4 1983009808
        %v2203 = vunpack.c.0.s8 %v2202
        %v2204 = vlaneseq
        %v2205 = vshrl.u32 %v2204, 7
        %v2206 = vsub.s32 %v2203, %v2205
        %v2207 = vrot.slane %v2199, %v2206
        %v2209 = vunpack.c.l.s4 1983009808
        %v2210 = vunpack.c.0.s8 %v2209
        %v2211 = vlaneseq
        %v2212 = vshrl.u32 %v2211, 7
        %v2213 = vsub.s32 %v2210, %v2212
        %v2214 = vrot.slane %v2200, %v2213
        %v2215 = vcombine.low %v1234, %v1238
        %v2216 = vcombine.high %v1234, %v1238
        %v2218 = vunpack.c.l.s4 1983009808
        %v2219 = vunpack.c.0.s8 %v2218
        %v2220 = vlaneseq
        %v2221 = vshrl.u32 %v2220, 7
        %v2222 = vsub.s32 %v2219, %v2221
        %v2223 = vrot.slane %v2215, %v2222
        %v2225 = vunpack.c.l.s4 1983009808
        %v2226 = vunpack.c.0.s8 %v2225
        %v2227 = vlaneseq
        %v2228 = vshrl.u32 %v2227, 7
        %v2229 = vsub.s32 %v2226, %v2228
        %v2230 = vrot.slane %v2216, %v2229
        %v2231 = vcombine.low %v1240, %v1244
        %v2232 = vcombine.high %v1240, %v1244
        %v2234 = vunpack.c.l.s4 1983009808
        %v2235 = vunpack.c.0.s8 %v2234
        %v2236 = vlaneseq
        %v2237 = vshrl.u32 %v2236, 7
        %v2238 = vsub.s32 %v2235, %v2237
        %v2239 = vrot.slane %v2231, %v2238
        %v2241 = vunpack.c.l.s4 1983009808
        %v2242 = vunpack.c.0.s8 %v2241
        %v2243 = vlaneseq
        %v2244 = vshrl.u32 %v2243, 7
        %v2245 = vsub.s32 %v2242, %v2244
        %v2246 = vrot.slane %v2232, %v2245
        %v2247 = vcombine.low %v1242, %v1246
        %v2248 = vcombine.high %v1242, %v1246
        %v2250 = vunpack.c.l.s4 1983009808
        %v2251 = vunpack.c.0.s8 %v2250
        %v2252 = vlaneseq
        %v2253 = vshrl.u32 %v2252, 7
        %v2254 = vsub.s32 %v2251, %v2253
        %v2255 = vrot.slane %v2247, %v2254
        %v2257 = vunpack.c.l.s4 1983009808
        %v2258 = vunpack.c.0.s8 %v2257
        %v2259 = vlaneseq
        %v2260 = vshrl.u32 %v2259, 7
        %v2261 = vsub.s32 %v2258, %v2260
        %v2262 = vrot.slane %v2248, %v2261
        %v2263 = vcombine.low %v2207, %v2223
        %v2264 = vcombine.high %v2207, %v2223
        %v2266 = vunpack.c.l.s4 1934713408
        %v2267 = vunpack.c.0.s8 %v2266
        %v2268 = vlaneseq
        %v2269 = vshrl.u32 %v2268, 7
        %v2270 = vsub.s32 %v2267, %v2269
        %v2271 = vrot.slane %v2263, %v2270
        %v2273 = vunpack.c.l.s4 1934713408
        %v2274 = vunpack.c.0.s8 %v2273
        %v2275 = vlaneseq
        %v2276 = vshrl.u32 %v2275, 7
        %v2277 = vsub.s32 %v2274, %v2276
        %v2278 = vrot.slane %v2264, %v2277
        %v2279 = vcombine.low %v2214, %v2230
        %v2280 = vcombine.high %v2214, %v2230
        %v2282 = vunpack.c.l.s4 1934713408
        %v2283 = vunpack.c.0.s8 %v2282
        %v2284 = vlaneseq
        %v2285 = vshrl.u32 %v2284, 7
        %v2286 = vsub.s32 %v2283, %v2285
        %v2287 = vrot.slane %v2279, %v2286
        %v2289 = vunpack.c.l.s4 1934713408
        %v2290 = vunpack.c.0.s8 %v2289
        %v2291 = vlaneseq
        %v2292 = vshrl.u32 %v2291, 7
        %v2293 = vsub.s32 %v2290, %v2292
        %v2294 = vrot.slane %v2280, %v2293
        %v2295 = vcombine.low %v2239, %v2255
        %v2296 = vcombine.high %v2239, %v2255
        %v2298 = vunpack.c.l.s4 1934713408
        %v2299 = vunpack.c.0.s8 %v2298
        %v2300 = vlaneseq
        %v2301 = vshrl.u32 %v2300, 7
        %v2302 = vsub.s32 %v2299, %v2301
        %v2303 = vrot.slane %v2295, %v2302
        %v2305 = vunpack.c.l.s4 1934713408
        %v2306 = vunpack.c.0.s8 %v2305
        %v2307 = vlaneseq
        %v2308 = vshrl.u32 %v2307, 7
        %v2309 = vsub.s32 %v2306, %v2308
        %v2310 = vrot.slane %v2296, %v2309
        %v2311 = vcombine.low %v2246, %v2262
        %v2312 = vcombine.high %v2246, %v2262
        %v2314 = vunpack.c.l.s4 1934713408
        %v2315 = vunpack.c.0.s8 %v2314
        %v2316 = vlaneseq
        %v2317 = vshrl.u32 %v2316, 7
        %v2318 = vsub.s32 %v2315, %v2317
        %v2319 = vrot.slane %v2311, %v2318
        %v2321 = vunpack.c.l.s4 1934713408
        %v2322 = vunpack.c.0.s8 %v2321
        %v2323 = vlaneseq
        %v2324 = vshrl.u32 %v2323, 7
        %v2325 = vsub.s32 %v2322, %v2324
        %v2326 = vrot.slane %v2312, %v2325
        %v2327 = vcombine.low %v2271, %v2303
        %v2328 = vcombine.high %v2271, %v2303
        %v2329 = vcombine.low %v2278, %v2310
        %v2330 = vcombine.high %v2278, %v2310
        %v2331 = vcombine.low %v2287, %v2319
        %v2332 = vcombine.high %v2287, %v2319
        %v2333 = vcombine.low %v2294, %v2326
        %v2334 = vcombine.high %v2294, %v2326
        %2339 = vrot.lane.b32.xlu0 %v1376, 2
        %v2340 = vpop.permute.xlu0 %2339
        %2341 = vrot.lane.b32.xlu0 %v1512, 2
        %v2342 = vpop.permute.xlu0 %2341
        %2343 = vrot.lane.b32.xlu0 %v1920, 2
        %v2344 = vpop.permute.xlu0 %2343
        %2345 = vrot.lane.b32.xlu0 %v2056, 2
        %v2346 = vpop.permute.xlu0 %2345
        %2355 = vrot.lane.b32.xlu0 %v1377, 4
        %v2356 = vpop.permute.xlu0 %2355
        %2357 = vrot.lane.b32.xlu0 %v1513, 4
        %v2358 = vpop.permute.xlu0 %2357
        %2359 = vrot.lane.b32.xlu0 %v1921, 4
        %v2360 = vpop.permute.xlu0 %2359
        %2361 = vrot.lane.b32.xlu0 %v2057, 4
        %v2362 = vpop.permute.xlu0 %2361
        %2371 = vrot.lane.b32.xlu0 %v1378, 6
        %v2372 = vpop.permute.xlu0 %2371
        %2373 = vrot.lane.b32.xlu0 %v1514, 6
        %v2374 = vpop.permute.xlu0 %2373
        %2375 = vrot.lane.b32.xlu0 %v1922, 6
        %v2376 = vpop.permute.xlu0 %2375
        %2377 = vrot.lane.b32.xlu0 %v2058, 6
        %v2378 = vpop.permute.xlu0 %2377
        %2387 = vrot.lane.b32.xlu0 %v1379, 8
        %v2388 = vpop.permute.xlu0 %2387
        %2389 = vrot.lane.b32.xlu0 %v1515, 8
        %v2390 = vpop.permute.xlu0 %2389
        %2391 = vrot.lane.b32.xlu0 %v1923, 8
        %v2392 = vpop.permute.xlu0 %2391
        %2393 = vrot.lane.b32.xlu0 %v2059, 8
        %v2394 = vpop.permute.xlu0 %2393
        %2403 = vrot.lane.b32.xlu0 %v1380, 10
        %v2404 = vpop.permute.xlu0 %2403
        %2405 = vrot.lane.b32.xlu0 %v1516, 10
        %v2406 = vpop.permute.xlu0 %2405
        %2407 = vrot.lane.b32.xlu0 %v1924, 10
        %v2408 = vpop.permute.xlu0 %2407
        %2409 = vrot.lane.b32.xlu0 %v2060, 10
        %v2410 = vpop.permute.xlu0 %2409
        %2419 = vrot.lane.b32.xlu0 %v1381, 12
        %v2420 = vpop.permute.xlu0 %2419
        %2421 = vrot.lane.b32.xlu0 %v1517, 12
        %v2422 = vpop.permute.xlu0 %2421
        %2423 = vrot.lane.b32.xlu0 %v1925, 12
        %v2424 = vpop.permute.xlu0 %2423
        %2425 = vrot.lane.b32.xlu0 %v2061, 12
        %v2426 = vpop.permute.xlu0 %2425
        %2435 = vrot.lane.b32.xlu0 %v1382, 14
        %v2436 = vpop.permute.xlu0 %2435
        %2437 = vrot.lane.b32.xlu0 %v1518, 14
        %v2438 = vpop.permute.xlu0 %2437
        %2439 = vrot.lane.b32.xlu0 %v1926, 14
        %v2440 = vpop.permute.xlu0 %2439
        %2441 = vrot.lane.b32.xlu0 %v2062, 14
        %v2442 = vpop.permute.xlu0 %2441
        %2451 = vrot.lane.b32.xlu0 %v1647, 16
        %v2452 = vpop.permute.xlu0 %2451
        %2453 = vrot.lane.b32.xlu0 %v1783, 16
        %v2454 = vpop.permute.xlu0 %2453
        %2455 = vrot.lane.b32.xlu0 %v2191, 16
        %v2456 = vpop.permute.xlu0 %2455
        %2457 = vrot.lane.b32.xlu0 %v2327, 16
        %v2458 = vpop.permute.xlu0 %2457
        %2467 = vrot.lane.b32.xlu0 %v1648, 18
        %v2468 = vpop.permute.xlu0 %2467
        %2469 = vrot.lane.b32.xlu0 %v1784, 18
        %v2470 = vpop.permute.xlu0 %2469
        %2471 = vrot.lane.b32.xlu0 %v2192, 18
        %v2472 = vpop.permute.xlu0 %2471
        %2473 = vrot.lane.b32.xlu0 %v2328, 18
        %v2474 = vpop.permute.xlu0 %2473
        %2483 = vrot.lane.b32.xlu0 %v1649, 20
        %v2484 = vpop.permute.xlu0 %2483
        %2485 = vrot.lane.b32.xlu0 %v1785, 20
        %v2486 = vpop.permute.xlu0 %2485
        %2487 = vrot.lane.b32.xlu0 %v2193, 20
        %v2488 = vpop.permute.xlu0 %2487
        %2489 = vrot.lane.b32.xlu0 %v2329, 20
        %v2490 = vpop.permute.xlu0 %2489
        %2499 = vrot.lane.b32.xlu0 %v1650, 22
        %v2500 = vpop.permute.xlu0 %2499
        %2501 = vrot.lane.b32.xlu0 %v1786, 22
        %v2502 = vpop.permute.xlu0 %2501
        %2503 = vrot.lane.b32.xlu0 %v2194, 22
        %v2504 = vpop.permute.xlu0 %2503
        %2505 = vrot.lane.b32.xlu0 %v2330, 22
        %v2506 = vpop.permute.xlu0 %2505
        %2515 = vrot.lane.b32.xlu0 %v1651, 24
        %v2516 = vpop.permute.xlu0 %2515
        %2517 = vrot.lane.b32.xlu0 %v1787, 24
        %v2518 = vpop.permute.xlu0 %2517
        %2519 = vrot.lane.b32.xlu0 %v2195, 24
        %v2520 = vpop.permute.xlu0 %2519
        %2521 = vrot.lane.b32.xlu0 %v2331, 24
        %v2522 = vpop.permute.xlu0 %2521
        %2531 = vrot.lane.b32.xlu0 %v1652, 26
        %v2532 = vpop.permute.xlu0 %2531
        %2533 = vrot.lane.b32.xlu0 %v1788, 26
        %v2534 = vpop.permute.xlu0 %2533
        %2535 = vrot.lane.b32.xlu0 %v2196, 26
        %v2536 = vpop.permute.xlu0 %2535
        %2537 = vrot.lane.b32.xlu0 %v2332, 26
        %v2538 = vpop.permute.xlu0 %2537
        %2547 = vrot.lane.b32.xlu0 %v1653, 28
        %v2548 = vpop.permute.xlu0 %2547
        %2549 = vrot.lane.b32.xlu0 %v1789, 28
        %v2550 = vpop.permute.xlu0 %2549
        %2551 = vrot.lane.b32.xlu0 %v2197, 28
        %v2552 = vpop.permute.xlu0 %2551
        %2553 = vrot.lane.b32.xlu0 %v2333, 28
        %v2554 = vpop.permute.xlu0 %2553
        %2563 = vrot.lane.b32.xlu0 %v1654, 30
        %v2564 = vpop.permute.xlu0 %2563
        %2565 = vrot.lane.b32.xlu0 %v1790, 30
        %v2566 = vpop.permute.xlu0 %2565
        %2567 = vrot.lane.b32.xlu0 %v2198, 30
        %v2568 = vpop.permute.xlu0 %2567
        %2569 = vrot.lane.b32.xlu0 %v2334, 30
        %v2570 = vpop.permute.xlu0 %2569
        %vm2575 = vcmask 15360
        %v2576 = vsel %vm2575, %v1375, %v2340
        %v2577 = vsel %vm2575, %v1511, %v2342
        %v2578 = vsel %vm2575, %v1919, %v2344
        %v2579 = vsel %vm2575, %v2055, %v2346
        %vm2580 = vcmask 31744
        %v2581 = vsel %vm2580, %v2576, %v2356
        %v2582 = vsel %vm2580, %v2577, %v2358
        %v2583 = vsel %vm2580, %v2578, %v2360
        %v2584 = vsel %vm2580, %v2579, %v2362
        %vm2585 = vcmask 48128
        %v2586 = vsel %vm2585, %v2581, %v2372
        %v2587 = vsel %vm2585, %v2582, %v2374
        %v2588 = vsel %vm2585, %v2583, %v2376
        %v2589 = vsel %vm2585, %v2584, %v2378
        %vm2590 = vcmask 64512
        %v2591 = vsel %vm2590, %v2586, %v2388
        %v2592 = vsel %vm2590, %v2587, %v2390
        %v2593 = vsel %vm2590, %v2588, %v2392
        %v2594 = vsel %vm2590, %v2589, %v2394
        %vm2595 = vcmask 80896
        %v2596 = vsel %vm2595, %v2591, %v2404
        %v2597 = vsel %vm2595, %v2592, %v2406
        %v2598 = vsel %vm2595, %v2593, %v2408
        %v2599 = vsel %vm2595, %v2594, %v2410
        %vm2600 = vcmask 97280
        %v2601 = vsel %vm2600, %v2596, %v2420
        %v2602 = vsel %vm2600, %v2597, %v2422
        %v2603 = vsel %vm2600, %v2598, %v2424
        %v2604 = vsel %vm2600, %v2599, %v2426
        %vm2605 = vcmask 113664
        %v2606 = vsel %vm2605, %v2601, %v2436
        %v2607 = vsel %vm2605, %v2602, %v2438
        %v2608 = vsel %vm2605, %v2603, %v2440
        %v2609 = vsel %vm2605, %v2604, %v2442
        %vm2610 = vcmask 130048
        %v2611 = vsel %vm2610, %v2606, %v2452
        %v2612 = vsel %vm2610, %v2607, %v2454
        %v2613 = vsel %vm2610, %v2608, %v2456
        %v2614 = vsel %vm2610, %v2609, %v2458
        %vm2615 = vcmask 146432
        %v2616 = vsel %vm2615, %v2611, %v2468
        %v2617 = vsel %vm2615, %v2612, %v2470
        %v2618 = vsel %vm2615, %v2613, %v2472
        %v2619 = vsel %vm2615, %v2614, %v2474
        %vm2620 = vcmask 162816
        %v2621 = vsel %vm2620, %v2616, %v2484
        %v2622 = vsel %vm2620, %v2617, %v2486
        %v2623 = vsel %vm2620, %v2618, %v2488
        %v2624 = vsel %vm2620, %v2619, %v2490
        %vm2625 = vcmask 179200
        %v2626 = vsel %vm2625, %v2621, %v2500
        %v2627 = vsel %vm2625, %v2622, %v2502
        %v2628 = vsel %vm2625, %v2623, %v2504
        %v2629 = vsel %vm2625, %v2624, %v2506
        %vm2630 = vcmask 195584
        %v2631 = vsel %vm2630, %v2626, %v2516
        %v2632 = vsel %vm2630, %v2627, %v2518
        %v2633 = vsel %vm2630, %v2628, %v2520
        %v2634 = vsel %vm2630, %v2629, %v2522
        %vm2635 = vcmask 211968
        %v2636 = vsel %vm2635, %v2631, %v2532
        %v2637 = vsel %vm2635, %v2632, %v2534
        %v2638 = vsel %vm2635, %v2633, %v2536
        %v2639 = vsel %vm2635, %v2634, %v2538
        %vm2640 = vcmask 228352
        %v2641 = vsel %vm2640, %v2636, %v2548
        %v2642 = vsel %vm2640, %v2637, %v2550
        %v2643 = vsel %vm2640, %v2638, %v2552
        %v2644 = vsel %vm2640, %v2639, %v2554
        %vm2645 = vcmask 244736
        %v2646 = vsel %vm2645, %v2641, %v2564
        %v2647 = vsel %vm2645, %v2642, %v2566
        %v2648 = vsel %vm2645, %v2643, %v2568
        %v2649 = vsel %vm2645, %v2644, %v2570
        %v2650 = vlaneseq
        %v2651 = vshrl.u32 %v2650, 7
        %v2652 = vsub.s32 0, %v2651
        %v2653 = vrot.slane %v466, %v2652
        %2655 = vbcast.lane.b32.xlu0 %v2653, 256
        %v2656 = vpop.permute.xlu0 %2655
        %s2658 = sor.u32 256, 8
        %2659 = vbcast.lane.b32.xlu0 %v2653, %s2658
        %v2660 = vpop.permute.xlu0 %2659
        %v2661 = vlaneseq
        %v2662 = vshrl.u32 %v2661, 7
        %v2663 = vsub.s32 1, %v2662
        %v2664 = vrot.slane %v466, %v2663
        %2666 = vbcast.lane.b32.xlu0 %v2664, 256
        %v2667 = vpop.permute.xlu0 %2666
        %s2669 = sor.u32 256, 8
        %2670 = vbcast.lane.b32.xlu0 %v2664, %s2669
        %v2671 = vpop.permute.xlu0 %2670
        %v2672 = vlaneseq
        %v2673 = vshrl.u32 %v2672, 7
        %v2674 = vsub.s32 2, %v2673
        %v2675 = vrot.slane %v466, %v2674
        %2677 = vbcast.lane.b32.xlu0 %v2675, 256
        %v2678 = vpop.permute.xlu0 %2677
        %s2680 = sor.u32 256, 8
        %2681 = vbcast.lane.b32.xlu0 %v2675, %s2680
        %v2682 = vpop.permute.xlu0 %2681
        %v2683 = vlaneseq
        %v2684 = vshrl.u32 %v2683, 7
        %v2685 = vsub.s32 3, %v2684
        %v2686 = vrot.slane %v466, %v2685
        %2688 = vbcast.lane.b32.xlu0 %v2686, 256
        %v2689 = vpop.permute.xlu0 %2688
        %s2691 = sor.u32 256, 8
        %2692 = vbcast.lane.b32.xlu0 %v2686, %s2691
        %v2693 = vpop.permute.xlu0 %2692
        %v2694 = vlaneseq
        %v2695 = vshrl.u32 %v2694, 7
        %v2696 = vsub.s32 4, %v2695
        %v2697 = vrot.slane %v466, %v2696
        %2699 = vbcast.lane.b32.xlu0 %v2697, 256
        %v2700 = vpop.permute.xlu0 %2699
        %s2702 = sor.u32 256, 8
        %2703 = vbcast.lane.b32.xlu0 %v2697, %s2702
        %v2704 = vpop.permute.xlu0 %2703
        %v2705 = vlaneseq
        %v2706 = vshrl.u32 %v2705, 7
        %v2707 = vsub.s32 5, %v2706
        %v2708 = vrot.slane %v466, %v2707
        %2710 = vbcast.lane.b32.xlu0 %v2708, 256
        %v2711 = vpop.permute.xlu0 %2710
        %s2713 = sor.u32 256, 8
        %2714 = vbcast.lane.b32.xlu0 %v2708, %s2713
        %v2715 = vpop.permute.xlu0 %2714
        %v2716 = vlaneseq
        %v2717 = vshrl.u32 %v2716, 7
        %v2718 = vsub.s32 6, %v2717
        %v2719 = vrot.slane %v466, %v2718
        %2721 = vbcast.lane.b32.xlu0 %v2719, 256
        %v2722 = vpop.permute.xlu0 %2721
        %s2724 = sor.u32 256, 8
        %2725 = vbcast.lane.b32.xlu0 %v2719, %s2724
        %v2726 = vpop.permute.xlu0 %2725
        %v2727 = vlaneseq
        %v2728 = vshrl.u32 %v2727, 7
        %v2729 = vsub.s32 7, %v2728
        %v2730 = vrot.slane %v466, %v2729
        %2732 = vbcast.lane.b32.xlu0 %v2730, 256
        %v2733 = vpop.permute.xlu0 %2732
        %s2735 = sor.u32 256, 8
        %2736 = vbcast.lane.b32.xlu0 %v2730, %s2735
        %v2737 = vpop.permute.xlu0 %2736
        %v2738 = vlaneseq
        %v2739 = vshrl.u32 %v2738, 7
        %v2740 = vsub.s32 0, %v2739
        %v2741 = vrot.slane %v467, %v2740
        %2743 = vbcast.lane.b32.xlu0 %v2741, 256
        %v2744 = vpop.permute.xlu0 %2743
        %s2746 = sor.u32 256, 8
        %2747 = vbcast.lane.b32.xlu0 %v2741, %s2746
        %v2748 = vpop.permute.xlu0 %2747
        %v2749 = vlaneseq
        %v2750 = vshrl.u32 %v2749, 7
        %v2751 = vsub.s32 1, %v2750
        %v2752 = vrot.slane %v467, %v2751
        %2754 = vbcast.lane.b32.xlu0 %v2752, 256
        %v2755 = vpop.permute.xlu0 %2754
        %s2757 = sor.u32 256, 8
        %2758 = vbcast.lane.b32.xlu0 %v2752, %s2757
        %v2759 = vpop.permute.xlu0 %2758
        %v2760 = vlaneseq
        %v2761 = vshrl.u32 %v2760, 7
        %v2762 = vsub.s32 2, %v2761
        %v2763 = vrot.slane %v467, %v2762
        %2765 = vbcast.lane.b32.xlu0 %v2763, 256
        %v2766 = vpop.permute.xlu0 %2765
        %s2768 = sor.u32 256, 8
        %2769 = vbcast.lane.b32.xlu0 %v2763, %s2768
        %v2770 = vpop.permute.xlu0 %2769
        %v2771 = vlaneseq
        %v2772 = vshrl.u32 %v2771, 7
        %v2773 = vsub.s32 3, %v2772
        %v2774 = vrot.slane %v467, %v2773
        %2776 = vbcast.lane.b32.xlu0 %v2774, 256
        %v2777 = vpop.permute.xlu0 %2776
        %s2779 = sor.u32 256, 8
        %2780 = vbcast.lane.b32.xlu0 %v2774, %s2779
        %v2781 = vpop.permute.xlu0 %2780
        %v2782 = vlaneseq
        %v2783 = vshrl.u32 %v2782, 7
        %v2784 = vsub.s32 4, %v2783
        %v2785 = vrot.slane %v467, %v2784
        %2787 = vbcast.lane.b32.xlu0 %v2785, 256
        %v2788 = vpop.permute.xlu0 %2787
        %s2790 = sor.u32 256, 8
        %2791 = vbcast.lane.b32.xlu0 %v2785, %s2790
        %v2792 = vpop.permute.xlu0 %2791
        %v2793 = vlaneseq
        %v2794 = vshrl.u32 %v2793, 7
        %v2795 = vsub.s32 5, %v2794
        %v2796 = vrot.slane %v467, %v2795
        %2798 = vbcast.lane.b32.xlu0 %v2796, 256
        %v2799 = vpop.permute.xlu0 %2798
        %s2801 = sor.u32 256, 8
        %2802 = vbcast.lane.b32.xlu0 %v2796, %s2801
        %v2803 = vpop.permute.xlu0 %2802
        %v2804 = vlaneseq
        %v2805 = vshrl.u32 %v2804, 7
        %v2806 = vsub.s32 6, %v2805
        %v2807 = vrot.slane %v467, %v2806
        %2809 = vbcast.lane.b32.xlu0 %v2807, 256
        %v2810 = vpop.permute.xlu0 %2809
        %s2812 = sor.u32 256, 8
        %2813 = vbcast.lane.b32.xlu0 %v2807, %s2812
        %v2814 = vpop.permute.xlu0 %2813
        %v2815 = vlaneseq
        %v2816 = vshrl.u32 %v2815, 7
        %v2817 = vsub.s32 7, %v2816
        %v2818 = vrot.slane %v467, %v2817
        %2820 = vbcast.lane.b32.xlu0 %v2818, 256
        %v2821 = vpop.permute.xlu0 %2820
        %s2823 = sor.u32 256, 8
        %2824 = vbcast.lane.b32.xlu0 %v2818, %s2823
        %v2825 = vpop.permute.xlu0 %2824
        %v2826 = vlaneseq
        %v2827 = vshrl.u32 %v2826, 7
        %v2828 = vsub.s32 0, %v2827
        %v2829 = vrot.slane %v468, %v2828
        %2831 = vbcast.lane.b32.xlu0 %v2829, 256
        %v2832 = vpop.permute.xlu0 %2831
        %s2834 = sor.u32 256, 8
        %2835 = vbcast.lane.b32.xlu0 %v2829, %s2834
        %v2836 = vpop.permute.xlu0 %2835
        %v2837 = vlaneseq
        %v2838 = vshrl.u32 %v2837, 7
        %v2839 = vsub.s32 1, %v2838
        %v2840 = vrot.slane %v468, %v2839
        %2842 = vbcast.lane.b32.xlu0 %v2840, 256
        %v2843 = vpop.permute.xlu0 %2842
        %s2845 = sor.u32 256, 8
        %2846 = vbcast.lane.b32.xlu0 %v2840, %s2845
        %v2847 = vpop.permute.xlu0 %2846
        %v2848 = vlaneseq
        %v2849 = vshrl.u32 %v2848, 7
        %v2850 = vsub.s32 2, %v2849
        %v2851 = vrot.slane %v468, %v2850
        %2853 = vbcast.lane.b32.xlu0 %v2851, 256
        %v2854 = vpop.permute.xlu0 %2853
        %s2856 = sor.u32 256, 8
        %2857 = vbcast.lane.b32.xlu0 %v2851, %s2856
        %v2858 = vpop.permute.xlu0 %2857
        %v2859 = vlaneseq
        %v2860 = vshrl.u32 %v2859, 7
        %v2861 = vsub.s32 3, %v2860
        %v2862 = vrot.slane %v468, %v2861
        %2864 = vbcast.lane.b32.xlu0 %v2862, 256
        %v2865 = vpop.permute.xlu0 %2864
        %s2867 = sor.u32 256, 8
        %2868 = vbcast.lane.b32.xlu0 %v2862, %s2867
        %v2869 = vpop.permute.xlu0 %2868
        %v2870 = vlaneseq
        %v2871 = vshrl.u32 %v2870, 7
        %v2872 = vsub.s32 4, %v2871
        %v2873 = vrot.slane %v468, %v2872
        %2875 = vbcast.lane.b32.xlu0 %v2873, 256
        %v2876 = vpop.permute.xlu0 %2875
        %s2878 = sor.u32 256, 8
        %2879 = vbcast.lane.b32.xlu0 %v2873, %s2878
        %v2880 = vpop.permute.xlu0 %2879
        %v2881 = vlaneseq
        %v2882 = vshrl.u32 %v2881, 7
        %v2883 = vsub.s32 5, %v2882
        %v2884 = vrot.slane %v468, %v2883
        %2886 = vbcast.lane.b32.xlu0 %v2884, 256
        %v2887 = vpop.permute.xlu0 %2886
        %s2889 = sor.u32 256, 8
        %2890 = vbcast.lane.b32.xlu0 %v2884, %s2889
        %v2891 = vpop.permute.xlu0 %2890
        %v2892 = vlaneseq
        %v2893 = vshrl.u32 %v2892, 7
        %v2894 = vsub.s32 6, %v2893
        %v2895 = vrot.slane %v468, %v2894
        %2897 = vbcast.lane.b32.xlu0 %v2895, 256
        %v2898 = vpop.permute.xlu0 %2897
        %s2900 = sor.u32 256, 8
        %2901 = vbcast.lane.b32.xlu0 %v2895, %s2900
        %v2902 = vpop.permute.xlu0 %2901
        %v2903 = vlaneseq
        %v2904 = vshrl.u32 %v2903, 7
        %v2905 = vsub.s32 7, %v2904
        %v2906 = vrot.slane %v468, %v2905
        %2908 = vbcast.lane.b32.xlu0 %v2906, 256
        %v2909 = vpop.permute.xlu0 %2908
        %s2911 = sor.u32 256, 8
        %2912 = vbcast.lane.b32.xlu0 %v2906, %s2911
        %v2913 = vpop.permute.xlu0 %2912
        %v2914 = vlaneseq
        %v2915 = vshrl.u32 %v2914, 7
        %v2916 = vsub.s32 0, %v2915
        %v2917 = vrot.slane %v469, %v2916
        %2919 = vbcast.lane.b32.xlu0 %v2917, 256
        %v2920 = vpop.permute.xlu0 %2919
        %s2922 = sor.u32 256, 8
        %2923 = vbcast.lane.b32.xlu0 %v2917, %s2922
        %v2924 = vpop.permute.xlu0 %2923
        %v2925 = vlaneseq
        %v2926 = vshrl.u32 %v2925, 7
        %v2927 = vsub.s32 1, %v2926
        %v2928 = vrot.slane %v469, %v2927
        %2930 = vbcast.lane.b32.xlu0 %v2928, 256
        %v2931 = vpop.permute.xlu0 %2930
        %s2933 = sor.u32 256, 8
        %2934 = vbcast.lane.b32.xlu0 %v2928, %s2933
        %v2935 = vpop.permute.xlu0 %2934
        %v2936 = vlaneseq
        %v2937 = vshrl.u32 %v2936, 7
        %v2938 = vsub.s32 2, %v2937
        %v2939 = vrot.slane %v469, %v2938
        %2941 = vbcast.lane.b32.xlu0 %v2939, 256
        %v2942 = vpop.permute.xlu0 %2941
        %s2944 = sor.u32 256, 8
        %2945 = vbcast.lane.b32.xlu0 %v2939, %s2944
        %v2946 = vpop.permute.xlu0 %2945
        %v2947 = vlaneseq
        %v2948 = vshrl.u32 %v2947, 7
        %v2949 = vsub.s32 3, %v2948
        %v2950 = vrot.slane %v469, %v2949
        %2952 = vbcast.lane.b32.xlu0 %v2950, 256
        %v2953 = vpop.permute.xlu0 %2952
        %s2955 = sor.u32 256, 8
        %2956 = vbcast.lane.b32.xlu0 %v2950, %s2955
        %v2957 = vpop.permute.xlu0 %2956
        %v2958 = vlaneseq
        %v2959 = vshrl.u32 %v2958, 7
        %v2960 = vsub.s32 4, %v2959
        %v2961 = vrot.slane %v469, %v2960
        %2963 = vbcast.lane.b32.xlu0 %v2961, 256
        %v2964 = vpop.permute.xlu0 %2963
        %s2966 = sor.u32 256, 8
        %2967 = vbcast.lane.b32.xlu0 %v2961, %s2966
        %v2968 = vpop.permute.xlu0 %2967
        %v2969 = vlaneseq
        %v2970 = vshrl.u32 %v2969, 7
        %v2971 = vsub.s32 5, %v2970
        %v2972 = vrot.slane %v469, %v2971
        %2974 = vbcast.lane.b32.xlu0 %v2972, 256
        %v2975 = vpop.permute.xlu0 %2974
        %s2977 = sor.u32 256, 8
        %2978 = vbcast.lane.b32.xlu0 %v2972, %s2977
        %v2979 = vpop.permute.xlu0 %2978
        %v2980 = vlaneseq
        %v2981 = vshrl.u32 %v2980, 7
        %v2982 = vsub.s32 6, %v2981
        %v2983 = vrot.slane %v469, %v2982
        %2985 = vbcast.lane.b32.xlu0 %v2983, 256
        %v2986 = vpop.permute.xlu0 %2985
        %s2988 = sor.u32 256, 8
        %2989 = vbcast.lane.b32.xlu0 %v2983, %s2988
        %v2990 = vpop.permute.xlu0 %2989
        %v2991 = vlaneseq
        %v2992 = vshrl.u32 %v2991, 7
        %v2993 = vsub.s32 7, %v2992
        %v2994 = vrot.slane %v469, %v2993
        %2996 = vbcast.lane.b32.xlu0 %v2994, 256
        %v2997 = vpop.permute.xlu0 %2996
        %s2999 = sor.u32 256, 8
        %3000 = vbcast.lane.b32.xlu0 %v2994, %s2999
        %v3001 = vpop.permute.xlu0 %3000
        %v3002 = vlaneseq
        %v3003 = vshrl.u32 %v3002, 7
        %v3004 = vsub.s32 0, %v3003
        %v3005 = vrot.slane %v474, %v3004
        %3007 = vbcast.lane.b32.xlu0 %v3005, 256
        %v3008 = vpop.permute.xlu0 %3007
        %s3010 = sor.u32 256, 8
        %3011 = vbcast.lane.b32.xlu0 %v3005, %s3010
        %v3012 = vpop.permute.xlu0 %3011
        %v3013 = vlaneseq
        %v3014 = vshrl.u32 %v3013, 7
        %v3015 = vsub.s32 1, %v3014
        %v3016 = vrot.slane %v474, %v3015
        %3018 = vbcast.lane.b32.xlu0 %v3016, 256
        %v3019 = vpop.permute.xlu0 %3018
        %s3021 = sor.u32 256, 8
        %3022 = vbcast.lane.b32.xlu0 %v3016, %s3021
        %v3023 = vpop.permute.xlu0 %3022
        %v3024 = vlaneseq
        %v3025 = vshrl.u32 %v3024, 7
        %v3026 = vsub.s32 2, %v3025
        %v3027 = vrot.slane %v474, %v3026
        %3029 = vbcast.lane.b32.xlu0 %v3027, 256
        %v3030 = vpop.permute.xlu0 %3029
        %s3032 = sor.u32 256, 8
        %3033 = vbcast.lane.b32.xlu0 %v3027, %s3032
        %v3034 = vpop.permute.xlu0 %3033
        %v3035 = vlaneseq
        %v3036 = vshrl.u32 %v3035, 7
        %v3037 = vsub.s32 3, %v3036
        %v3038 = vrot.slane %v474, %v3037
        %3040 = vbcast.lane.b32.xlu0 %v3038, 256
        %v3041 = vpop.permute.xlu0 %3040
        %s3043 = sor.u32 256, 8
        %3044 = vbcast.lane.b32.xlu0 %v3038, %s3043
        %v3045 = vpop.permute.xlu0 %3044
        %v3046 = vlaneseq
        %v3047 = vshrl.u32 %v3046, 7
        %v3048 = vsub.s32 4, %v3047
        %v3049 = vrot.slane %v474, %v3048
        %3051 = vbcast.lane.b32.xlu0 %v3049, 256
        %v3052 = vpop.permute.xlu0 %3051
        %s3054 = sor.u32 256, 8
        %3055 = vbcast.lane.b32.xlu0 %v3049, %s3054
        %v3056 = vpop.permute.xlu0 %3055
        %v3057 = vlaneseq
        %v3058 = vshrl.u32 %v3057, 7
        %v3059 = vsub.s32 5, %v3058
        %v3060 = vrot.slane %v474, %v3059
        %3062 = vbcast.lane.b32.xlu0 %v3060, 256
        %v3063 = vpop.permute.xlu0 %3062
        %s3065 = sor.u32 256, 8
        %3066 = vbcast.lane.b32.xlu0 %v3060, %s3065
        %v3067 = vpop.permute.xlu0 %3066
        %v3068 = vlaneseq
        %v3069 = vshrl.u32 %v3068, 7
        %v3070 = vsub.s32 6, %v3069
        %v3071 = vrot.slane %v474, %v3070
        %3073 = vbcast.lane.b32.xlu0 %v3071, 256
        %v3074 = vpop.permute.xlu0 %3073
        %s3076 = sor.u32 256, 8
        %3077 = vbcast.lane.b32.xlu0 %v3071, %s3076
        %v3078 = vpop.permute.xlu0 %3077
        %v3079 = vlaneseq
        %v3080 = vshrl.u32 %v3079, 7
        %v3081 = vsub.s32 7, %v3080
        %v3082 = vrot.slane %v474, %v3081
        %3084 = vbcast.lane.b32.xlu0 %v3082, 256
        %v3085 = vpop.permute.xlu0 %3084
        %s3087 = sor.u32 256, 8
        %3088 = vbcast.lane.b32.xlu0 %v3082, %s3087
        %v3089 = vpop.permute.xlu0 %3088
        %v3090 = vlaneseq
        %v3091 = vshrl.u32 %v3090, 7
        %v3092 = vsub.s32 0, %v3091
        %v3093 = vrot.slane %v475, %v3092
        %3095 = vbcast.lane.b32.xlu0 %v3093, 256
        %v3096 = vpop.permute.xlu0 %3095
        %s3098 = sor.u32 256, 8
        %3099 = vbcast.lane.b32.xlu0 %v3093, %s3098
        %v3100 = vpop.permute.xlu0 %3099
        %v3101 = vlaneseq
        %v3102 = vshrl.u32 %v3101, 7
        %v3103 = vsub.s32 1, %v3102
        %v3104 = vrot.slane %v475, %v3103
        %3106 = vbcast.lane.b32.xlu0 %v3104, 256
        %v3107 = vpop.permute.xlu0 %3106
        %s3109 = sor.u32 256, 8
        %3110 = vbcast.lane.b32.xlu0 %v3104, %s3109
        %v3111 = vpop.permute.xlu0 %3110
        %v3112 = vlaneseq
        %v3113 = vshrl.u32 %v3112, 7
        %v3114 = vsub.s32 2, %v3113
        %v3115 = vrot.slane %v475, %v3114
        %3117 = vbcast.lane.b32.xlu0 %v3115, 256
        %v3118 = vpop.permute.xlu0 %3117
        %s3120 = sor.u32 256, 8
        %3121 = vbcast.lane.b32.xlu0 %v3115, %s3120
        %v3122 = vpop.permute.xlu0 %3121
        %v3123 = vlaneseq
        %v3124 = vshrl.u32 %v3123, 7
        %v3125 = vsub.s32 3, %v3124
        %v3126 = vrot.slane %v475, %v3125
        %3128 = vbcast.lane.b32.xlu0 %v3126, 256
        %v3129 = vpop.permute.xlu0 %3128
        %s3131 = sor.u32 256, 8
        %3132 = vbcast.lane.b32.xlu0 %v3126, %s3131
        %v3133 = vpop.permute.xlu0 %3132
        %v3134 = vlaneseq
        %v3135 = vshrl.u32 %v3134, 7
        %v3136 = vsub.s32 4, %v3135
        %v3137 = vrot.slane %v475, %v3136
        %3139 = vbcast.lane.b32.xlu0 %v3137, 256
        %v3140 = vpop.permute.xlu0 %3139
        %s3142 = sor.u32 256, 8
        %3143 = vbcast.lane.b32.xlu0 %v3137, %s3142
        %v3144 = vpop.permute.xlu0 %3143
        %v3145 = vlaneseq
        %v3146 = vshrl.u32 %v3145, 7
        %v3147 = vsub.s32 5, %v3146
        %v3148 = vrot.slane %v475, %v3147
        %3150 = vbcast.lane.b32.xlu0 %v3148, 256
        %v3151 = vpop.permute.xlu0 %3150
        %s3153 = sor.u32 256, 8
        %3154 = vbcast.lane.b32.xlu0 %v3148, %s3153
        %v3155 = vpop.permute.xlu0 %3154
        %v3156 = vlaneseq
        %v3157 = vshrl.u32 %v3156, 7
        %v3158 = vsub.s32 6, %v3157
        %v3159 = vrot.slane %v475, %v3158
        %3161 = vbcast.lane.b32.xlu0 %v3159, 256
        %v3162 = vpop.permute.xlu0 %3161
        %s3164 = sor.u32 256, 8
        %3165 = vbcast.lane.b32.xlu0 %v3159, %s3164
        %v3166 = vpop.permute.xlu0 %3165
        %v3167 = vlaneseq
        %v3168 = vshrl.u32 %v3167, 7
        %v3169 = vsub.s32 7, %v3168
        %v3170 = vrot.slane %v475, %v3169
        %3172 = vbcast.lane.b32.xlu0 %v3170, 256
        %v3173 = vpop.permute.xlu0 %3172
        %s3175 = sor.u32 256, 8
        %3176 = vbcast.lane.b32.xlu0 %v3170, %s3175
        %v3177 = vpop.permute.xlu0 %3176
        %v3178 = vlaneseq
        %v3179 = vshrl.u32 %v3178, 7
        %v3180 = vsub.s32 0, %v3179
        %v3181 = vrot.slane %v476, %v3180
        %3183 = vbcast.lane.b32.xlu0 %v3181, 256
        %v3184 = vpop.permute.xlu0 %3183
        %s3186 = sor.u32 256, 8
        %3187 = vbcast.lane.b32.xlu0 %v3181, %s3186
        %v3188 = vpop.permute.xlu0 %3187
        %v3189 = vlaneseq
        %v3190 = vshrl.u32 %v3189, 7
        %v3191 = vsub.s32 1, %v3190
        %v3192 = vrot.slane %v476, %v3191
        %3194 = vbcast.lane.b32.xlu0 %v3192, 256
        %v3195 = vpop.permute.xlu0 %3194
        %s3197 = sor.u32 256, 8
        %3198 = vbcast.lane.b32.xlu0 %v3192, %s3197
        %v3199 = vpop.permute.xlu0 %3198
        %v3200 = vlaneseq
        %v3201 = vshrl.u32 %v3200, 7
        %v3202 = vsub.s32 2, %v3201
        %v3203 = vrot.slane %v476, %v3202
        %3205 = vbcast.lane.b32.xlu0 %v3203, 256
        %v3206 = vpop.permute.xlu0 %3205
        %s3208 = sor.u32 256, 8
        %3209 = vbcast.lane.b32.xlu0 %v3203, %s3208
        %v3210 = vpop.permute.xlu0 %3209
        %v3211 = vlaneseq
        %v3212 = vshrl.u32 %v3211, 7
        %v3213 = vsub.s32 3, %v3212
        %v3214 = vrot.slane %v476, %v3213
        %3216 = vbcast.lane.b32.xlu0 %v3214, 256
        %v3217 = vpop.permute.xlu0 %3216
        %s3219 = sor.u32 256, 8
        %3220 = vbcast.lane.b32.xlu0 %v3214, %s3219
        %v3221 = vpop.permute.xlu0 %3220
        %v3222 = vlaneseq
        %v3223 = vshrl.u32 %v3222, 7
        %v3224 = vsub.s32 4, %v3223
        %v3225 = vrot.slane %v476, %v3224
        %3227 = vbcast.lane.b32.xlu0 %v3225, 256
        %v3228 = vpop.permute.xlu0 %3227
        %s3230 = sor.u32 256, 8
        %3231 = vbcast.lane.b32.xlu0 %v3225, %s3230
        %v3232 = vpop.permute.xlu0 %3231
        %v3233 = vlaneseq
        %v3234 = vshrl.u32 %v3233, 7
        %v3235 = vsub.s32 5, %v3234
        %v3236 = vrot.slane %v476, %v3235
        %3238 = vbcast.lane.b32.xlu0 %v3236, 256
        %v3239 = vpop.permute.xlu0 %3238
        %s3241 = sor.u32 256, 8
        %3242 = vbcast.lane.b32.xlu0 %v3236, %s3241
        %v3243 = vpop.permute.xlu0 %3242
        %v3244 = vlaneseq
        %v3245 = vshrl.u32 %v3244, 7
        %v3246 = vsub.s32 6, %v3245
        %v3247 = vrot.slane %v476, %v3246
        %3249 = vbcast.lane.b32.xlu0 %v3247, 256
        %v3250 = vpop.permute.xlu0 %3249
        %s3252 = sor.u32 256, 8
        %3253 = vbcast.lane.b32.xlu0 %v3247, %s3252
        %v3254 = vpop.permute.xlu0 %3253
        %v3255 = vlaneseq
        %v3256 = vshrl.u32 %v3255, 7
        %v3257 = vsub.s32 7, %v3256
        %v3258 = vrot.slane %v476, %v3257
        %3260 = vbcast.lane.b32.xlu0 %v3258, 256
        %v3261 = vpop.permute.xlu0 %3260
        %s3263 = sor.u32 256, 8
        %3264 = vbcast.lane.b32.xlu0 %v3258, %s3263
        %v3265 = vpop.permute.xlu0 %3264
        %v3266 = vlaneseq
        %v3267 = vshrl.u32 %v3266, 7
        %v3268 = vsub.s32 0, %v3267
        %v3269 = vrot.slane %v477, %v3268
        %3271 = vbcast.lane.b32.xlu0 %v3269, 256
        %v3272 = vpop.permute.xlu0 %3271
        %s3274 = sor.u32 256, 8
        %3275 = vbcast.lane.b32.xlu0 %v3269, %s3274
        %v3276 = vpop.permute.xlu0 %3275
        %v3277 = vlaneseq
        %v3278 = vshrl.u32 %v3277, 7
        %v3279 = vsub.s32 1, %v3278
        %v3280 = vrot.slane %v477, %v3279
        %3282 = vbcast.lane.b32.xlu0 %v3280, 256
        %v3283 = vpop.permute.xlu0 %3282
        %s3285 = sor.u32 256, 8
        %3286 = vbcast.lane.b32.xlu0 %v3280, %s3285
        %v3287 = vpop.permute.xlu0 %3286
        %v3288 = vlaneseq
        %v3289 = vshrl.u32 %v3288, 7
        %v3290 = vsub.s32 2, %v3289
        %v3291 = vrot.slane %v477, %v3290
        %3293 = vbcast.lane.b32.xlu0 %v3291, 256
        %v3294 = vpop.permute.xlu0 %3293
        %s3296 = sor.u32 256, 8
        %3297 = vbcast.lane.b32.xlu0 %v3291, %s3296
        %v3298 = vpop.permute.xlu0 %3297
        %v3299 = vlaneseq
        %v3300 = vshrl.u32 %v3299, 7
        %v3301 = vsub.s32 3, %v3300
        %v3302 = vrot.slane %v477, %v3301
        %3304 = vbcast.lane.b32.xlu0 %v3302, 256
        %v3305 = vpop.permute.xlu0 %3304
        %s3307 = sor.u32 256, 8
        %3308 = vbcast.lane.b32.xlu0 %v3302, %s3307
        %v3309 = vpop.permute.xlu0 %3308
        %v3310 = vlaneseq
        %v3311 = vshrl.u32 %v3310, 7
        %v3312 = vsub.s32 4, %v3311
        %v3313 = vrot.slane %v477, %v3312
        %3315 = vbcast.lane.b32.xlu0 %v3313, 256
        %v3316 = vpop.permute.xlu0 %3315
        %s3318 = sor.u32 256, 8
        %3319 = vbcast.lane.b32.xlu0 %v3313, %s3318
        %v3320 = vpop.permute.xlu0 %3319
        %v3321 = vlaneseq
        %v3322 = vshrl.u32 %v3321, 7
        %v3323 = vsub.s32 5, %v3322
        %v3324 = vrot.slane %v477, %v3323
        %3326 = vbcast.lane.b32.xlu0 %v3324, 256
        %v3327 = vpop.permute.xlu0 %3326
        %s3329 = sor.u32 256, 8
        %3330 = vbcast.lane.b32.xlu0 %v3324, %s3329
        %v3331 = vpop.permute.xlu0 %3330
        %v3332 = vlaneseq
        %v3333 = vshrl.u32 %v3332, 7
        %v3334 = vsub.s32 6, %v3333
        %v3335 = vrot.slane %v477, %v3334
        %3337 = vbcast.lane.b32.xlu0 %v3335, 256
        %v3338 = vpop.permute.xlu0 %3337
        %s3340 = sor.u32 256, 8
        %3341 = vbcast.lane.b32.xlu0 %v3335, %s3340
        %v3342 = vpop.permute.xlu0 %3341
        %v3343 = vlaneseq
        %v3344 = vshrl.u32 %v3343, 7
        %v3345 = vsub.s32 7, %v3344
        %v3346 = vrot.slane %v477, %v3345
        %3348 = vbcast.lane.b32.xlu0 %v3346, 256
        %v3349 = vpop.permute.xlu0 %3348
        %s3351 = sor.u32 256, 8
        %3352 = vbcast.lane.b32.xlu0 %v3346, %s3351
        %v3353 = vpop.permute.xlu0 %3352
        %v3354 = vsel %vm1182, %v2656, %v3008
        %v3355 = vsel %vm1182, %v2660, %v3012
        %v3356 = vsel %vm1182, %v2667, %v3019
        %v3357 = vsel %vm1182, %v2671, %v3023
        %v3358 = vsel %vm1182, %v2678, %v3030
        %v3359 = vsel %vm1182, %v2682, %v3034
        %v3360 = vsel %vm1182, %v2689, %v3041
        %v3361 = vsel %vm1182, %v2693, %v3045
        %v3362 = vsel %vm1182, %v2700, %v3052
        %v3363 = vsel %vm1182, %v2704, %v3056
        %v3364 = vsel %vm1182, %v2711, %v3063
        %v3365 = vsel %vm1182, %v2715, %v3067
        %v3366 = vsel %vm1182, %v2722, %v3074
        %v3367 = vsel %vm1182, %v2726, %v3078
        %v3368 = vsel %vm1182, %v2733, %v3085
        %v3369 = vsel %vm1182, %v2737, %v3089
        %v3370 = vsel %vm1182, %v2744, %v3096
        %v3371 = vsel %vm1182, %v2748, %v3100
        %v3372 = vsel %vm1182, %v2755, %v3107
        %v3373 = vsel %vm1182, %v2759, %v3111
        %v3374 = vsel %vm1182, %v2766, %v3118
        %v3375 = vsel %vm1182, %v2770, %v3122
        %v3376 = vsel %vm1182, %v2777, %v3129
        %v3377 = vsel %vm1182, %v2781, %v3133
        %v3378 = vsel %vm1182, %v2788, %v3140
        %v3379 = vsel %vm1182, %v2792, %v3144
        %v3380 = vsel %vm1182, %v2799, %v3151
        %v3381 = vsel %vm1182, %v2803, %v3155
        %v3382 = vsel %vm1182, %v2810, %v3162
        %v3383 = vsel %vm1182, %v2814, %v3166
        %v3384 = vsel %vm1182, %v2821, %v3173
        %v3385 = vsel %vm1182, %v2825, %v3177
        %v3386 = vsel %vm1182, %v2832, %v3184
        %v3387 = vsel %vm1182, %v2836, %v3188
        %v3388 = vsel %vm1182, %v2843, %v3195
        %v3389 = vsel %vm1182, %v2847, %v3199
        %v3390 = vsel %vm1182, %v2854, %v3206
        %v3391 = vsel %vm1182, %v2858, %v3210
        %v3392 = vsel %vm1182, %v2865, %v3217
        %v3393 = vsel %vm1182, %v2869, %v3221
        %v3394 = vsel %vm1182, %v2876, %v3228
        %v3395 = vsel %vm1182, %v2880, %v3232
        %v3396 = vsel %vm1182, %v2887, %v3239
        %v3397 = vsel %vm1182, %v2891, %v3243
        %v3398 = vsel %vm1182, %v2898, %v3250
        %v3399 = vsel %vm1182, %v2902, %v3254
        %v3400 = vsel %vm1182, %v2909, %v3261
        %v3401 = vsel %vm1182, %v2913, %v3265
        %v3402 = vsel %vm1182, %v2920, %v3272
        %v3403 = vsel %vm1182, %v2924, %v3276
        %v3404 = vsel %vm1182, %v2931, %v3283
        %v3405 = vsel %vm1182, %v2935, %v3287
        %v3406 = vsel %vm1182, %v2942, %v3294
        %v3407 = vsel %vm1182, %v2946, %v3298
        %v3408 = vsel %vm1182, %v2953, %v3305
        %v3409 = vsel %vm1182, %v2957, %v3309
        %v3410 = vsel %vm1182, %v2964, %v3316
        %v3411 = vsel %vm1182, %v2968, %v3320
        %v3412 = vsel %vm1182, %v2975, %v3327
        %v3413 = vsel %vm1182, %v2979, %v3331
        %v3414 = vsel %vm1182, %v2986, %v3338
        %v3415 = vsel %vm1182, %v2990, %v3342
        %v3416 = vsel %vm1182, %v2997, %v3349
        %v3417 = vsel %vm1182, %v3001, %v3353
        %v3418 = vcombine.low %v3354, %v3358
        %v3419 = vcombine.high %v3354, %v3358
        %v3421 = vunpack.c.l.s4 1983009808
        %v3422 = vunpack.c.0.s8 %v3421
        %v3423 = vlaneseq
        %v3424 = vshrl.u32 %v3423, 7
        %v3425 = vsub.s32 %v3422, %v3424
        %v3426 = vrot.slane %v3418, %v3425
        %v3428 = vunpack.c.l.s4 1983009808
        %v3429 = vunpack.c.0.s8 %v3428
        %v3430 = vlaneseq
        %v3431 = vshrl.u32 %v3430, 7
        %v3432 = vsub.s32 %v3429, %v3431
        %v3433 = vrot.slane %v3419, %v3432
        %v3434 = vcombine.low %v3356, %v3360
        %v3435 = vcombine.high %v3356, %v3360
        %v3437 = vunpack.c.l.s4 1983009808
        %v3438 = vunpack.c.0.s8 %v3437
        %v3439 = vlaneseq
        %v3440 = vshrl.u32 %v3439, 7
        %v3441 = vsub.s32 %v3438, %v3440
        %v3442 = vrot.slane %v3434, %v3441
        %v3444 = vunpack.c.l.s4 1983009808
        %v3445 = vunpack.c.0.s8 %v3444
        %v3446 = vlaneseq
        %v3447 = vshrl.u32 %v3446, 7
        %v3448 = vsub.s32 %v3445, %v3447
        %v3449 = vrot.slane %v3435, %v3448
        %v3450 = vcombine.low %v3362, %v3366
        %v3451 = vcombine.high %v3362, %v3366
        %v3453 = vunpack.c.l.s4 1983009808
        %v3454 = vunpack.c.0.s8 %v3453
        %v3455 = vlaneseq
        %v3456 = vshrl.u32 %v3455, 7
        %v3457 = vsub.s32 %v3454, %v3456
        %v3458 = vrot.slane %v3450, %v3457
        %v3460 = vunpack.c.l.s4 1983009808
        %v3461 = vunpack.c.0.s8 %v3460
        %v3462 = vlaneseq
        %v3463 = vshrl.u32 %v3462, 7
        %v3464 = vsub.s32 %v3461, %v3463
        %v3465 = vrot.slane %v3451, %v3464
        %v3466 = vcombine.low %v3364, %v3368
        %v3467 = vcombine.high %v3364, %v3368
        %v3469 = vunpack.c.l.s4 1983009808
        %v3470 = vunpack.c.0.s8 %v3469
        %v3471 = vlaneseq
        %v3472 = vshrl.u32 %v3471, 7
        %v3473 = vsub.s32 %v3470, %v3472
        %v3474 = vrot.slane %v3466, %v3473
        %v3476 = vunpack.c.l.s4 1983009808
        %v3477 = vunpack.c.0.s8 %v3476
        %v3478 = vlaneseq
        %v3479 = vshrl.u32 %v3478, 7
        %v3480 = vsub.s32 %v3477, %v3479
        %v3481 = vrot.slane %v3467, %v3480
        %v3482 = vcombine.low %v3426, %v3442
        %v3483 = vcombine.high %v3426, %v3442
        %v3485 = vunpack.c.l.s4 1934713408
        %v3486 = vunpack.c.0.s8 %v3485
        %v3487 = vlaneseq
        %v3488 = vshrl.u32 %v3487, 7
        %v3489 = vsub.s32 %v3486, %v3488
        %v3490 = vrot.slane %v3482, %v3489
        %v3492 = vunpack.c.l.s4 1934713408
        %v3493 = vunpack.c.0.s8 %v3492
        %v3494 = vlaneseq
        %v3495 = vshrl.u32 %v3494, 7
        %v3496 = vsub.s32 %v3493, %v3495
        %v3497 = vrot.slane %v3483, %v3496
        %v3498 = vcombine.low %v3433, %v3449
        %v3499 = vcombine.high %v3433, %v3449
        %v3501 = vunpack.c.l.s4 1934713408
        %v3502 = vunpack.c.0.s8 %v3501
        %v3503 = vlaneseq
        %v3504 = vshrl.u32 %v3503, 7
        %v3505 = vsub.s32 %v3502, %v3504
        %v3506 = vrot.slane %v3498, %v3505
        %v3508 = vunpack.c.l.s4 1934713408
        %v3509 = vunpack.c.0.s8 %v3508
        %v3510 = vlaneseq
        %v3511 = vshrl.u32 %v3510, 7
        %v3512 = vsub.s32 %v3509, %v3511
        %v3513 = vrot.slane %v3499, %v3512
        %v3514 = vcombine.low %v3458, %v3474
        %v3515 = vcombine.high %v3458, %v3474
        %v3517 = vunpack.c.l.s4 1934713408
        %v3518 = vunpack.c.0.s8 %v3517
        %v3519 = vlaneseq
        %v3520 = vshrl.u32 %v3519, 7
        %v3521 = vsub.s32 %v3518, %v3520
        %v3522 = vrot.slane %v3514, %v3521
        %v3524 = vunpack.c.l.s4 1934713408
        %v3525 = vunpack.c.0.s8 %v3524
        %v3526 = vlaneseq
        %v3527 = vshrl.u32 %v3526, 7
        %v3528 = vsub.s32 %v3525, %v3527
        %v3529 = vrot.slane %v3515, %v3528
        %v3530 = vcombine.low %v3465, %v3481
        %v3531 = vcombine.high %v3465, %v3481
        %v3533 = vunpack.c.l.s4 1934713408
        %v3534 = vunpack.c.0.s8 %v3533
        %v3535 = vlaneseq
        %v3536 = vshrl.u32 %v3535, 7
        %v3537 = vsub.s32 %v3534, %v3536
        %v3538 = vrot.slane %v3530, %v3537
        %v3540 = vunpack.c.l.s4 1934713408
        %v3541 = vunpack.c.0.s8 %v3540
        %v3542 = vlaneseq
        %v3543 = vshrl.u32 %v3542, 7
        %v3544 = vsub.s32 %v3541, %v3543
        %v3545 = vrot.slane %v3531, %v3544
        %v3546 = vcombine.low %v3490, %v3522
        %v3547 = vcombine.high %v3490, %v3522
        %v3548 = vcombine.low %v3497, %v3529
        %v3549 = vcombine.high %v3497, %v3529
        %v3550 = vcombine.low %v3506, %v3538
        %v3551 = vcombine.high %v3506, %v3538
        %v3552 = vcombine.low %v3513, %v3545
        %v3553 = vcombine.high %v3513, %v3545
        %v3554 = vcombine.low %v3370, %v3374
        %v3555 = vcombine.high %v3370, %v3374
        %v3557 = vunpack.c.l.s4 1983009808
        %v3558 = vunpack.c.0.s8 %v3557
        %v3559 = vlaneseq
        %v3560 = vshrl.u32 %v3559, 7
        %v3561 = vsub.s32 %v3558, %v3560
        %v3562 = vrot.slane %v3554, %v3561
        %v3564 = vunpack.c.l.s4 1983009808
        %v3565 = vunpack.c.0.s8 %v3564
        %v3566 = vlaneseq
        %v3567 = vshrl.u32 %v3566, 7
        %v3568 = vsub.s32 %v3565, %v3567
        %v3569 = vrot.slane %v3555, %v3568
        %v3570 = vcombine.low %v3372, %v3376
        %v3571 = vcombine.high %v3372, %v3376
        %v3573 = vunpack.c.l.s4 1983009808
        %v3574 = vunpack.c.0.s8 %v3573
        %v3575 = vlaneseq
        %v3576 = vshrl.u32 %v3575, 7
        %v3577 = vsub.s32 %v3574, %v3576
        %v3578 = vrot.slane %v3570, %v3577
        %v3580 = vunpack.c.l.s4 1983009808
        %v3581 = vunpack.c.0.s8 %v3580
        %v3582 = vlaneseq
        %v3583 = vshrl.u32 %v3582, 7
        %v3584 = vsub.s32 %v3581, %v3583
        %v3585 = vrot.slane %v3571, %v3584
        %v3586 = vcombine.low %v3378, %v3382
        %v3587 = vcombine.high %v3378, %v3382
        %v3589 = vunpack.c.l.s4 1983009808
        %v3590 = vunpack.c.0.s8 %v3589
        %v3591 = vlaneseq
        %v3592 = vshrl.u32 %v3591, 7
        %v3593 = vsub.s32 %v3590, %v3592
        %v3594 = vrot.slane %v3586, %v3593
        %v3596 = vunpack.c.l.s4 1983009808
        %v3597 = vunpack.c.0.s8 %v3596
        %v3598 = vlaneseq
        %v3599 = vshrl.u32 %v3598, 7
        %v3600 = vsub.s32 %v3597, %v3599
        %v3601 = vrot.slane %v3587, %v3600
        %v3602 = vcombine.low %v3380, %v3384
        %v3603 = vcombine.high %v3380, %v3384
        %v3605 = vunpack.c.l.s4 1983009808
        %v3606 = vunpack.c.0.s8 %v3605
        %v3607 = vlaneseq
        %v3608 = vshrl.u32 %v3607, 7
        %v3609 = vsub.s32 %v3606, %v3608
        %v3610 = vrot.slane %v3602, %v3609
        %v3612 = vunpack.c.l.s4 1983009808
        %v3613 = vunpack.c.0.s8 %v3612
        %v3614 = vlaneseq
        %v3615 = vshrl.u32 %v3614, 7
        %v3616 = vsub.s32 %v3613, %v3615
        %v3617 = vrot.slane %v3603, %v3616
        %v3618 = vcombine.low %v3562, %v3578
        %v3619 = vcombine.high %v3562, %v3578
        %v3621 = vunpack.c.l.s4 1934713408
        %v3622 = vunpack.c.0.s8 %v3621
        %v3623 = vlaneseq
        %v3624 = vshrl.u32 %v3623, 7
        %v3625 = vsub.s32 %v3622, %v3624
        %v3626 = vrot.slane %v3618, %v3625
        %v3628 = vunpack.c.l.s4 1934713408
        %v3629 = vunpack.c.0.s8 %v3628
        %v3630 = vlaneseq
        %v3631 = vshrl.u32 %v3630, 7
        %v3632 = vsub.s32 %v3629, %v3631
        %v3633 = vrot.slane %v3619, %v3632
        %v3634 = vcombine.low %v3569, %v3585
        %v3635 = vcombine.high %v3569, %v3585
        %v3637 = vunpack.c.l.s4 1934713408
        %v3638 = vunpack.c.0.s8 %v3637
        %v3639 = vlaneseq
        %v3640 = vshrl.u32 %v3639, 7
        %v3641 = vsub.s32 %v3638, %v3640
        %v3642 = vrot.slane %v3634, %v3641
        %v3644 = vunpack.c.l.s4 1934713408
        %v3645 = vunpack.c.0.s8 %v3644
        %v3646 = vlaneseq
        %v3647 = vshrl.u32 %v3646, 7
        %v3648 = vsub.s32 %v3645, %v3647
        %v3649 = vrot.slane %v3635, %v3648
        %v3650 = vcombine.low %v3594, %v3610
        %v3651 = vcombine.high %v3594, %v3610
        %v3653 = vunpack.c.l.s4 1934713408
        %v3654 = vunpack.c.0.s8 %v3653
        %v3655 = vlaneseq
        %v3656 = vshrl.u32 %v3655, 7
        %v3657 = vsub.s32 %v3654, %v3656
        %v3658 = vrot.slane %v3650, %v3657
        %v3660 = vunpack.c.l.s4 1934713408
        %v3661 = vunpack.c.0.s8 %v3660
        %v3662 = vlaneseq
        %v3663 = vshrl.u32 %v3662, 7
        %v3664 = vsub.s32 %v3661, %v3663
        %v3665 = vrot.slane %v3651, %v3664
        %v3666 = vcombine.low %v3601, %v3617
        %v3667 = vcombine.high %v3601, %v3617
        %v3669 = vunpack.c.l.s4 1934713408
        %v3670 = vunpack.c.0.s8 %v3669
        %v3671 = vlaneseq
        %v3672 = vshrl.u32 %v3671, 7
        %v3673 = vsub.s32 %v3670, %v3672
        %v3674 = vrot.slane %v3666, %v3673
        %v3676 = vunpack.c.l.s4 1934713408
        %v3677 = vunpack.c.0.s8 %v3676
        %v3678 = vlaneseq
        %v3679 = vshrl.u32 %v3678, 7
        %v3680 = vsub.s32 %v3677, %v3679
        %v3681 = vrot.slane %v3667, %v3680
        %v3682 = vcombine.low %v3626, %v3658
        %v3683 = vcombine.high %v3626, %v3658
        %v3684 = vcombine.low %v3633, %v3665
        %v3685 = vcombine.high %v3633, %v3665
        %v3686 = vcombine.low %v3642, %v3674
        %v3687 = vcombine.high %v3642, %v3674
        %v3688 = vcombine.low %v3649, %v3681
        %v3689 = vcombine.high %v3649, %v3681
        %v3690 = vcombine.low %v3355, %v3359
        %v3691 = vcombine.high %v3355, %v3359
        %v3693 = vunpack.c.l.s4 1983009808
        %v3694 = vunpack.c.0.s8 %v3693
        %v3695 = vlaneseq
        %v3696 = vshrl.u32 %v3695, 7
        %v3697 = vsub.s32 %v3694, %v3696
        %v3698 = vrot.slane %v3690, %v3697
        %v3700 = vunpack.c.l.s4 1983009808
        %v3701 = vunpack.c.0.s8 %v3700
        %v3702 = vlaneseq
        %v3703 = vshrl.u32 %v3702, 7
        %v3704 = vsub.s32 %v3701, %v3703
        %v3705 = vrot.slane %v3691, %v3704
        %v3706 = vcombine.low %v3357, %v3361
        %v3707 = vcombine.high %v3357, %v3361
        %v3709 = vunpack.c.l.s4 1983009808
        %v3710 = vunpack.c.0.s8 %v3709
        %v3711 = vlaneseq
        %v3712 = vshrl.u32 %v3711, 7
        %v3713 = vsub.s32 %v3710, %v3712
        %v3714 = vrot.slane %v3706, %v3713
        %v3716 = vunpack.c.l.s4 1983009808
        %v3717 = vunpack.c.0.s8 %v3716
        %v3718 = vlaneseq
        %v3719 = vshrl.u32 %v3718, 7
        %v3720 = vsub.s32 %v3717, %v3719
        %v3721 = vrot.slane %v3707, %v3720
        %v3722 = vcombine.low %v3363, %v3367
        %v3723 = vcombine.high %v3363, %v3367
        %v3725 = vunpack.c.l.s4 1983009808
        %v3726 = vunpack.c.0.s8 %v3725
        %v3727 = vlaneseq
        %v3728 = vshrl.u32 %v3727, 7
        %v3729 = vsub.s32 %v3726, %v3728
        %v3730 = vrot.slane %v3722, %v3729
        %v3732 = vunpack.c.l.s4 1983009808
        %v3733 = vunpack.c.0.s8 %v3732
        %v3734 = vlaneseq
        %v3735 = vshrl.u32 %v3734, 7
        %v3736 = vsub.s32 %v3733, %v3735
        %v3737 = vrot.slane %v3723, %v3736
        %v3738 = vcombine.low %v3365, %v3369
        %v3739 = vcombine.high %v3365, %v3369
        %v3741 = vunpack.c.l.s4 1983009808
        %v3742 = vunpack.c.0.s8 %v3741
        %v3743 = vlaneseq
        %v3744 = vshrl.u32 %v3743, 7
        %v3745 = vsub.s32 %v3742, %v3744
        %v3746 = vrot.slane %v3738, %v3745
        %v3748 = vunpack.c.l.s4 1983009808
        %v3749 = vunpack.c.0.s8 %v3748
        %v3750 = vlaneseq
        %v3751 = vshrl.u32 %v3750, 7
        %v3752 = vsub.s32 %v3749, %v3751
        %v3753 = vrot.slane %v3739, %v3752
        %v3754 = vcombine.low %v3698, %v3714
        %v3755 = vcombine.high %v3698, %v3714
        %v3757 = vunpack.c.l.s4 1934713408
        %v3758 = vunpack.c.0.s8 %v3757
        %v3759 = vlaneseq
        %v3760 = vshrl.u32 %v3759, 7
        %v3761 = vsub.s32 %v3758, %v3760
        %v3762 = vrot.slane %v3754, %v3761
        %v3764 = vunpack.c.l.s4 1934713408
        %v3765 = vunpack.c.0.s8 %v3764
        %v3766 = vlaneseq
        %v3767 = vshrl.u32 %v3766, 7
        %v3768 = vsub.s32 %v3765, %v3767
        %v3769 = vrot.slane %v3755, %v3768
        %v3770 = vcombine.low %v3705, %v3721
        %v3771 = vcombine.high %v3705, %v3721
        %v3773 = vunpack.c.l.s4 1934713408
        %v3774 = vunpack.c.0.s8 %v3773
        %v3775 = vlaneseq
        %v3776 = vshrl.u32 %v3775, 7
        %v3777 = vsub.s32 %v3774, %v3776
        %v3778 = vrot.slane %v3770, %v3777
        %v3780 = vunpack.c.l.s4 1934713408
        %v3781 = vunpack.c.0.s8 %v3780
        %v3782 = vlaneseq
        %v3783 = vshrl.u32 %v3782, 7
        %v3784 = vsub.s32 %v3781, %v3783
        %v3785 = vrot.slane %v3771, %v3784
        %v3786 = vcombine.low %v3730, %v3746
        %v3787 = vcombine.high %v3730, %v3746
        %v3789 = vunpack.c.l.s4 1934713408
        %v3790 = vunpack.c.0.s8 %v3789
        %v3791 = vlaneseq
        %v3792 = vshrl.u32 %v3791, 7
        %v3793 = vsub.s32 %v3790, %v3792
        %v3794 = vrot.slane %v3786, %v3793
        %v3796 = vunpack.c.l.s4 1934713408
        %v3797 = vunpack.c.0.s8 %v3796
        %v3798 = vlaneseq
        %v3799 = vshrl.u32 %v3798, 7
        %v3800 = vsub.s32 %v3797, %v3799
        %v3801 = vrot.slane %v3787, %v3800
        %v3802 = vcombine.low %v3737, %v3753
        %v3803 = vcombine.high %v3737, %v3753
        %v3805 = vunpack.c.l.s4 1934713408
        %v3806 = vunpack.c.0.s8 %v3805
        %v3807 = vlaneseq
        %v3808 = vshrl.u32 %v3807, 7
        %v3809 = vsub.s32 %v3806, %v3808
        %v3810 = vrot.slane %v3802, %v3809
        %v3812 = vunpack.c.l.s4 1934713408
        %v3813 = vunpack.c.0.s8 %v3812
        %v3814 = vlaneseq
        %v3815 = vshrl.u32 %v3814, 7
        %v3816 = vsub.s32 %v3813, %v3815
        %v3817 = vrot.slane %v3803, %v3816
        %v3818 = vcombine.low %v3762, %v3794
        %v3819 = vcombine.high %v3762, %v3794
        %v3820 = vcombine.low %v3769, %v3801
        %v3821 = vcombine.high %v3769, %v3801
        %v3822 = vcombine.low %v3778, %v3810
        %v3823 = vcombine.high %v3778, %v3810
        %v3824 = vcombine.low %v3785, %v3817
        %v3825 = vcombine.high %v3785, %v3817
        %v3826 = vcombine.low %v3371, %v3375
        %v3827 = vcombine.high %v3371, %v3375
        %v3829 = vunpack.c.l.s4 1983009808
        %v3830 = vunpack.c.0.s8 %v3829
        %v3831 = vlaneseq
        %v3832 = vshrl.u32 %v3831, 7
        %v3833 = vsub.s32 %v3830, %v3832
        %v3834 = vrot.slane %v3826, %v3833
        %v3836 = vunpack.c.l.s4 1983009808
        %v3837 = vunpack.c.0.s8 %v3836
        %v3838 = vlaneseq
        %v3839 = vshrl.u32 %v3838, 7
        %v3840 = vsub.s32 %v3837, %v3839
        %v3841 = vrot.slane %v3827, %v3840
        %v3842 = vcombine.low %v3373, %v3377
        %v3843 = vcombine.high %v3373, %v3377
        %v3845 = vunpack.c.l.s4 1983009808
        %v3846 = vunpack.c.0.s8 %v3845
        %v3847 = vlaneseq
        %v3848 = vshrl.u32 %v3847, 7
        %v3849 = vsub.s32 %v3846, %v3848
        %v3850 = vrot.slane %v3842, %v3849
        %v3852 = vunpack.c.l.s4 1983009808
        %v3853 = vunpack.c.0.s8 %v3852
        %v3854 = vlaneseq
        %v3855 = vshrl.u32 %v3854, 7
        %v3856 = vsub.s32 %v3853, %v3855
        %v3857 = vrot.slane %v3843, %v3856
        %v3858 = vcombine.low %v3379, %v3383
        %v3859 = vcombine.high %v3379, %v3383
        %v3861 = vunpack.c.l.s4 1983009808
        %v3862 = vunpack.c.0.s8 %v3861
        %v3863 = vlaneseq
        %v3864 = vshrl.u32 %v3863, 7
        %v3865 = vsub.s32 %v3862, %v3864
        %v3866 = vrot.slane %v3858, %v3865
        %v3868 = vunpack.c.l.s4 1983009808
        %v3869 = vunpack.c.0.s8 %v3868
        %v3870 = vlaneseq
        %v3871 = vshrl.u32 %v3870, 7
        %v3872 = vsub.s32 %v3869, %v3871
        %v3873 = vrot.slane %v3859, %v3872
        %v3874 = vcombine.low %v3381, %v3385
        %v3875 = vcombine.high %v3381, %v3385
        %v3877 = vunpack.c.l.s4 1983009808
        %v3878 = vunpack.c.0.s8 %v3877
        %v3879 = vlaneseq
        %v3880 = vshrl.u32 %v3879, 7
        %v3881 = vsub.s32 %v3878, %v3880
        %v3882 = vrot.slane %v3874, %v3881
        %v3884 = vunpack.c.l.s4 1983009808
        %v3885 = vunpack.c.0.s8 %v3884
        %v3886 = vlaneseq
        %v3887 = vshrl.u32 %v3886, 7
        %v3888 = vsub.s32 %v3885, %v3887
        %v3889 = vrot.slane %v3875, %v3888
        %v3890 = vcombine.low %v3834, %v3850
        %v3891 = vcombine.high %v3834, %v3850
        %v3893 = vunpack.c.l.s4 1934713408
        %v3894 = vunpack.c.0.s8 %v3893
        %v3895 = vlaneseq
        %v3896 = vshrl.u32 %v3895, 7
        %v3897 = vsub.s32 %v3894, %v3896
        %v3898 = vrot.slane %v3890, %v3897
        %v3900 = vunpack.c.l.s4 1934713408
        %v3901 = vunpack.c.0.s8 %v3900
        %v3902 = vlaneseq
        %v3903 = vshrl.u32 %v3902, 7
        %v3904 = vsub.s32 %v3901, %v3903
        %v3905 = vrot.slane %v3891, %v3904
        %v3906 = vcombine.low %v3841, %v3857
        %v3907 = vcombine.high %v3841, %v3857
        %v3909 = vunpack.c.l.s4 1934713408
        %v3910 = vunpack.c.0.s8 %v3909
        %v3911 = vlaneseq
        %v3912 = vshrl.u32 %v3911, 7
        %v3913 = vsub.s32 %v3910, %v3912
        %v3914 = vrot.slane %v3906, %v3913
        %v3916 = vunpack.c.l.s4 1934713408
        %v3917 = vunpack.c.0.s8 %v3916
        %v3918 = vlaneseq
        %v3919 = vshrl.u32 %v3918, 7
        %v3920 = vsub.s32 %v3917, %v3919
        %v3921 = vrot.slane %v3907, %v3920
        %v3922 = vcombine.low %v3866, %v3882
        %v3923 = vcombine.high %v3866, %v3882
        %v3925 = vunpack.c.l.s4 1934713408
        %v3926 = vunpack.c.0.s8 %v3925
        %v3927 = vlaneseq
        %v3928 = vshrl.u32 %v3927, 7
        %v3929 = vsub.s32 %v3926, %v3928
        %v3930 = vrot.slane %v3922, %v3929
        %v3932 = vunpack.c.l.s4 1934713408
        %v3933 = vunpack.c.0.s8 %v3932
        %v3934 = vlaneseq
        %v3935 = vshrl.u32 %v3934, 7
        %v3936 = vsub.s32 %v3933, %v3935
        %v3937 = vrot.slane %v3923, %v3936
        %v3938 = vcombine.low %v3873, %v3889
        %v3939 = vcombine.high %v3873, %v3889
        %v3941 = vunpack.c.l.s4 1934713408
        %v3942 = vunpack.c.0.s8 %v3941
        %v3943 = vlaneseq
        %v3944 = vshrl.u32 %v3943, 7
        %v3945 = vsub.s32 %v3942, %v3944
        %v3946 = vrot.slane %v3938, %v3945
        %v3948 = vunpack.c.l.s4 1934713408
        %v3949 = vunpack.c.0.s8 %v3948
        %v3950 = vlaneseq
        %v3951 = vshrl.u32 %v3950, 7
        %v3952 = vsub.s32 %v3949, %v3951
        %v3953 = vrot.slane %v3939, %v3952
        %v3954 = vcombine.low %v3898, %v3930
        %v3955 = vcombine.high %v3898, %v3930
        %v3956 = vcombine.low %v3905, %v3937
        %v3957 = vcombine.high %v3905, %v3937
        %v3958 = vcombine.low %v3914, %v3946
        %v3959 = vcombine.high %v3914, %v3946
        %v3960 = vcombine.low %v3921, %v3953
        %v3961 = vcombine.high %v3921, %v3953
        %v3962 = vcombine.low %v3386, %v3390
        %v3963 = vcombine.high %v3386, %v3390
        %v3965 = vunpack.c.l.s4 1983009808
        %v3966 = vunpack.c.0.s8 %v3965
        %v3967 = vlaneseq
        %v3968 = vshrl.u32 %v3967, 7
        %v3969 = vsub.s32 %v3966, %v3968
        %v3970 = vrot.slane %v3962, %v3969
        %v3972 = vunpack.c.l.s4 1983009808
        %v3973 = vunpack.c.0.s8 %v3972
        %v3974 = vlaneseq
        %v3975 = vshrl.u32 %v3974, 7
        %v3976 = vsub.s32 %v3973, %v3975
        %v3977 = vrot.slane %v3963, %v3976
        %v3978 = vcombine.low %v3388, %v3392
        %v3979 = vcombine.high %v3388, %v3392
        %v3981 = vunpack.c.l.s4 1983009808
        %v3982 = vunpack.c.0.s8 %v3981
        %v3983 = vlaneseq
        %v3984 = vshrl.u32 %v3983, 7
        %v3985 = vsub.s32 %v3982, %v3984
        %v3986 = vrot.slane %v3978, %v3985
        %v3988 = vunpack.c.l.s4 1983009808
        %v3989 = vunpack.c.0.s8 %v3988
        %v3990 = vlaneseq
        %v3991 = vshrl.u32 %v3990, 7
        %v3992 = vsub.s32 %v3989, %v3991
        %v3993 = vrot.slane %v3979, %v3992
        %v3994 = vcombine.low %v3394, %v3398
        %v3995 = vcombine.high %v3394, %v3398
        %v3997 = vunpack.c.l.s4 1983009808
        %v3998 = vunpack.c.0.s8 %v3997
        %v3999 = vlaneseq
        %v4000 = vshrl.u32 %v3999, 7
        %v4001 = vsub.s32 %v3998, %v4000
        %v4002 = vrot.slane %v3994, %v4001
        %v4004 = vunpack.c.l.s4 1983009808
        %v4005 = vunpack.c.0.s8 %v4004
        %v4006 = vlaneseq
        %v4007 = vshrl.u32 %v4006, 7
        %v4008 = vsub.s32 %v4005, %v4007
        %v4009 = vrot.slane %v3995, %v4008
        %v4010 = vcombine.low %v3396, %v3400
        %v4011 = vcombine.high %v3396, %v3400
        %v4013 = vunpack.c.l.s4 1983009808
        %v4014 = vunpack.c.0.s8 %v4013
        %v4015 = vlaneseq
        %v4016 = vshrl.u32 %v4015, 7
        %v4017 = vsub.s32 %v4014, %v4016
        %v4018 = vrot.slane %v4010, %v4017
        %v4020 = vunpack.c.l.s4 1983009808
        %v4021 = vunpack.c.0.s8 %v4020
        %v4022 = vlaneseq
        %v4023 = vshrl.u32 %v4022, 7
        %v4024 = vsub.s32 %v4021, %v4023
        %v4025 = vrot.slane %v4011, %v4024
        %v4026 = vcombine.low %v3970, %v3986
        %v4027 = vcombine.high %v3970, %v3986
        %v4029 = vunpack.c.l.s4 1934713408
        %v4030 = vunpack.c.0.s8 %v4029
        %v4031 = vlaneseq
        %v4032 = vshrl.u32 %v4031, 7
        %v4033 = vsub.s32 %v4030, %v4032
        %v4034 = vrot.slane %v4026, %v4033
        %v4036 = vunpack.c.l.s4 1934713408
        %v4037 = vunpack.c.0.s8 %v4036
        %v4038 = vlaneseq
        %v4039 = vshrl.u32 %v4038, 7
        %v4040 = vsub.s32 %v4037, %v4039
        %v4041 = vrot.slane %v4027, %v4040
        %v4042 = vcombine.low %v3977, %v3993
        %v4043 = vcombine.high %v3977, %v3993
        %v4045 = vunpack.c.l.s4 1934713408
        %v4046 = vunpack.c.0.s8 %v4045
        %v4047 = vlaneseq
        %v4048 = vshrl.u32 %v4047, 7
        %v4049 = vsub.s32 %v4046, %v4048
        %v4050 = vrot.slane %v4042, %v4049
        %v4052 = vunpack.c.l.s4 1934713408
        %v4053 = vunpack.c.0.s8 %v4052
        %v4054 = vlaneseq
        %v4055 = vshrl.u32 %v4054, 7
        %v4056 = vsub.s32 %v4053, %v4055
        %v4057 = vrot.slane %v4043, %v4056
        %v4058 = vcombine.low %v4002, %v4018
        %v4059 = vcombine.high %v4002, %v4018
        %v4061 = vunpack.c.l.s4 1934713408
        %v4062 = vunpack.c.0.s8 %v4061
        %v4063 = vlaneseq
        %v4064 = vshrl.u32 %v4063, 7
        %v4065 = vsub.s32 %v4062, %v4064
        %v4066 = vrot.slane %v4058, %v4065
        %v4068 = vunpack.c.l.s4 1934713408
        %v4069 = vunpack.c.0.s8 %v4068
        %v4070 = vlaneseq
        %v4071 = vshrl.u32 %v4070, 7
        %v4072 = vsub.s32 %v4069, %v4071
        %v4073 = vrot.slane %v4059, %v4072
        %v4074 = vcombine.low %v4009, %v4025
        %v4075 = vcombine.high %v4009, %v4025
        %v4077 = vunpack.c.l.s4 1934713408
        %v4078 = vunpack.c.0.s8 %v4077
        %v4079 = vlaneseq
        %v4080 = vshrl.u32 %v4079, 7
        %v4081 = vsub.s32 %v4078, %v4080
        %v4082 = vrot.slane %v4074, %v4081
        %v4084 = vunpack.c.l.s4 1934713408
        %v4085 = vunpack.c.0.s8 %v4084
        %v4086 = vlaneseq
        %v4087 = vshrl.u32 %v4086, 7
        %v4088 = vsub.s32 %v4085, %v4087
        %v4089 = vrot.slane %v4075, %v4088
        %v4090 = vcombine.low %v4034, %v4066
        %v4091 = vcombine.high %v4034, %v4066
        %v4092 = vcombine.low %v4041, %v4073
        %v4093 = vcombine.high %v4041, %v4073
        %v4094 = vcombine.low %v4050, %v4082
        %v4095 = vcombine.high %v4050, %v4082
        %v4096 = vcombine.low %v4057, %v4089
        %v4097 = vcombine.high %v4057, %v4089
        %v4098 = vcombine.low %v3402, %v3406
        %v4099 = vcombine.high %v3402, %v3406
        %v4101 = vunpack.c.l.s4 1983009808
        %v4102 = vunpack.c.0.s8 %v4101
        %v4103 = vlaneseq
        %v4104 = vshrl.u32 %v4103, 7
        %v4105 = vsub.s32 %v4102, %v4104
        %v4106 = vrot.slane %v4098, %v4105
        %v4108 = vunpack.c.l.s4 1983009808
        %v4109 = vunpack.c.0.s8 %v4108
        %v4110 = vlaneseq
        %v4111 = vshrl.u32 %v4110, 7
        %v4112 = vsub.s32 %v4109, %v4111
        %v4113 = vrot.slane %v4099, %v4112
        %v4114 = vcombine.low %v3404, %v3408
        %v4115 = vcombine.high %v3404, %v3408
        %v4117 = vunpack.c.l.s4 1983009808
        %v4118 = vunpack.c.0.s8 %v4117
        %v4119 = vlaneseq
        %v4120 = vshrl.u32 %v4119, 7
        %v4121 = vsub.s32 %v4118, %v4120
        %v4122 = vrot.slane %v4114, %v4121
        %v4124 = vunpack.c.l.s4 1983009808
        %v4125 = vunpack.c.0.s8 %v4124
        %v4126 = vlaneseq
        %v4127 = vshrl.u32 %v4126, 7
        %v4128 = vsub.s32 %v4125, %v4127
        %v4129 = vrot.slane %v4115, %v4128
        %v4130 = vcombine.low %v3410, %v3414
        %v4131 = vcombine.high %v3410, %v3414
        %v4133 = vunpack.c.l.s4 1983009808
        %v4134 = vunpack.c.0.s8 %v4133
        %v4135 = vlaneseq
        %v4136 = vshrl.u32 %v4135, 7
        %v4137 = vsub.s32 %v4134, %v4136
        %v4138 = vrot.slane %v4130, %v4137
        %v4140 = vunpack.c.l.s4 1983009808
        %v4141 = vunpack.c.0.s8 %v4140
        %v4142 = vlaneseq
        %v4143 = vshrl.u32 %v4142, 7
        %v4144 = vsub.s32 %v4141, %v4143
        %v4145 = vrot.slane %v4131, %v4144
        %v4146 = vcombine.low %v3412, %v3416
        %v4147 = vcombine.high %v3412, %v3416
        %v4149 = vunpack.c.l.s4 1983009808
        %v4150 = vunpack.c.0.s8 %v4149
        %v4151 = vlaneseq
        %v4152 = vshrl.u32 %v4151, 7
        %v4153 = vsub.s32 %v4150, %v4152
        %v4154 = vrot.slane %v4146, %v4153
        %v4156 = vunpack.c.l.s4 1983009808
        %v4157 = vunpack.c.0.s8 %v4156
        %v4158 = vlaneseq
        %v4159 = vshrl.u32 %v4158, 7
        %v4160 = vsub.s32 %v4157, %v4159
        %v4161 = vrot.slane %v4147, %v4160
        %v4162 = vcombine.low %v4106, %v4122
        %v4163 = vcombine.high %v4106, %v4122
        %v4165 = vunpack.c.l.s4 1934713408
        %v4166 = vunpack.c.0.s8 %v4165
        %v4167 = vlaneseq
        %v4168 = vshrl.u32 %v4167, 7
        %v4169 = vsub.s32 %v4166, %v4168
        %v4170 = vrot.slane %v4162, %v4169
        %v4172 = vunpack.c.l.s4 1934713408
        %v4173 = vunpack.c.0.s8 %v4172
        %v4174 = vlaneseq
        %v4175 = vshrl.u32 %v4174, 7
        %v4176 = vsub.s32 %v4173, %v4175
        %v4177 = vrot.slane %v4163, %v4176
        %v4178 = vcombine.low %v4113, %v4129
        %v4179 = vcombine.high %v4113, %v4129
        %v4181 = vunpack.c.l.s4 1934713408
        %v4182 = vunpack.c.0.s8 %v4181
        %v4183 = vlaneseq
        %v4184 = vshrl.u32 %v4183, 7
        %v4185 = vsub.s32 %v4182, %v4184
        %v4186 = vrot.slane %v4178, %v4185
        %v4188 = vunpack.c.l.s4 1934713408
        %v4189 = vunpack.c.0.s8 %v4188
        %v4190 = vlaneseq
        %v4191 = vshrl.u32 %v4190, 7
        %v4192 = vsub.s32 %v4189, %v4191
        %v4193 = vrot.slane %v4179, %v4192
        %v4194 = vcombine.low %v4138, %v4154
        %v4195 = vcombine.high %v4138, %v4154
        %v4197 = vunpack.c.l.s4 1934713408
        %v4198 = vunpack.c.0.s8 %v4197
        %v4199 = vlaneseq
        %v4200 = vshrl.u32 %v4199, 7
        %v4201 = vsub.s32 %v4198, %v4200
        %v4202 = vrot.slane %v4194, %v4201
        %v4204 = vunpack.c.l.s4 1934713408
        %v4205 = vunpack.c.0.s8 %v4204
        %v4206 = vlaneseq
        %v4207 = vshrl.u32 %v4206, 7
        %v4208 = vsub.s32 %v4205, %v4207
        %v4209 = vrot.slane %v4195, %v4208
        %v4210 = vcombine.low %v4145, %v4161
        %v4211 = vcombine.high %v4145, %v4161
        %v4213 = vunpack.c.l.s4 1934713408
        %v4214 = vunpack.c.0.s8 %v4213
        %v4215 = vlaneseq
        %v4216 = vshrl.u32 %v4215, 7
        %v4217 = vsub.s32 %v4214, %v4216
        %v4218 = vrot.slane %v4210, %v4217
        %v4220 = vunpack.c.l.s4 1934713408
        %v4221 = vunpack.c.0.s8 %v4220
        %v4222 = vlaneseq
        %v4223 = vshrl.u32 %v4222, 7
        %v4224 = vsub.s32 %v4221, %v4223
        %v4225 = vrot.slane %v4211, %v4224
        %v4226 = vcombine.low %v4170, %v4202
        %v4227 = vcombine.high %v4170, %v4202
        %v4228 = vcombine.low %v4177, %v4209
        %v4229 = vcombine.high %v4177, %v4209
        %v4230 = vcombine.low %v4186, %v4218
        %v4231 = vcombine.high %v4186, %v4218
        %v4232 = vcombine.low %v4193, %v4225
        %v4233 = vcombine.high %v4193, %v4225
        %v4234 = vcombine.low %v3387, %v3391
        %v4235 = vcombine.high %v3387, %v3391
        %v4237 = vunpack.c.l.s4 1983009808
        %v4238 = vunpack.c.0.s8 %v4237
        %v4239 = vlaneseq
        %v4240 = vshrl.u32 %v4239, 7
        %v4241 = vsub.s32 %v4238, %v4240
        %v4242 = vrot.slane %v4234, %v4241
        %v4244 = vunpack.c.l.s4 1983009808
        %v4245 = vunpack.c.0.s8 %v4244
        %v4246 = vlaneseq
        %v4247 = vshrl.u32 %v4246, 7
        %v4248 = vsub.s32 %v4245, %v4247
        %v4249 = vrot.slane %v4235, %v4248
        %v4250 = vcombine.low %v3389, %v3393
        %v4251 = vcombine.high %v3389, %v3393
        %v4253 = vunpack.c.l.s4 1983009808
        %v4254 = vunpack.c.0.s8 %v4253
        %v4255 = vlaneseq
        %v4256 = vshrl.u32 %v4255, 7
        %v4257 = vsub.s32 %v4254, %v4256
        %v4258 = vrot.slane %v4250, %v4257
        %v4260 = vunpack.c.l.s4 1983009808
        %v4261 = vunpack.c.0.s8 %v4260
        %v4262 = vlaneseq
        %v4263 = vshrl.u32 %v4262, 7
        %v4264 = vsub.s32 %v4261, %v4263
        %v4265 = vrot.slane %v4251, %v4264
        %v4266 = vcombine.low %v3395, %v3399
        %v4267 = vcombine.high %v3395, %v3399
        %v4269 = vunpack.c.l.s4 1983009808
        %v4270 = vunpack.c.0.s8 %v4269
        %v4271 = vlaneseq
        %v4272 = vshrl.u32 %v4271, 7
        %v4273 = vsub.s32 %v4270, %v4272
        %v4274 = vrot.slane %v4266, %v4273
        %v4276 = vunpack.c.l.s4 1983009808
        %v4277 = vunpack.c.0.s8 %v4276
        %v4278 = vlaneseq
        %v4279 = vshrl.u32 %v4278, 7
        %v4280 = vsub.s32 %v4277, %v4279
        %v4281 = vrot.slane %v4267, %v4280
        %v4282 = vcombine.low %v3397, %v3401
        %v4283 = vcombine.high %v3397, %v3401
        %v4285 = vunpack.c.l.s4 1983009808
        %v4286 = vunpack.c.0.s8 %v4285
        %v4287 = vlaneseq
        %v4288 = vshrl.u32 %v4287, 7
        %v4289 = vsub.s32 %v4286, %v4288
        %v4290 = vrot.slane %v4282, %v4289
        %v4292 = vunpack.c.l.s4 1983009808
        %v4293 = vunpack.c.0.s8 %v4292
        %v4294 = vlaneseq
        %v4295 = vshrl.u32 %v4294, 7
        %v4296 = vsub.s32 %v4293, %v4295
        %v4297 = vrot.slane %v4283, %v4296
        %v4298 = vcombine.low %v4242, %v4258
        %v4299 = vcombine.high %v4242, %v4258
        %v4301 = vunpack.c.l.s4 1934713408
        %v4302 = vunpack.c.0.s8 %v4301
        %v4303 = vlaneseq
        %v4304 = vshrl.u32 %v4303, 7
        %v4305 = vsub.s32 %v4302, %v4304
        %v4306 = vrot.slane %v4298, %v4305
        %v4308 = vunpack.c.l.s4 1934713408
        %v4309 = vunpack.c.0.s8 %v4308
        %v4310 = vlaneseq
        %v4311 = vshrl.u32 %v4310, 7
        %v4312 = vsub.s32 %v4309, %v4311
        %v4313 = vrot.slane %v4299, %v4312
        %v4314 = vcombine.low %v4249, %v4265
        %v4315 = vcombine.high %v4249, %v4265
        %v4317 = vunpack.c.l.s4 1934713408
        %v4318 = vunpack.c.0.s8 %v4317
        %v4319 = vlaneseq
        %v4320 = vshrl.u32 %v4319, 7
        %v4321 = vsub.s32 %v4318, %v4320
        %v4322 = vrot.slane %v4314, %v4321
        %v4324 = vunpack.c.l.s4 1934713408
        %v4325 = vunpack.c.0.s8 %v4324
        %v4326 = vlaneseq
        %v4327 = vshrl.u32 %v4326, 7
        %v4328 = vsub.s32 %v4325, %v4327
        %v4329 = vrot.slane %v4315, %v4328
        %v4330 = vcombine.low %v4274, %v4290
        %v4331 = vcombine.high %v4274, %v4290
        %v4333 = vunpack.c.l.s4 1934713408
        %v4334 = vunpack.c.0.s8 %v4333
        %v4335 = vlaneseq
        %v4336 = vshrl.u32 %v4335, 7
        %v4337 = vsub.s32 %v4334, %v4336
        %v4338 = vrot.slane %v4330, %v4337
        %v4340 = vunpack.c.l.s4 1934713408
        %v4341 = vunpack.c.0.s8 %v4340
        %v4342 = vlaneseq
        %v4343 = vshrl.u32 %v4342, 7
        %v4344 = vsub.s32 %v4341, %v4343
        %v4345 = vrot.slane %v4331, %v4344
        %v4346 = vcombine.low %v4281, %v4297
        %v4347 = vcombine.high %v4281, %v4297
        %v4349 = vunpack.c.l.s4 1934713408
        %v4350 = vunpack.c.0.s8 %v4349
        %v4351 = vlaneseq
        %v4352 = vshrl.u32 %v4351, 7
        %v4353 = vsub.s32 %v4350, %v4352
        %v4354 = vrot.slane %v4346, %v4353
        %v4356 = vunpack.c.l.s4 1934713408
        %v4357 = vunpack.c.0.s8 %v4356
        %v4358 = vlaneseq
        %v4359 = vshrl.u32 %v4358, 7
        %v4360 = vsub.s32 %v4357, %v4359
        %v4361 = vrot.slane %v4347, %v4360
        %v4362 = vcombine.low %v4306, %v4338
        %v4363 = vcombine.high %v4306, %v4338
        %v4364 = vcombine.low %v4313, %v4345
        %v4365 = vcombine.high %v4313, %v4345
        %v4366 = vcombine.low %v4322, %v4354
        %v4367 = vcombine.high %v4322, %v4354
        %v4368 = vcombine.low %v4329, %v4361
        %v4369 = vcombine.high %v4329, %v4361
        %v4370 = vcombine.low %v3403, %v3407
        %v4371 = vcombine.high %v3403, %v3407
        %v4373 = vunpack.c.l.s4 1983009808
        %v4374 = vunpack.c.0.s8 %v4373
        %v4375 = vlaneseq
        %v4376 = vshrl.u32 %v4375, 7
        %v4377 = vsub.s32 %v4374, %v4376
        %v4378 = vrot.slane %v4370, %v4377
        %v4380 = vunpack.c.l.s4 1983009808
        %v4381 = vunpack.c.0.s8 %v4380
        %v4382 = vlaneseq
        %v4383 = vshrl.u32 %v4382, 7
        %v4384 = vsub.s32 %v4381, %v4383
        %v4385 = vrot.slane %v4371, %v4384
        %v4386 = vcombine.low %v3405, %v3409
        %v4387 = vcombine.high %v3405, %v3409
        %v4389 = vunpack.c.l.s4 1983009808
        %v4390 = vunpack.c.0.s8 %v4389
        %v4391 = vlaneseq
        %v4392 = vshrl.u32 %v4391, 7
        %v4393 = vsub.s32 %v4390, %v4392
        %v4394 = vrot.slane %v4386, %v4393
        %v4396 = vunpack.c.l.s4 1983009808
        %v4397 = vunpack.c.0.s8 %v4396
        %v4398 = vlaneseq
        %v4399 = vshrl.u32 %v4398, 7
        %v4400 = vsub.s32 %v4397, %v4399
        %v4401 = vrot.slane %v4387, %v4400
        %v4402 = vcombine.low %v3411, %v3415
        %v4403 = vcombine.high %v3411, %v3415
        %v4405 = vunpack.c.l.s4 1983009808
        %v4406 = vunpack.c.0.s8 %v4405
        %v4407 = vlaneseq
        %v4408 = vshrl.u32 %v4407, 7
        %v4409 = vsub.s32 %v4406, %v4408
        %v4410 = vrot.slane %v4402, %v4409
        %v4412 = vunpack.c.l.s4 1983009808
        %v4413 = vunpack.c.0.s8 %v4412
        %v4414 = vlaneseq
        %v4415 = vshrl.u32 %v4414, 7
        %v4416 = vsub.s32 %v4413, %v4415
        %v4417 = vrot.slane %v4403, %v4416
        %v4418 = vcombine.low %v3413, %v3417
        %v4419 = vcombine.high %v3413, %v3417
        %v4421 = vunpack.c.l.s4 1983009808
        %v4422 = vunpack.c.0.s8 %v4421
        %v4423 = vlaneseq
        %v4424 = vshrl.u32 %v4423, 7
        %v4425 = vsub.s32 %v4422, %v4424
        %v4426 = vrot.slane %v4418, %v4425
        %v4428 = vunpack.c.l.s4 1983009808
        %v4429 = vunpack.c.0.s8 %v4428
        %v4430 = vlaneseq
        %v4431 = vshrl.u32 %v4430, 7
        %v4432 = vsub.s32 %v4429, %v4431
        %v4433 = vrot.slane %v4419, %v4432
        %v4434 = vcombine.low %v4378, %v4394
        %v4435 = vcombine.high %v4378, %v4394
        %v4437 = vunpack.c.l.s4 1934713408
        %v4438 = vunpack.c.0.s8 %v4437
        %v4439 = vlaneseq
        %v4440 = vshrl.u32 %v4439, 7
        %v4441 = vsub.s32 %v4438, %v4440
        %v4442 = vrot.slane %v4434, %v4441
        %v4444 = vunpack.c.l.s4 1934713408
        %v4445 = vunpack.c.0.s8 %v4444
        %v4446 = vlaneseq
        %v4447 = vshrl.u32 %v4446, 7
        %v4448 = vsub.s32 %v4445, %v4447
        %v4449 = vrot.slane %v4435, %v4448
        %v4450 = vcombine.low %v4385, %v4401
        %v4451 = vcombine.high %v4385, %v4401
        %v4453 = vunpack.c.l.s4 1934713408
        %v4454 = vunpack.c.0.s8 %v4453
        %v4455 = vlaneseq
        %v4456 = vshrl.u32 %v4455, 7
        %v4457 = vsub.s32 %v4454, %v4456
        %v4458 = vrot.slane %v4450, %v4457
        %v4460 = vunpack.c.l.s4 1934713408
        %v4461 = vunpack.c.0.s8 %v4460
        %v4462 = vlaneseq
        %v4463 = vshrl.u32 %v4462, 7
        %v4464 = vsub.s32 %v4461, %v4463
        %v4465 = vrot.slane %v4451, %v4464
        %v4466 = vcombine.low %v4410, %v4426
        %v4467 = vcombine.high %v4410, %v4426
        %v4469 = vunpack.c.l.s4 1934713408
        %v4470 = vunpack.c.0.s8 %v4469
        %v4471 = vlaneseq
        %v4472 = vshrl.u32 %v4471, 7
        %v4473 = vsub.s32 %v4470, %v4472
        %v4474 = vrot.slane %v4466, %v4473
        %v4476 = vunpack.c.l.s4 1934713408
        %v4477 = vunpack.c.0.s8 %v4476
        %v4478 = vlaneseq
        %v4479 = vshrl.u32 %v4478, 7
        %v4480 = vsub.s32 %v4477, %v4479
        %v4481 = vrot.slane %v4467, %v4480
        %v4482 = vcombine.low %v4417, %v4433
        %v4483 = vcombine.high %v4417, %v4433
        %v4485 = vunpack.c.l.s4 1934713408
        %v4486 = vunpack.c.0.s8 %v4485
        %v4487 = vlaneseq
        %v4488 = vshrl.u32 %v4487, 7
        %v4489 = vsub.s32 %v4486, %v4488
        %v4490 = vrot.slane %v4482, %v4489
        %v4492 = vunpack.c.l.s4 1934713408
        %v4493 = vunpack.c.0.s8 %v4492
        %v4494 = vlaneseq
        %v4495 = vshrl.u32 %v4494, 7
        %v4496 = vsub.s32 %v4493, %v4495
        %v4497 = vrot.slane %v4483, %v4496
        %v4498 = vcombine.low %v4442, %v4474
        %v4499 = vcombine.high %v4442, %v4474
        %v4500 = vcombine.low %v4449, %v4481
        %v4501 = vcombine.high %v4449, %v4481
        %v4502 = vcombine.low %v4458, %v4490
        %v4503 = vcombine.high %v4458, %v4490
        %v4504 = vcombine.low %v4465, %v4497
        %v4505 = vcombine.high %v4465, %v4497
        %4510 = vrot.lane.b32.xlu0 %v3547, 2
        %v4511 = vpop.permute.xlu0 %4510
        %4512 = vrot.lane.b32.xlu0 %v3683, 2
        %v4513 = vpop.permute.xlu0 %4512
        %4514 = vrot.lane.b32.xlu0 %v4091, 2
        %v4515 = vpop.permute.xlu0 %4514
        %4516 = vrot.lane.b32.xlu0 %v4227, 2
        %v4517 = vpop.permute.xlu0 %4516
        %4526 = vrot.lane.b32.xlu0 %v3548, 4
        %v4527 = vpop.permute.xlu0 %4526
        %4528 = vrot.lane.b32.xlu0 %v3684, 4
        %v4529 = vpop.permute.xlu0 %4528
        %4530 = vrot.lane.b32.xlu0 %v4092, 4
        %v4531 = vpop.permute.xlu0 %4530
        %4532 = vrot.lane.b32.xlu0 %v4228, 4
        %v4533 = vpop.permute.xlu0 %4532
        %4542 = vrot.lane.b32.xlu0 %v3549, 6
        %v4543 = vpop.permute.xlu0 %4542
        %4544 = vrot.lane.b32.xlu0 %v3685, 6
        %v4545 = vpop.permute.xlu0 %4544
        %4546 = vrot.lane.b32.xlu0 %v4093, 6
        %v4547 = vpop.permute.xlu0 %4546
        %4548 = vrot.lane.b32.xlu0 %v4229, 6
        %v4549 = vpop.permute.xlu0 %4548
        %4558 = vrot.lane.b32.xlu0 %v3550, 8
        %v4559 = vpop.permute.xlu0 %4558
        %4560 = vrot.lane.b32.xlu0 %v3686, 8
        %v4561 = vpop.permute.xlu0 %4560
        %4562 = vrot.lane.b32.xlu0 %v4094, 8
        %v4563 = vpop.permute.xlu0 %4562
        %4564 = vrot.lane.b32.xlu0 %v4230, 8
        %v4565 = vpop.permute.xlu0 %4564
        %4574 = vrot.lane.b32.xlu0 %v3551, 10
        %v4575 = vpop.permute.xlu0 %4574
        %4576 = vrot.lane.b32.xlu0 %v3687, 10
        %v4577 = vpop.permute.xlu0 %4576
        %4578 = vrot.lane.b32.xlu0 %v4095, 10
        %v4579 = vpop.permute.xlu0 %4578
        %4580 = vrot.lane.b32.xlu0 %v4231, 10
        %v4581 = vpop.permute.xlu0 %4580
        %4590 = vrot.lane.b32.xlu0 %v3552, 12
        %v4591 = vpop.permute.xlu0 %4590
        %4592 = vrot.lane.b32.xlu0 %v3688, 12
        %v4593 = vpop.permute.xlu0 %4592
        %4594 = vrot.lane.b32.xlu0 %v4096, 12
        %v4595 = vpop.permute.xlu0 %4594
        %4596 = vrot.lane.b32.xlu0 %v4232, 12
        %v4597 = vpop.permute.xlu0 %4596
        %4606 = vrot.lane.b32.xlu0 %v3553, 14
        %v4607 = vpop.permute.xlu0 %4606
        %4608 = vrot.lane.b32.xlu0 %v3689, 14
        %v4609 = vpop.permute.xlu0 %4608
        %4610 = vrot.lane.b32.xlu0 %v4097, 14
        %v4611 = vpop.permute.xlu0 %4610
        %4612 = vrot.lane.b32.xlu0 %v4233, 14
        %v4613 = vpop.permute.xlu0 %4612
        %4622 = vrot.lane.b32.xlu0 %v3818, 16
        %v4623 = vpop.permute.xlu0 %4622
        %4624 = vrot.lane.b32.xlu0 %v3954, 16
        %v4625 = vpop.permute.xlu0 %4624
        %4626 = vrot.lane.b32.xlu0 %v4362, 16
        %v4627 = vpop.permute.xlu0 %4626
        %4628 = vrot.lane.b32.xlu0 %v4498, 16
        %v4629 = vpop.permute.xlu0 %4628
        %4638 = vrot.lane.b32.xlu0 %v3819, 18
        %v4639 = vpop.permute.xlu0 %4638
        %4640 = vrot.lane.b32.xlu0 %v3955, 18
        %v4641 = vpop.permute.xlu0 %4640
        %4642 = vrot.lane.b32.xlu0 %v4363, 18
        %v4643 = vpop.permute.xlu0 %4642
        %4644 = vrot.lane.b32.xlu0 %v4499, 18
        %v4645 = vpop.permute.xlu0 %4644
        %4654 = vrot.lane.b32.xlu0 %v3820, 20
        %v4655 = vpop.permute.xlu0 %4654
        %4656 = vrot.lane.b32.xlu0 %v3956, 20
        %v4657 = vpop.permute.xlu0 %4656
        %4658 = vrot.lane.b32.xlu0 %v4364, 20
        %v4659 = vpop.permute.xlu0 %4658
        %4660 = vrot.lane.b32.xlu0 %v4500, 20
        %v4661 = vpop.permute.xlu0 %4660
        %4670 = vrot.lane.b32.xlu0 %v3821, 22
        %v4671 = vpop.permute.xlu0 %4670
        %4672 = vrot.lane.b32.xlu0 %v3957, 22
        %v4673 = vpop.permute.xlu0 %4672
        %4674 = vrot.lane.b32.xlu0 %v4365, 22
        %v4675 = vpop.permute.xlu0 %4674
        %4676 = vrot.lane.b32.xlu0 %v4501, 22
        %v4677 = vpop.permute.xlu0 %4676
        %4686 = vrot.lane.b32.xlu0 %v3822, 24
        %v4687 = vpop.permute.xlu0 %4686
        %4688 = vrot.lane.b32.xlu0 %v3958, 24
        %v4689 = vpop.permute.xlu0 %4688
        %4690 = vrot.lane.b32.xlu0 %v4366, 24
        %v4691 = vpop.permute.xlu0 %4690
        %4692 = vrot.lane.b32.xlu0 %v4502, 24
        %v4693 = vpop.permute.xlu0 %4692
        %4702 = vrot.lane.b32.xlu0 %v3823, 26
        %v4703 = vpop.permute.xlu0 %4702
        %4704 = vrot.lane.b32.xlu0 %v3959, 26
        %v4705 = vpop.permute.xlu0 %4704
        %4706 = vrot.lane.b32.xlu0 %v4367, 26
        %v4707 = vpop.permute.xlu0 %4706
        %4708 = vrot.lane.b32.xlu0 %v4503, 26
        %v4709 = vpop.permute.xlu0 %4708
        %4718 = vrot.lane.b32.xlu0 %v3824, 28
        %v4719 = vpop.permute.xlu0 %4718
        %4720 = vrot.lane.b32.xlu0 %v3960, 28
        %v4721 = vpop.permute.xlu0 %4720
        %4722 = vrot.lane.b32.xlu0 %v4368, 28
        %v4723 = vpop.permute.xlu0 %4722
        %4724 = vrot.lane.b32.xlu0 %v4504, 28
        %v4725 = vpop.permute.xlu0 %4724
        %4734 = vrot.lane.b32.xlu0 %v3825, 30
        %v4735 = vpop.permute.xlu0 %4734
        %4736 = vrot.lane.b32.xlu0 %v3961, 30
        %v4737 = vpop.permute.xlu0 %4736
        %4738 = vrot.lane.b32.xlu0 %v4369, 30
        %v4739 = vpop.permute.xlu0 %4738
        %4740 = vrot.lane.b32.xlu0 %v4505, 30
        %v4741 = vpop.permute.xlu0 %4740
        %v4746 = vsel %vm2575, %v3546, %v4511
        %v4747 = vsel %vm2575, %v3682, %v4513
        %v4748 = vsel %vm2575, %v4090, %v4515
        %v4749 = vsel %vm2575, %v4226, %v4517
        %v4750 = vsel %vm2580, %v4746, %v4527
        %v4751 = vsel %vm2580, %v4747, %v4529
        %v4752 = vsel %vm2580, %v4748, %v4531
        %v4753 = vsel %vm2580, %v4749, %v4533
        %v4754 = vsel %vm2585, %v4750, %v4543
        %v4755 = vsel %vm2585, %v4751, %v4545
        %v4756 = vsel %vm2585, %v4752, %v4547
        %v4757 = vsel %vm2585, %v4753, %v4549
        %v4758 = vsel %vm2590, %v4754, %v4559
        %v4759 = vsel %vm2590, %v4755, %v4561
        %v4760 = vsel %vm2590, %v4756, %v4563
        %v4761 = vsel %vm2590, %v4757, %v4565
        %v4762 = vsel %vm2595, %v4758, %v4575
        %v4763 = vsel %vm2595, %v4759, %v4577
        %v4764 = vsel %vm2595, %v4760, %v4579
        %v4765 = vsel %vm2595, %v4761, %v4581
        %v4766 = vsel %vm2600, %v4762, %v4591
        %v4767 = vsel %vm2600, %v4763, %v4593
        %v4768 = vsel %vm2600, %v4764, %v4595
        %v4769 = vsel %vm2600, %v4765, %v4597
        %v4770 = vsel %vm2605, %v4766, %v4607
        %v4771 = vsel %vm2605, %v4767, %v4609
        %v4772 = vsel %vm2605, %v4768, %v4611
        %v4773 = vsel %vm2605, %v4769, %v4613
        %v4774 = vsel %vm2610, %v4770, %v4623
        %v4775 = vsel %vm2610, %v4771, %v4625
        %v4776 = vsel %vm2610, %v4772, %v4627
        %v4777 = vsel %vm2610, %v4773, %v4629
        %v4778 = vsel %vm2615, %v4774, %v4639
        %v4779 = vsel %vm2615, %v4775, %v4641
        %v4780 = vsel %vm2615, %v4776, %v4643
        %v4781 = vsel %vm2615, %v4777, %v4645
        %v4782 = vsel %vm2620, %v4778, %v4655
        %v4783 = vsel %vm2620, %v4779, %v4657
        %v4784 = vsel %vm2620, %v4780, %v4659
        %v4785 = vsel %vm2620, %v4781, %v4661
        %v4786 = vsel %vm2625, %v4782, %v4671
        %v4787 = vsel %vm2625, %v4783, %v4673
        %v4788 = vsel %vm2625, %v4784, %v4675
        %v4789 = vsel %vm2625, %v4785, %v4677
        %v4790 = vsel %vm2630, %v4786, %v4687
        %v4791 = vsel %vm2630, %v4787, %v4689
        %v4792 = vsel %vm2630, %v4788, %v4691
        %v4793 = vsel %vm2630, %v4789, %v4693
        %v4794 = vsel %vm2635, %v4790, %v4703
        %v4795 = vsel %vm2635, %v4791, %v4705
        %v4796 = vsel %vm2635, %v4792, %v4707
        %v4797 = vsel %vm2635, %v4793, %v4709
        %v4798 = vsel %vm2640, %v4794, %v4719
        %v4799 = vsel %vm2640, %v4795, %v4721
        %v4800 = vsel %vm2640, %v4796, %v4723
        %v4801 = vsel %vm2640, %v4797, %v4725
        %v4802 = vsel %vm2645, %v4798, %v4735
        %v4803 = vsel %vm2645, %v4799, %v4737
        %v4804 = vsel %vm2645, %v4800, %v4739
        %v4805 = vsel %vm2645, %v4801, %v4741
        %4810 = vrot.lane.b32.xlu0 %v4802, 32
        %v4811 = vpop.permute.xlu0 %4810
        %4812 = vrot.lane.b32.xlu0 %v4803, 32
        %v4813 = vpop.permute.xlu0 %4812
        %4814 = vrot.lane.b32.xlu0 %v4804, 32
        %v4815 = vpop.permute.xlu0 %4814
        %4816 = vrot.lane.b32.xlu0 %v4805, 32
        %v4817 = vpop.permute.xlu0 %4816
        %vm4822 = vcmask 261120
        %v4823 = vsel %vm4822, %v2646, %v4811
        %v4824 = vsel %vm4822, %v2647, %v4813
        %v4825 = vsel %vm4822, %v2648, %v4815
        %v4826 = vsel %vm4822, %v2649, %v4817
        %vm4827 = vcmask 523264
        %4828 = vst.msk [vmem:[%s400] sm:$0xff] %vm4827, %v4823
        %4829 = vst.msk [vmem:[%s400 + $0x8] sm:$0xff] %vm4827, %v4824
        %4830 = vst.msk [vmem:[%s400 + $0x10] sm:$0xff] %vm4827, %v4825
        %4831 = vst.msk [vmem:[%s400 + $0x18] sm:$0xff] %vm4827, %v4826
        %s4832 = sand.u32 %s184, 1
        %s4833 = scalar_lea.sflag [#allocation4], %s4832
        %s4834 = sand.u32 %s184, 1
        %s4835 = smul.addr %s4834, 32
        %s4836 = scalar_lea.vmem [#allocation10], %s4835
        // Predicated region
        $region53: #{tpu_custom_call.1} parent=35 // pred_check
          %p4837 = pneg %p194
        $region54: #{tpu_custom_call.1} parent=35 // pred_check_branch
          %4839 = sbr.rel (%p4837) target = $region56
        $region55: #{tpu_custom_call.1} parent=35 // pred_region
          %s4840 = smul.u32 2, %s33
          %s4841 = smul.u32 2, %s34
          %s4843 = ssub.s32 512, 512
          %4844 = vsyncadd %s4833, %s4843
          %s4845 = smul.addr %s4840, 2
          %s4846 = sadd.s32 %s4841, %s4845
          %s4847 = smul.addr %s32, 4
          %s4848 = sadd.s32 %s4846, %s4847
          %s4849 = smul.addr %s4848, 128
          %s4850 = scalar_lea.hbm %s4, %s4849
          %s4851 = sshll.u32 %s4836, 4
          %s4852 = int_to_ptr.vmem [resolvable:$true] %s4851
          %4857 = dma.vmem_to_hbm [thread:$0]  %s4852, 512, %s4850, %s4833, 128, 128, 8
        $region56: #{tpu_custom_call.1} parent=35 // pred_fallthru
          _
      $region36: #{tpu_custom_call.1} parent=5 // pred_fallthru
        _
      %p4858 = scmp.le.s32.totalorder 2, %s22
      // Predicated region
      $region57: #{tpu_custom_call.1} parent=5 // pred_check
        %p4859 = pneg %p4858
      $region58: #{tpu_custom_call.1} parent=5 // pred_check_branch
        %4861 = sbr.rel (%p4859) target = $region60
      $region59: #{tpu_custom_call.1} parent=5 // pred_region
        %s4862 = ssub.s32 %s22, 2
        // Predicated region
        $region61: #{tpu_custom_call.1} parent=59 // pred_check
          %p4863 = pneg %p200
        $region62: #{tpu_custom_call.1} parent=59 // pred_check_branch
          %4865 = sbr.rel (%p4863) target = $region64
        $region63: #{tpu_custom_call.1} parent=59 // pred_region
          %s4866 = sand.u32 %s185, 1
          %s4867 = scalar_lea.sflag [#allocation4], %s4866
          %s4868 = sand.u32 %s185, 1
          %s4869 = smul.addr %s4868, 32
          %s4870 = scalar_lea.vmem [#allocation10], %s4869
          %4871 = dma.done %s4867, 512
        $region64: #{tpu_custom_call.1} parent=59 // pred_fallthru
          _
      $region60: #{tpu_custom_call.1} parent=5 // pred_fallthru
        _
    $region6: #{tpu_custom_call.1} parent=1 // loop_footer
      %s26 = sadd.s32 1, %s22
    $region7: #{tpu_custom_call.1} parent=1 // loop_footer_branch
      %21 = sbr.rel target = $region3
    $region8: #{tpu_custom_call.1} parent=1 // loop_exit
      _
    %4872 = vsyncpa [#allocation3], 1
    %s4873 = scalar_lea.sflag [#allocation3], 1
    %4874 = vsyncpa %s4873, 1
    %4875 = vsyncpa [#allocation6], 1
    %s4876 = scalar_lea.sflag [#allocation6], 1
    %4877 = vsyncpa %s4876, 1
    %4878 = vsyncpa [#allocation9], 1
    %s4879 = scalar_lea.sflag [#allocation9], 1
    %4880 = vsyncpa %s4879, 1
    %4881 = vsyncpa [#allocation4], 1
    %s4882 = scalar_lea.sflag [#allocation4], 1
    %4883 = vsyncpa %s4882, 1

</llo_original>
